<compile_context>
chip_gen: v7x
topology: tpu7x:2x2x1
jax: 0.10.0
libtpu: 0.0.40
codegen_flags: <defaults>
</compile_context>

<pallas_src>
import numpy as np
import jax
import jax.numpy as jnp
from jax import lax
from jax.experimental import pallas as pl
from jax.experimental.pallas import tpu as pltpu


# ---------------------------------------------------------------------------
# Fused kernel: per-image HWC conv/SiLU/pool x2 + linear.
# ---------------------------------------------------------------------------
def cnn_kernel(x_ref, w1_ref, b1_ref, w2_ref, b2_ref, wl_ref, bl_ref, o_ref):
    # x_ref : [H, W, Cin]        (channels-last: channels on the lane axis)
    # w1_ref: [9*Cin, C1]        im2col-flattened conv1 weight (dy, dx, ci)
    # b1_ref: [1, C1]
    # w2_ref: [9*C1, C2]
    # b2_ref: [1, C2]
    # wl_ref: [(H//4)*(W//4)*C2, 128]   permuted + lane-padded linear weight
    # bl_ref: [1, 128]
    # o_ref : [1, 128]           lane-dense output (sliced to out_dim outside)
    H, W, Cin = x_ref.shape
    C1 = w1_ref.shape[1]
    C2 = w2_ref.shape[1]
    H2, W2 = H // 2, W // 2
    H3, W3 = H2 // 2, W2 // 2

    def pad1(t):
        # Zero-pad the two spatial dims of an HWC tile by 1 (in-kernel, no HBM).
        h, w, c = t.shape
        zr = jnp.zeros((1, w, c), t.dtype)
        t = jnp.concatenate([zr, t, zr], axis=0)
        zc = jnp.zeros((h + 2, 1, c), t.dtype)
        return jnp.concatenate([zc, t, zc], axis=1)

    def im2col3(tp, h, w, c):
        # tp: [h+2, w+2, c] -> patches [h*w, 9*c], feature order (dy, dx, ci).
        cols = [tp[dy:dy + h, dx:dx + w, :]
                for dy in range(3) for dx in range(3)]
        return jnp.concatenate(cols, axis=-1).reshape(h * w, 9 * c)

    def pool_matrix(hs, ws):
        # [(hs//2)*(ws//2), hs*ws] 2x2-average matrix (0.25 entries), built
        # in-kernel from iotas; hs/ws are powers of two so //, % are shifts.
        ho, wo = hs // 2, ws // 2
        shape = (ho * wo, hs * ws)
        r = lax.broadcasted_iota(jnp.int32, shape, 0)
        c = lax.broadcasted_iota(jnp.int32, shape, 1)
        ws_l = ws.bit_length() - 1
        wo_l = wo.bit_length() - 1
        cy = c >> ws_l
        cx = c & (ws - 1)
        ry = r >> wo_l
        rx = r & (wo - 1)
        match = jnp.logical_and((cy >> 1) == ry, (cx >> 1) == rx)
        return jnp.where(match, 0.25, 0.0).astype(jnp.float32)

    x = x_ref[...].astype(jnp.float32)

    # --- conv1 (3x3, pad=1) + bias + SiLU : single im2col matmul ------------
    p1 = im2col3(pad1(x), H, W, Cin)                                  # [H*W, 9*Cin]
    h1 = jnp.dot(p1, w1_ref[...],
                 preferred_element_type=jnp.float32) + b1_ref[...]    # [H*W, C1]
    h1 = h1 * jax.nn.sigmoid(h1)

    # --- avgpool 2x2 as matmul ----------------------------------------------
    h1 = jnp.dot(pool_matrix(H, W), h1,
                 preferred_element_type=jnp.float32)                  # [H2*W2, C1]

    # --- conv2 (3x3, pad=1) + bias + SiLU ------------------------------------
    p2 = im2col3(pad1(h1.reshape(H2, W2, C1)), H2, W2, C1)            # [H2*W2, 9*C1]
    h2 = jnp.dot(p2, w2_ref[...],
                 preferred_element_type=jnp.float32) + b2_ref[...]    # [H2*W2, C2]
    h2 = h2 * jax.nn.sigmoid(h2)

    # --- avgpool 2x2 ----------------------------------------------------------
    h2 = jnp.dot(pool_matrix(H2, W2), h2,
                 preferred_element_type=jnp.float32)                  # [H3*W3, C2]

    # --- flatten ((y*W3+x)*C2 + c order) via lane-concat, then linear --------
    flat = jnp.concatenate([h2[p:p + 1, :] for p in range(H3 * W3)],
                           axis=1)                                    # [1, H3*W3*C2]
    out = jnp.dot(flat, wl_ref[...],
                  preferred_element_type=jnp.float32) + bl_ref[...]   # [1, 128]
    o_ref[...] = out.astype(o_ref.dtype)


# ---------------------------------------------------------------------------
# One-time parameter re-layout (hoisted out of the per-forward path).
# ---------------------------------------------------------------------------
def prepare_params(params, H, W, out_pad=128):
    w1, b1 = params["w1"], params["b1"]
    w2, b2 = params["w2"], params["b2"]
    w_lin, b_lin = params["w_lin"], params["b_lin"]
    kh, kw, cin, c1 = w1.shape
    c2 = w2.shape[-1]
    h3, w3 = H // 4, W // 4
    out_dim = w_lin.shape[0]

    w1f = jnp.asarray(w1, jnp.float32).reshape(kh * kw * cin, c1)     # (dy,dx,ci)
    w2f = jnp.asarray(w2, jnp.float32).reshape(9 * c1, c2)

    # Torch flattens NCHW (idx = c*h3*w3 + y*w3 + x); the kernel flattens as
    # (y*w3 + x)*c2 + c. Permute the Linear weight accordingly, then pad the
    # output dim to `out_pad` lanes for an unmasked lane-dense store.
    wl = jnp.asarray(w_lin, jnp.float32).reshape(out_dim, c2, h3, w3)
    wl = jnp.transpose(wl, (2, 3, 1, 0)).reshape(h3 * w3 * c2, out_dim)
    wl = jnp.pad(wl, ((0, 0), (0, out_pad - out_dim)))
    bl = jnp.pad(jnp.asarray(b_lin, jnp.float32),
                 (0, out_pad - out_dim)).reshape(1, out_pad)

    return {
        "w1f": w1f, "b1": jnp.asarray(b1, jnp.float32).reshape(1, c1),
        "w2f": w2f, "b2": jnp.asarray(b2, jnp.float32).reshape(1, c2),
        "wlf": wl, "blf": bl, "out_dim": out_dim,
    }


# ---------------------------------------------------------------------------
# Forward wrapper: one pallas_call for the whole network.
# ---------------------------------------------------------------------------
def cnn_forward(x_nchw, prep):
    B, Cin, H, W = x_nchw.shape
    assert H % 4 == 0 and W % 4 == 0
    assert (H & (H - 1)) == 0 and (W & (W - 1)) == 0  # pow2 -> in-kernel pool iota
    out_pad = prep["wlf"].shape[1]

    x = jnp.transpose(x_nchw, (0, 2, 3, 1))  # NCHW -> NHWC (channels on lanes)

    out = pl.pallas_call(
        cnn_kernel,
        out_shape=jax.ShapeDtypeStruct((B, 1, out_pad), jnp.float32),
        grid=(B,),
        in_specs=[
            pl.BlockSpec((None, H, W, Cin), lambda i: (i, 0, 0, 0)),
            pl.BlockSpec(prep["w1f"].shape, lambda i: (0, 0)),
            pl.BlockSpec(prep["b1"].shape, lambda i: (0, 0)),
            pl.BlockSpec(prep["w2f"].shape, lambda i: (0, 0)),
            pl.BlockSpec(prep["b2"].shape, lambda i: (0, 0)),
            pl.BlockSpec(prep["wlf"].shape, lambda i: (0, 0)),
            pl.BlockSpec(prep["blf"].shape, lambda i: (0, 0)),
        ],
        out_specs=pl.BlockSpec((None, 1, out_pad), lambda i: (i, 0, 0)),
        compiler_params=pltpu.CompilerParams(
            dimension_semantics=("parallel",)),   # v7x: 2 TCs split the batch
    )(x, prep["w1f"], prep["b1"], prep["w2f"], prep["b2"],
      prep["wlf"], prep["blf"])

    return out[:, 0, :prep["out_dim"]]


# ---------------------------------------------------------------------------
# Pure-JAX reference (NCHW like PyTorch) for the correctness check.
# ---------------------------------------------------------------------------
def ref_forward(x_nchw, params):
    w1, b1, w2, b2, w_lin, b_lin = (params[k] for k in
                                    ("w1", "b1", "w2", "b2", "w_lin", "b_lin"))
    dn = ("NCHW", "HWIO", "NCHW")

    def conv_silu_pool(x, w, b):
        y = lax.conv_general_dilated(x, w, (1, 1), "SAME",
                                     dimension_numbers=dn)
        y = y + b.reshape(1, -1, 1, 1)
        y = y * jax.nn.sigmoid(y)
        y = lax.reduce_window(y, 0.0, lax.add,
                              (1, 1, 2, 2), (1, 1, 2, 2), "VALID") / 4.0
        return y

    h = conv_silu_pool(x_nchw, w1, b1)
    h = conv_silu_pool(h, w2, b2)
    flat = h.reshape(h.shape[0], -1)
    return flat @ w_lin.T + b_lin.reshape(1, -1)


if __name__ == "__main__":
    B, in_channels, H, W = 2, 4, 16, 16
    out_dim = 10

    key = jax.random.PRNGKey(0)
    ks = jax.random.split(key, 7)
    params = {
        "w1": jax.random.normal(ks[0], (3, 3, in_channels, 16), jnp.float32) * 0.1,
        "b1": jax.random.normal(ks[1], (16,), jnp.float32) * 0.1,
        "w2": jax.random.normal(ks[2], (3, 3, 16, 32), jnp.float32) * 0.1,
        "b2": jax.random.normal(ks[3], (32,), jnp.float32) * 0.1,
        "w_lin": jax.random.normal(ks[4], (out_dim, 32 * (H // 4) * (W // 4)),
                                   jnp.float32) * 0.05,
        "b_lin": jax.random.normal(ks[5], (out_dim,), jnp.float32) * 0.1,
    }
    x = jax.random.normal(ks[6], (B, in_channels, H, W), jnp.float32)

    prep = prepare_params(params, H, W)          # one-time weight re-layout
    out = jax.block_until_ready(cnn_forward(x, prep))

    ref = jax.block_until_ready(ref_forward(x, params))
    np.testing.assert_allclose(np.asarray(out), np.asarray(ref),
                               rtol=1e-4, atol=1e-4)
    print("KERNEL_OK")
</pallas_src>

<mosaic_0001>
module attributes {stable_mosaic.version = 11 : i64} {
  func.func @cnn_kernel(%arg0: i32, %arg1: memref<1x16x16x4xf32, #tpu.memory_space<vmem>>, %arg2: memref<36x16xf32, #tpu.memory_space<vmem>>, %arg3: memref<1x16xf32, #tpu.memory_space<vmem>>, %arg4: memref<144x32xf32, #tpu.memory_space<vmem>>, %arg5: memref<1x32xf32, #tpu.memory_space<vmem>>, %arg6: memref<512x128xf32, #tpu.memory_space<vmem>>, %arg7: memref<1x128xf32, #tpu.memory_space<vmem>>, %arg8: memref<1x1x128xf32, #tpu.memory_space<vmem>>) attributes {dimension_semantics = [#tpu.dimension_semantics<parallel>], iteration_bounds = array<i64: 2>, scalar_prefetch = 0 : i64, scratch_operands = 0 : i64, tpu.core_type = #tpu.core_type<tc>, window_params = [{transform_indices = @transform_0, window_bounds = array<i64: 1, 16, 16, 4>}, {pipeline_mode = #tpu.pipeline_mode<synchronous>, transform_indices = @transform_1, window_bounds = array<i64: 36, 16>}, {pipeline_mode = #tpu.pipeline_mode<synchronous>, transform_indices = @transform_2, window_bounds = array<i64: 1, 16>}, {pipeline_mode = #tpu.pipeline_mode<synchronous>, transform_indices = @transform_3, window_bounds = array<i64: 144, 32>}, {pipeline_mode = #tpu.pipeline_mode<synchronous>, transform_indices = @transform_4, window_bounds = array<i64: 1, 32>}, {pipeline_mode = #tpu.pipeline_mode<synchronous>, transform_indices = @transform_5, window_bounds = array<i64: 512, 128>}, {pipeline_mode = #tpu.pipeline_mode<synchronous>, transform_indices = @transform_6, window_bounds = array<i64: 1, 128>}, {transform_indices = @transform_7, window_bounds = array<i64: 1, 1, 128>}]} {
    %c0 = arith.constant 0 : index
    %c0_0 = arith.constant 0 : index
    %c0_1 = arith.constant 0 : index
    %c0_2 = arith.constant 0 : index
    %0 = vector.load %arg1[%c0, %c0_0, %c0_1, %c0_2] : memref<1x16x16x4xf32, #tpu.memory_space<vmem>>, vector<1x16x16x4xf32>
    %1 = vector.shape_cast %0 : vector<1x16x16x4xf32> to vector<16x16x4xf32>
    %cst = arith.constant 0.000000e+00 : f32
    %2 = vector.broadcast %cst : f32 to vector<1x16x4xf32>
    %3 = tpu.concatenate %2, %1, %2 in 0 : vector<1x16x4xf32>, vector<16x16x4xf32>, vector<1x16x4xf32> -> vector<18x16x4xf32>
    %cst_3 = arith.constant 0.000000e+00 : f32
    %4 = vector.broadcast %cst_3 : f32 to vector<18x1x4xf32>
    %5 = tpu.concatenate %4, %3, %4 in 1 : vector<18x1x4xf32>, vector<18x16x4xf32>, vector<18x1x4xf32> -> vector<18x18x4xf32>
    %6 = vector.extract_strided_slice %5 {offsets = [0, 0, 0], sizes = [16, 16, 4], strides = [1, 1, 1]} : vector<18x18x4xf32> to vector<16x16x4xf32>
    %7 = vector.extract_strided_slice %5 {offsets = [0, 1, 0], sizes = [16, 16, 4], strides = [1, 1, 1]} : vector<18x18x4xf32> to vector<16x16x4xf32>
    %8 = vector.extract_strided_slice %5 {offsets = [0, 2, 0], sizes = [16, 16, 4], strides = [1, 1, 1]} : vector<18x18x4xf32> to vector<16x16x4xf32>
    %9 = vector.extract_strided_slice %5 {offsets = [1, 0, 0], sizes = [16, 16, 4], strides = [1, 1, 1]} : vector<18x18x4xf32> to vector<16x16x4xf32>
    %10 = vector.extract_strided_slice %5 {offsets = [1, 1, 0], sizes = [16, 16, 4], strides = [1, 1, 1]} : vector<18x18x4xf32> to vector<16x16x4xf32>
    %11 = vector.extract_strided_slice %5 {offsets = [1, 2, 0], sizes = [16, 16, 4], strides = [1, 1, 1]} : vector<18x18x4xf32> to vector<16x16x4xf32>
    %12 = vector.extract_strided_slice %5 {offsets = [2, 0, 0], sizes = [16, 16, 4], strides = [1, 1, 1]} : vector<18x18x4xf32> to vector<16x16x4xf32>
    %13 = vector.extract_strided_slice %5 {offsets = [2, 1, 0], sizes = [16, 16, 4], strides = [1, 1, 1]} : vector<18x18x4xf32> to vector<16x16x4xf32>
    %14 = vector.extract_strided_slice %5 {offsets = [2, 2, 0], sizes = [16, 16, 4], strides = [1, 1, 1]} : vector<18x18x4xf32> to vector<16x16x4xf32>
    %15 = tpu.concatenate %6, %7, %8, %9, %10, %11, %12, %13, %14 in 2 : vector<16x16x4xf32>, vector<16x16x4xf32>, vector<16x16x4xf32>, vector<16x16x4xf32>, vector<16x16x4xf32>, vector<16x16x4xf32>, vector<16x16x4xf32>, vector<16x16x4xf32>, vector<16x16x4xf32> -> vector<16x16x36xf32>
    %16 = vector.shape_cast %15 : vector<16x16x36xf32> to vector<256x36xf32>
    %c0_4 = arith.constant 0 : index
    %c0_5 = arith.constant 0 : index
    %17 = vector.load %arg2[%c0_4, %c0_5] : memref<36x16xf32, #tpu.memory_space<vmem>>, vector<36x16xf32>
    %cst_6 = arith.constant dense<0.000000e+00> : vector<256x16xf32>
    %18 = tpu.matmul %16, %17, %cst_6 {dimension_numbers = #tpu.dot_dimension_numbers<[1], [0], [0], [1], [0, 0, 1, 1], [], []>} : vector<256x36xf32>, vector<36x16xf32>, vector<256x16xf32> -> vector<256x16xf32>
    %c0_7 = arith.constant 0 : index
    %c0_8 = arith.constant 0 : index
    %19 = vector.load %arg3[%c0_7, %c0_8] : memref<1x16xf32, #tpu.memory_space<vmem>>, vector<1x16xf32>
    %20 = vector.broadcast %19 : vector<1x16xf32> to vector<256x16xf32>
    %21 = arith.addf %18, %20 : vector<256x16xf32>
    %22 = arith.negf %21 : vector<256x16xf32>
    %23 = math.exp %22 : vector<256x16xf32>
    %cst_9 = arith.constant 1.000000e+00 : f32
    %24 = vector.broadcast %cst_9 : f32 to vector<256x16xf32>
    %25 = arith.addf %24, %23 : vector<256x16xf32>
    %26 = arith.divf %24, %25 : vector<256x16xf32>
    %27 = arith.mulf %21, %26 : vector<256x16xf32>
    %28 = tpu.iota {dimensions = array<i32: 0>} : vector<64x256xi32>
    %29 = tpu.iota {dimensions = array<i32: 1>} : vector<64x256xi32>
    %c4_i32 = arith.constant 4 : i32
    %30 = vector.broadcast %c4_i32 : i32 to vector<64x256xi32>
    %31 = arith.shrsi %29, %30 : vector<64x256xi32>
    %c15_i32 = arith.constant 15 : i32
    %32 = vector.broadcast %c15_i32 : i32 to vector<64x256xi32>
    %33 = arith.andi %29, %32 : vector<64x256xi32>
    %c3_i32 = arith.constant 3 : i32
    %34 = vector.broadcast %c3_i32 : i32 to vector<64x256xi32>
    %35 = arith.shrsi %28, %34 : vector<64x256xi32>
    %c7_i32 = arith.constant 7 : i32
    %36 = vector.broadcast %c7_i32 : i32 to vector<64x256xi32>
    %37 = arith.andi %28, %36 : vector<64x256xi32>
    %c1_i32 = arith.constant 1 : i32
    %38 = vector.broadcast %c1_i32 : i32 to vector<64x256xi32>
    %39 = arith.shrsi %31, %38 : vector<64x256xi32>
    %40 = arith.cmpi eq, %39, %35 : vector<64x256xi32>
    %c1_i32_10 = arith.constant 1 : i32
    %41 = vector.broadcast %c1_i32_10 : i32 to vector<64x256xi32>
    %42 = arith.shrsi %33, %41 : vector<64x256xi32>
    %43 = arith.cmpi eq, %42, %37 : vector<64x256xi32>
    %44 = arith.andi %40, %43 : vector<64x256xi1>
    %cst_11 = arith.constant 2.500000e-01 : f32
    %cst_12 = arith.constant 0.000000e+00 : f32
    %45 = vector.broadcast %cst_11 : f32 to vector<64x256xf32>
    %46 = vector.broadcast %cst_12 : f32 to vector<64x256xf32>
    %47 = arith.select %44, %45, %46 : vector<64x256xi1>, vector<64x256xf32>
    %cst_13 = arith.constant dense<0.000000e+00> : vector<64x16xf32>
    %48 = tpu.matmul %47, %27, %cst_13 {dimension_numbers = #tpu.dot_dimension_numbers<[1], [0], [0], [1], [0, 0, 1, 1], [], []>} : vector<64x256xf32>, vector<256x16xf32>, vector<64x16xf32> -> vector<64x16xf32>
    %49 = vector.shape_cast %48 : vector<64x16xf32> to vector<8x8x16xf32>
    %cst_14 = arith.constant 0.000000e+00 : f32
    %50 = vector.broadcast %cst_14 : f32 to vector<1x8x16xf32>
    %51 = tpu.concatenate %50, %49, %50 in 0 : vector<1x8x16xf32>, vector<8x8x16xf32>, vector<1x8x16xf32> -> vector<10x8x16xf32>
    %cst_15 = arith.constant 0.000000e+00 : f32
    %52 = vector.broadcast %cst_15 : f32 to vector<10x1x16xf32>
    %53 = tpu.concatenate %52, %51, %52 in 1 : vector<10x1x16xf32>, vector<10x8x16xf32>, vector<10x1x16xf32> -> vector<10x10x16xf32>
    %54 = vector.extract_strided_slice %53 {offsets = [0, 0, 0], sizes = [8, 8, 16], strides = [1, 1, 1]} : vector<10x10x16xf32> to vector<8x8x16xf32>
    %55 = vector.extract_strided_slice %53 {offsets = [0, 1, 0], sizes = [8, 8, 16], strides = [1, 1, 1]} : vector<10x10x16xf32> to vector<8x8x16xf32>
    %56 = vector.extract_strided_slice %53 {offsets = [0, 2, 0], sizes = [8, 8, 16], strides = [1, 1, 1]} : vector<10x10x16xf32> to vector<8x8x16xf32>
    %57 = vector.extract_strided_slice %53 {offsets = [1, 0, 0], sizes = [8, 8, 16], strides = [1, 1, 1]} : vector<10x10x16xf32> to vector<8x8x16xf32>
    %58 = vector.extract_strided_slice %53 {offsets = [1, 1, 0], sizes = [8, 8, 16], strides = [1, 1, 1]} : vector<10x10x16xf32> to vector<8x8x16xf32>
    %59 = vector.extract_strided_slice %53 {offsets = [1, 2, 0], sizes = [8, 8, 16], strides = [1, 1, 1]} : vector<10x10x16xf32> to vector<8x8x16xf32>
    %60 = vector.extract_strided_slice %53 {offsets = [2, 0, 0], sizes = [8, 8, 16], strides = [1, 1, 1]} : vector<10x10x16xf32> to vector<8x8x16xf32>
    %61 = vector.extract_strided_slice %53 {offsets = [2, 1, 0], sizes = [8, 8, 16], strides = [1, 1, 1]} : vector<10x10x16xf32> to vector<8x8x16xf32>
    %62 = vector.extract_strided_slice %53 {offsets = [2, 2, 0], sizes = [8, 8, 16], strides = [1, 1, 1]} : vector<10x10x16xf32> to vector<8x8x16xf32>
    %63 = tpu.concatenate %54, %55, %56, %57, %58, %59, %60, %61, %62 in 2 : vector<8x8x16xf32>, vector<8x8x16xf32>, vector<8x8x16xf32>, vector<8x8x16xf32>, vector<8x8x16xf32>, vector<8x8x16xf32>, vector<8x8x16xf32>, vector<8x8x16xf32>, vector<8x8x16xf32> -> vector<8x8x144xf32>
    %64 = vector.shape_cast %63 : vector<8x8x144xf32> to vector<64x144xf32>
    %c0_16 = arith.constant 0 : index
    %c0_17 = arith.constant 0 : index
    %65 = vector.load %arg4[%c0_16, %c0_17] : memref<144x32xf32, #tpu.memory_space<vmem>>, vector<144x32xf32>
    %cst_18 = arith.constant dense<0.000000e+00> : vector<64x32xf32>
    %66 = tpu.matmul %64, %65, %cst_18 {dimension_numbers = #tpu.dot_dimension_numbers<[1], [0], [0], [1], [0, 0, 1, 1], [], []>} : vector<64x144xf32>, vector<144x32xf32>, vector<64x32xf32> -> vector<64x32xf32>
    %c0_19 = arith.constant 0 : index
    %c0_20 = arith.constant 0 : index
    %67 = vector.load %arg5[%c0_19, %c0_20] : memref<1x32xf32, #tpu.memory_space<vmem>>, vector<1x32xf32>
    %68 = vector.broadcast %67 : vector<1x32xf32> to vector<64x32xf32>
    %69 = arith.addf %66, %68 : vector<64x32xf32>
    %70 = arith.negf %69 : vector<64x32xf32>
    %71 = math.exp %70 : vector<64x32xf32>
    %cst_21 = arith.constant 1.000000e+00 : f32
    %72 = vector.broadcast %cst_21 : f32 to vector<64x32xf32>
    %73 = arith.addf %72, %71 : vector<64x32xf32>
    %74 = arith.divf %72, %73 : vector<64x32xf32>
    %75 = arith.mulf %69, %74 : vector<64x32xf32>
    %76 = tpu.iota {dimensions = array<i32: 0>} : vector<16x64xi32>
    %77 = tpu.iota {dimensions = array<i32: 1>} : vector<16x64xi32>
    %c3_i32_22 = arith.constant 3 : i32
    %78 = vector.broadcast %c3_i32_22 : i32 to vector<16x64xi32>
    %79 = arith.shrsi %77, %78 : vector<16x64xi32>
    %c7_i32_23 = arith.constant 7 : i32
    %80 = vector.broadcast %c7_i32_23 : i32 to vector<16x64xi32>
    %81 = arith.andi %77, %80 : vector<16x64xi32>
    %c2_i32 = arith.constant 2 : i32
    %82 = vector.broadcast %c2_i32 : i32 to vector<16x64xi32>
    %83 = arith.shrsi %76, %82 : vector<16x64xi32>
    %c3_i32_24 = arith.constant 3 : i32
    %84 = vector.broadcast %c3_i32_24 : i32 to vector<16x64xi32>
    %85 = arith.andi %76, %84 : vector<16x64xi32>
    %c1_i32_25 = arith.constant 1 : i32
    %86 = vector.broadcast %c1_i32_25 : i32 to vector<16x64xi32>
    %87 = arith.shrsi %79, %86 : vector<16x64xi32>
    %88 = arith.cmpi eq, %87, %83 : vector<16x64xi32>
    %c1_i32_26 = arith.constant 1 : i32
    %89 = vector.broadcast %c1_i32_26 : i32 to vector<16x64xi32>
    %90 = arith.shrsi %81, %89 : vector<16x64xi32>
    %91 = arith.cmpi eq, %90, %85 : vector<16x64xi32>
    %92 = arith.andi %88, %91 : vector<16x64xi1>
    %cst_27 = arith.constant 2.500000e-01 : f32
    %cst_28 = arith.constant 0.000000e+00 : f32
    %93 = vector.broadcast %cst_27 : f32 to vector<16x64xf32>
    %94 = vector.broadcast %cst_28 : f32 to vector<16x64xf32>
    %95 = arith.select %92, %93, %94 : vector<16x64xi1>, vector<16x64xf32>
    %cst_29 = arith.constant dense<0.000000e+00> : vector<16x32xf32>
    %96 = tpu.matmul %95, %75, %cst_29 {dimension_numbers = #tpu.dot_dimension_numbers<[1], [0], [0], [1], [0, 0, 1, 1], [], []>} : vector<16x64xf32>, vector<64x32xf32>, vector<16x32xf32> -> vector<16x32xf32>
    %97 = vector.extract_strided_slice %96 {offsets = [0, 0], sizes = [1, 32], strides = [1, 1]} : vector<16x32xf32> to vector<1x32xf32>
    %98 = vector.extract_strided_slice %96 {offsets = [1, 0], sizes = [1, 32], strides = [1, 1]} : vector<16x32xf32> to vector<1x32xf32>
    %99 = vector.extract_strided_slice %96 {offsets = [2, 0], sizes = [1, 32], strides = [1, 1]} : vector<16x32xf32> to vector<1x32xf32>
    %100 = vector.extract_strided_slice %96 {offsets = [3, 0], sizes = [1, 32], strides = [1, 1]} : vector<16x32xf32> to vector<1x32xf32>
    %101 = vector.extract_strided_slice %96 {offsets = [4, 0], sizes = [1, 32], strides = [1, 1]} : vector<16x32xf32> to vector<1x32xf32>
    %102 = vector.extract_strided_slice %96 {offsets = [5, 0], sizes = [1, 32], strides = [1, 1]} : vector<16x32xf32> to vector<1x32xf32>
    %103 = vector.extract_strided_slice %96 {offsets = [6, 0], sizes = [1, 32], strides = [1, 1]} : vector<16x32xf32> to vector<1x32xf32>
    %104 = vector.extract_strided_slice %96 {offsets = [7, 0], sizes = [1, 32], strides = [1, 1]} : vector<16x32xf32> to vector<1x32xf32>
    %105 = vector.extract_strided_slice %96 {offsets = [8, 0], sizes = [1, 32], strides = [1, 1]} : vector<16x32xf32> to vector<1x32xf32>
    %106 = vector.extract_strided_slice %96 {offsets = [9, 0], sizes = [1, 32], strides = [1, 1]} : vector<16x32xf32> to vector<1x32xf32>
    %107 = vector.extract_strided_slice %96 {offsets = [10, 0], sizes = [1, 32], strides = [1, 1]} : vector<16x32xf32> to vector<1x32xf32>
    %108 = vector.extract_strided_slice %96 {offsets = [11, 0], sizes = [1, 32], strides = [1, 1]} : vector<16x32xf32> to vector<1x32xf32>
    %109 = vector.extract_strided_slice %96 {offsets = [12, 0], sizes = [1, 32], strides = [1, 1]} : vector<16x32xf32> to vector<1x32xf32>
    %110 = vector.extract_strided_slice %96 {offsets = [13, 0], sizes = [1, 32], strides = [1, 1]} : vector<16x32xf32> to vector<1x32xf32>
    %111 = vector.extract_strided_slice %96 {offsets = [14, 0], sizes = [1, 32], strides = [1, 1]} : vector<16x32xf32> to vector<1x32xf32>
    %112 = vector.extract_strided_slice %96 {offsets = [15, 0], sizes = [1, 32], strides = [1, 1]} : vector<16x32xf32> to vector<1x32xf32>
    %113 = tpu.concatenate %97, %98, %99, %100, %101, %102, %103, %104, %105, %106, %107, %108, %109, %110, %111, %112 in 1 : vector<1x32xf32>, vector<1x32xf32>, vector<1x32xf32>, vector<1x32xf32>, vector<1x32xf32>, vector<1x32xf32>, vector<1x32xf32>, vector<1x32xf32>, vector<1x32xf32>, vector<1x32xf32>, vector<1x32xf32>, vector<1x32xf32>, vector<1x32xf32>, vector<1x32xf32>, vector<1x32xf32>, vector<1x32xf32> -> vector<1x512xf32>
    %c0_30 = arith.constant 0 : index
    %c0_31 = arith.constant 0 : index
    %114 = vector.load %arg6[%c0_30, %c0_31] : memref<512x128xf32, #tpu.memory_space<vmem>>, vector<512x128xf32>
    %cst_32 = arith.constant dense<0.000000e+00> : vector<1x128xf32>
    %115 = tpu.matmul %113, %114, %cst_32 {dimension_numbers = #tpu.dot_dimension_numbers<[1], [0], [0], [1], [0, 0, 1, 1], [], []>} : vector<1x512xf32>, vector<512x128xf32>, vector<1x128xf32> -> vector<1x128xf32>
    %c0_33 = arith.constant 0 : index
    %c0_34 = arith.constant 0 : index
    %116 = vector.load %arg7[%c0_33, %c0_34] : memref<1x128xf32, #tpu.memory_space<vmem>>, vector<1x128xf32>
    %117 = arith.addf %115, %116 : vector<1x128xf32>
    %c0_35 = arith.constant 0 : index
    %c0_36 = arith.constant 0 : index
    %c0_37 = arith.constant 0 : index
    %118 = vector.load %arg8[%c0_35, %c0_36, %c0_37] : memref<1x1x128xf32, #tpu.memory_space<vmem>>, vector<1x1x128xf32>
    %119 = vector.shape_cast %118 : vector<1x1x128xf32> to vector<1x128xf32>
    %120 = vector.shape_cast %117 : vector<1x128xf32> to vector<1x1x128xf32>
    tpu.vector_store %arg8[%c0_35, %c0_36, %c0_37], %120 {strides = array<i32>} : memref<1x1x128xf32, #tpu.memory_space<vmem>>, vector<1x1x128xf32>,
    return
  }
  func.func @transform_0(%arg0: i32) -> (i32, i32, i32, i32) {
    %c0_i32 = arith.constant 0 : i32
    %c0_i32_0 = arith.constant 0 : i32
    %c0_i32_1 = arith.constant 0 : i32
    %c0_i32_2 = arith.constant 0 : i32
    return %arg0, %c0_i32, %c0_i32_0, %c0_i32_1 : i32, i32, i32, i32
  }
  func.func @transform_1(%arg0: i32) -> (i32, i32) {
    %c0_i32 = arith.constant 0 : i32
    %c0_i32_0 = arith.constant 0 : i32
    %c0_i32_1 = arith.constant 0 : i32
    return %c0_i32, %c0_i32_0 : i32, i32
  }
  func.func @transform_2(%arg0: i32) -> (i32, i32) {
    %c0_i32 = arith.constant 0 : i32
    %c0_i32_0 = arith.constant 0 : i32
    %c0_i32_1 = arith.constant 0 : i32
    return %c0_i32, %c0_i32_0 : i32, i32
  }
  func.func @transform_3(%arg0: i32) -> (i32, i32) {
    %c0_i32 = arith.constant 0 : i32
    %c0_i32_0 = arith.constant 0 : i32
    %c0_i32_1 = arith.constant 0 : i32
    return %c0_i32, %c0_i32_0 : i32, i32
  }
  func.func @transform_4(%arg0: i32) -> (i32, i32) {
    %c0_i32 = arith.constant 0 : i32
    %c0_i32_0 = arith.constant 0 : i32
    %c0_i32_1 = arith.constant 0 : i32
    return %c0_i32, %c0_i32_0 : i32, i32
  }
  func.func @transform_5(%arg0: i32) -> (i32, i32) {
    %c0_i32 = arith.constant 0 : i32
    %c0_i32_0 = arith.constant 0 : i32
    %c0_i32_1 = arith.constant 0 : i32
    return %c0_i32, %c0_i32_0 : i32, i32
  }
  func.func @transform_6(%arg0: i32) -> (i32, i32) {
    %c0_i32 = arith.constant 0 : i32
    %c0_i32_0 = arith.constant 0 : i32
    %c0_i32_1 = arith.constant 0 : i32
    return %c0_i32, %c0_i32_0 : i32, i32
  }
  func.func @transform_7(%arg0: i32) -> (i32, i32, i32) {
    %c0_i32 = arith.constant 0 : i32
    %c0_i32_0 = arith.constant 0 : i32
    %c0_i32_1 = arith.constant 0 : i32
    return %arg0, %c0_i32, %c0_i32_0 : i32, i32, i32
  }
}

</mosaic_0001>

<llo_original>
// kernel: tpu_custom_call.1
$region0: #{tpu_custom_call.1}
  #allocation0 [shape = 'u32[]', space=smem, size = 0x4, offset = 0x4, fixed_abs, tag = 'smem constant byte address 0x4 - core index']
  #allocation1 [shape = 'u32[144,128]{1,0:T(1,128)}', space=vmem, size = 0x12000, scoped, tag = 'internal scratch']
  %s0 = inlined_call_operand.vmem [shape: f32[2,16,16,4], index: 0, kind: input, shape index: {}]
  %s1 = inlined_call_operand.vmem [shape: f32[36,16], index: 1, kind: input, shape index: {}]
  %s2 = inlined_call_operand.vmem [shape: f32[1,16], index: 2, kind: input, shape index: {}]
  %s3 = inlined_call_operand.vmem [shape: f32[144,32], index: 3, kind: input, shape index: {}]
  %s4 = inlined_call_operand.vmem [shape: f32[1,32], index: 4, kind: input, shape index: {}]
  %s5 = inlined_call_operand.vmem [shape: f32[512,128], index: 5, kind: input, shape index: {}]
  %s6 = inlined_call_operand.vmem [shape: f32[1,128], index: 6, kind: input, shape index: {}]
  %s7 = inlined_call_operand.hbm [shape: f32[2,1,128], index: 7, kind: output, shape index: {}]
  %s8 = sld [smem:[#allocation0]]
  $region61: #{tpu_custom_call.1} parent=0
    _
  %s10 = ssub.s32 1, %s8
  %s11 = scalar_select 0, %s10, %s8
  $region1: #{tpu_custom_call.1} parent=0
    #allocation2 [shape = 'u8[1024]{0}', space=vmem, size = 0x400, scoped, tag = 'output window, operand 0']
    #allocation3 [shape = 's32[2]{0}', space=sflag, size = 0x8, scoped, tag = 'scoped memory for tpu_custom_call.1']
    %12 = vsyncpa [#allocation3], 0
    %s13 = scalar_lea.sflag [#allocation3], 1
    %14 = vsyncpa %s13, 0
    loop: start=0, step=1, limit=4
    $region2: #{tpu_custom_call.1} parent=1 // loop_pre_header
      _
    $region3: #{tpu_custom_call.1} parent=1 // loop_header
      %s16 = sphi 0, %s20
      %p17 = scmp.ge.s32.totalorder %s16, 4
      %s26 = sphi 0, %s28
      %s29 = sphi 0, %s26
      %s30 = sphi 0, %s29
      %s46 = sphi 0, %s30
      %s50 = sphi 0, %s50
      %s52 = sphi 0, %s50
      %s53 = sphi 0, %s52
      %s67 = sphi 0, %s53
      %s71 = sphi 0, %s71
      %s73 = sphi 0, %s71
      %s74 = sphi 0, %s73
      %s88 = sphi 0, %s74
      %s92 = sphi 0, %s92
      %s94 = sphi 0, %s92
      %s95 = sphi 0, %s94
      %s109 = sphi 0, %s95
      %s113 = sphi 0, %s113
      %s115 = sphi 0, %s113
      %s116 = sphi 0, %s115
      %s130 = sphi 0, %s116
      %s134 = sphi 0, %s134
      %s136 = sphi 0, %s134
      %s137 = sphi 0, %s136
      %s151 = sphi 0, %s137
      %s155 = sphi 0, %s155
      %s157 = sphi 0, %s155
      %s158 = sphi 0, %s157
      %s172 = sphi 0, %s158
      %s178 = sphi 0, %s180
      %s181 = sphi 0, %s178
      %s182 = sphi 0, %s181
      %s198 = sphi 0, %s182
    $region4: #{tpu_custom_call.1} parent=1 // loop_header_branch
      %19 = sbr.rel (%p17) target = $region8
    $region5: #{tpu_custom_call.1} parent=1 // loop_body
      %s21 = ssub.s32 %s16, 1
      %s22 = ssub.s32 %s16, 2
      %s23 = sadd.s32 %s16, 1
      %s24 = ssub.s32 %s16, %s23
      %p25 = scmp.eq.s32.totalorder %s24, 0
      %s27 = sadd.s32 %s26, 1
      %s28 = scalar_select %p25, %s26, %s27
      %p31 = pneg %p25
      %p32 = scmp.eq.s32.totalorder %s16, 1
      %p33 = por %p31, %p32
      %p34 = scmp.ne.s32.totalorder %s26, %s29
      %p35 = scmp.eq.s32.totalorder %s16, 0
      %p36 = por %p34, %p35
      %p37 = scmp.ne.s32.totalorder %s26, %s29
      %p38 = scmp.eq.s32.totalorder %s21, 1
      %p39 = por %p37, %p38
      %p40 = scmp.ne.s32.totalorder %s29, %s30
      %p41 = scmp.eq.s32.totalorder %s21, 0
      %p42 = por %p40, %p41
      %p43 = scmp.ne.s32.totalorder %s29, %s30
      %p44 = scmp.eq.s32.totalorder %s22, 1
      %p45 = por %p43, %p44
      %p47 = scmp.ne.s32.totalorder %s30, %s46
      %p48 = scmp.eq.s32.totalorder %s22, 0
      %p49 = por %p47, %p48
      %s51 = sadd.s32 %s50, 1
      %p54 = scmp.eq.s32.totalorder %s16, 1
      %p55 = scmp.ne.s32.totalorder %s50, %s52
      %p56 = scmp.eq.s32.totalorder %s16, 0
      %p57 = por %p55, %p56
      %p58 = scmp.ne.s32.totalorder %s50, %s52
      %p59 = scmp.eq.s32.totalorder %s21, 1
      %p60 = por %p58, %p59
      %p61 = scmp.ne.s32.totalorder %s52, %s53
      %p62 = scmp.eq.s32.totalorder %s21, 0
      %p63 = por %p61, %p62
      %p64 = scmp.ne.s32.totalorder %s52, %s53
      %p65 = scmp.eq.s32.totalorder %s22, 1
      %p66 = por %p64, %p65
      %p68 = scmp.ne.s32.totalorder %s53, %s67
      %p69 = scmp.eq.s32.totalorder %s22, 0
      %p70 = por %p68, %p69
      %s72 = sadd.s32 %s71, 1
      %p75 = scmp.eq.s32.totalorder %s16, 1
      %p76 = scmp.ne.s32.totalorder %s71, %s73
      %p77 = scmp.eq.s32.totalorder %s16, 0
      %p78 = por %p76, %p77
      %p79 = scmp.ne.s32.totalorder %s71, %s73
      %p80 = scmp.eq.s32.totalorder %s21, 1
      %p81 = por %p79, %p80
      %p82 = scmp.ne.s32.totalorder %s73, %s74
      %p83 = scmp.eq.s32.totalorder %s21, 0
      %p84 = por %p82, %p83
      %p85 = scmp.ne.s32.totalorder %s73, %s74
      %p86 = scmp.eq.s32.totalorder %s22, 1
      %p87 = por %p85, %p86
      %p89 = scmp.ne.s32.totalorder %s74, %s88
      %p90 = scmp.eq.s32.totalorder %s22, 0
      %p91 = por %p89, %p90
      %s93 = sadd.s32 %s92, 1
      %p96 = scmp.eq.s32.totalorder %s16, 1
      %p97 = scmp.ne.s32.totalorder %s92, %s94
      %p98 = scmp.eq.s32.totalorder %s16, 0
      %p99 = por %p97, %p98
      %p100 = scmp.ne.s32.totalorder %s92, %s94
      %p101 = scmp.eq.s32.totalorder %s21, 1
      %p102 = por %p100, %p101
      %p103 = scmp.ne.s32.totalorder %s94, %s95
      %p104 = scmp.eq.s32.totalorder %s21, 0
      %p105 = por %p103, %p104
      %p106 = scmp.ne.s32.totalorder %s94, %s95
      %p107 = scmp.eq.s32.totalorder %s22, 1
      %p108 = por %p106, %p107
      %p110 = scmp.ne.s32.totalorder %s95, %s109
      %p111 = scmp.eq.s32.totalorder %s22, 0
      %p112 = por %p110, %p111
      %s114 = sadd.s32 %s113, 1
      %p117 = scmp.eq.s32.totalorder %s16, 1
      %p118 = scmp.ne.s32.totalorder %s113, %s115
      %p119 = scmp.eq.s32.totalorder %s16, 0
      %p120 = por %p118, %p119
      %p121 = scmp.ne.s32.totalorder %s113, %s115
      %p122 = scmp.eq.s32.totalorder %s21, 1
      %p123 = por %p121, %p122
      %p124 = scmp.ne.s32.totalorder %s115, %s116
      %p125 = scmp.eq.s32.totalorder %s21, 0
      %p126 = por %p124, %p125
      %p127 = scmp.ne.s32.totalorder %s115, %s116
      %p128 = scmp.eq.s32.totalorder %s22, 1
      %p129 = por %p127, %p128
      %p131 = scmp.ne.s32.totalorder %s116, %s130
      %p132 = scmp.eq.s32.totalorder %s22, 0
      %p133 = por %p131, %p132
      %s135 = sadd.s32 %s134, 1
      %p138 = scmp.eq.s32.totalorder %s16, 1
      %p139 = scmp.ne.s32.totalorder %s134, %s136
      %p140 = scmp.eq.s32.totalorder %s16, 0
      %p141 = por %p139, %p140
      %p142 = scmp.ne.s32.totalorder %s134, %s136
      %p143 = scmp.eq.s32.totalorder %s21, 1
      %p144 = por %p142, %p143
      %p145 = scmp.ne.s32.totalorder %s136, %s137
      %p146 = scmp.eq.s32.totalorder %s21, 0
      %p147 = por %p145, %p146
      %p148 = scmp.ne.s32.totalorder %s136, %s137
      %p149 = scmp.eq.s32.totalorder %s22, 1
      %p150 = por %p148, %p149
      %p152 = scmp.ne.s32.totalorder %s137, %s151
      %p153 = scmp.eq.s32.totalorder %s22, 0
      %p154 = por %p152, %p153
      %s156 = sadd.s32 %s155, 1
      %p159 = scmp.eq.s32.totalorder %s16, 1
      %p160 = scmp.ne.s32.totalorder %s155, %s157
      %p161 = scmp.eq.s32.totalorder %s16, 0
      %p162 = por %p160, %p161
      %p163 = scmp.ne.s32.totalorder %s155, %s157
      %p164 = scmp.eq.s32.totalorder %s21, 1
      %p165 = por %p163, %p164
      %p166 = scmp.ne.s32.totalorder %s157, %s158
      %p167 = scmp.eq.s32.totalorder %s21, 0
      %p168 = por %p166, %p167
      %p169 = scmp.ne.s32.totalorder %s157, %s158
      %p170 = scmp.eq.s32.totalorder %s22, 1
      %p171 = por %p169, %p170
      %p173 = scmp.ne.s32.totalorder %s158, %s172
      %p174 = scmp.eq.s32.totalorder %s22, 0
      %p175 = por %p173, %p174
      %s176 = ssub.s32 %s16, %s23
      %p177 = scmp.eq.s32.totalorder %s176, 0
      %s179 = sadd.s32 %s178, 1
      %s180 = scalar_select %p177, %s178, %s179
      %p183 = pneg %p177
      %p184 = scmp.eq.s32.totalorder %s16, 1
      %p185 = por %p183, %p184
      %p186 = scmp.ne.s32.totalorder %s178, %s181
      %p187 = scmp.eq.s32.totalorder %s16, 0
      %p188 = por %p186, %p187
      %p189 = scmp.ne.s32.totalorder %s178, %s181
      %p190 = scmp.eq.s32.totalorder %s21, 1
      %p191 = por %p189, %p190
      %p192 = scmp.ne.s32.totalorder %s181, %s182
      %p193 = scmp.eq.s32.totalorder %s21, 0
      %p194 = por %p192, %p193
      %p195 = scmp.ne.s32.totalorder %s181, %s182
      %p196 = scmp.eq.s32.totalorder %s22, 1
      %p197 = por %p195, %p196
      %p199 = scmp.ne.s32.totalorder %s182, %s198
      %p200 = scmp.eq.s32.totalorder %s22, 0
      %p201 = por %p199, %p200
      %p202 = scmp.le.s32.totalorder 1, %s16
      %p203 = scmp.lt.s32.totalorder %s16, 3
      %p204 = pnand %p202, %p203
      %p205 = pneg %p204
      // Predicated region
      $region9: #{tpu_custom_call.1} parent=5 // pred_check
        _
      $region10: #{tpu_custom_call.1} parent=5 // pred_check_branch
        %207 = sbr.rel (%p204) target = $region12
      $region11: #{tpu_custom_call.1} parent=5 // pred_region
        %s208 = ssub.s32 %s16, 1
        // Predicated region
        $region13: #{tpu_custom_call.1} parent=11 // pred_check
          %p209 = pneg %p63
        $region14: #{tpu_custom_call.1} parent=11 // pred_check_branch
          %211 = sbr.rel (%p209) target = $region16
        $region15: #{tpu_custom_call.1} parent=11 // pred_region
          _
        $region16: #{tpu_custom_call.1} parent=11 // pred_fallthru
          _
        // Predicated region
        $region17: #{tpu_custom_call.1} parent=11 // pred_check
          %p212 = pneg %p84
        $region18: #{tpu_custom_call.1} parent=11 // pred_check_branch
          %214 = sbr.rel (%p212) target = $region20
        $region19: #{tpu_custom_call.1} parent=11 // pred_region
          _
        $region20: #{tpu_custom_call.1} parent=11 // pred_fallthru
          _
        // Predicated region
        $region21: #{tpu_custom_call.1} parent=11 // pred_check
          %p215 = pneg %p105
        $region22: #{tpu_custom_call.1} parent=11 // pred_check_branch
          %217 = sbr.rel (%p215) target = $region24
        $region23: #{tpu_custom_call.1} parent=11 // pred_region
          _
        $region24: #{tpu_custom_call.1} parent=11 // pred_fallthru
          _
        // Predicated region
        $region25: #{tpu_custom_call.1} parent=11 // pred_check
          %p218 = pneg %p126
        $region26: #{tpu_custom_call.1} parent=11 // pred_check_branch
          %220 = sbr.rel (%p218) target = $region28
        $region27: #{tpu_custom_call.1} parent=11 // pred_region
          _
        $region28: #{tpu_custom_call.1} parent=11 // pred_fallthru
          _
        // Predicated region
        $region29: #{tpu_custom_call.1} parent=11 // pred_check
          %p221 = pneg %p147
        $region30: #{tpu_custom_call.1} parent=11 // pred_check_branch
          %223 = sbr.rel (%p221) target = $region32
        $region31: #{tpu_custom_call.1} parent=11 // pred_region
          _
        $region32: #{tpu_custom_call.1} parent=11 // pred_fallthru
          _
        // Predicated region
        $region33: #{tpu_custom_call.1} parent=11 // pred_check
          %p224 = pneg %p168
        $region34: #{tpu_custom_call.1} parent=11 // pred_check_branch
          %226 = sbr.rel (%p224) target = $region36
        $region35: #{tpu_custom_call.1} parent=11 // pred_region
          _
        $region36: #{tpu_custom_call.1} parent=11 // pred_fallthru
          _
      $region12: #{tpu_custom_call.1} parent=5 // pred_fallthru
        _
      %p227 = scmp.lt.s32.totalorder %s16, 2
      // Predicated region
      $region37: #{tpu_custom_call.1} parent=5 // pred_check
        %p228 = pneg %p227
      $region38: #{tpu_custom_call.1} parent=5 // pred_check_branch
        %230 = sbr.rel (%p228) target = $region40
      $region39: #{tpu_custom_call.1} parent=5 // pred_region
        // Predicated region
        $region41: #{tpu_custom_call.1} parent=39 // pred_check
          %p231 = pneg %p36
        $region42: #{tpu_custom_call.1} parent=39 // pred_check_branch
          %233 = sbr.rel (%p231) target = $region44
        $region43: #{tpu_custom_call.1} parent=39 // pred_region
          %p234 = scmp.lt.s32.totalorder %s16, 1
          %s235 = scalar_select %p234, %s16, 1
          %s236 = smul.addr %s235, 32
          %s237 = smul.addr %s236, 8
          %s238 = scalar_lea.vmem %s0, %s237
        $region44: #{tpu_custom_call.1} parent=39 // pred_fallthru
          _
      $region40: #{tpu_custom_call.1} parent=5 // pred_fallthru
        _
      %p239 = scmp.le.s32.totalorder 1, %s16
      %p240 = scmp.lt.s32.totalorder %s16, 3
      %p241 = pnand %p239, %p240
      %p242 = pneg %p241
      // Predicated region
      $region45: #{tpu_custom_call.1} parent=5 // pred_check
        _
      $region46: #{tpu_custom_call.1} parent=5 // pred_check_branch
        %244 = sbr.rel (%p241) target = $region48
      $region47: #{tpu_custom_call.1} parent=5 // pred_region
        %s245 = ssub.s32 %s16, 1
        %p246 = scmp.lt.s32.totalorder %s21, 1
        %s247 = scalar_select %p246, %s21, 1
        %s248 = smul.addr %s247, 32
        %s249 = smul.addr %s248, 8
        %s250 = scalar_lea.vmem %s0, %s249
        %p251 = pneg %p42
        %p252 = pneg %p39
        %p253 = pneg %p63
        %p254 = pneg %p60
        %p255 = pneg %p84
        %p256 = pneg %p81
        %p257 = pneg %p105
        %p258 = pneg %p102
        %p259 = pneg %p126
        %p260 = pneg %p123
        %p261 = pneg %p147
        %p262 = pneg %p144
        %p263 = pneg %p168
        %p264 = pneg %p165
        %p265 = pneg %p194
        %p266 = pneg %p191
        %s267 = sand.u32 %s181, 1
        %s268 = scalar_lea.sflag [#allocation3], %s267
        %s269 = sand.u32 %s181, 1
        %s270 = scalar_lea.vmem [#allocation2], %s269
        %p271 = scmp.lt.s32.totalorder %s21, 1
        %s272 = scalar_select %p271, %s21, 1
        %s273 = smul.addr %s272, 32
        %s274 = smul.addr %s273, 8
        %s275 = scalar_lea.vmem %s0, %s274
        %v276 = vld [vmem:[%s275] sm:$0xff]
        %v277 = vld [vmem:[%s275 + $0x8] sm:$0xff]
        %v278 = vld [vmem:[%s275 + $0x10] sm:$0xff]
        %v279 = vld [vmem:[%s275 + $0x18] sm:$0xff]
        %v280 = vld [vmem:[%s275 + $0x20] sm:$0xff]
        %v281 = vld [vmem:[%s275 + $0x28] sm:$0xff]
        %v282 = vld [vmem:[%s275 + $0x30] sm:$0xff]
        %v283 = vld [vmem:[%s275 + $0x38] sm:$0xff]
        %v284 = vld [vmem:[%s275 + $0x40] sm:$0xff]
        %v285 = vld [vmem:[%s275 + $0x48] sm:$0xff]
        %v286 = vld [vmem:[%s275 + $0x50] sm:$0xff]
        %v287 = vld [vmem:[%s275 + $0x58] sm:$0xff]
        %v288 = vld [vmem:[%s275 + $0x60] sm:$0xff]
        %v289 = vld [vmem:[%s275 + $0x68] sm:$0xff]
        %v290 = vld [vmem:[%s275 + $0x70] sm:$0xff]
        %v291 = vld [vmem:[%s275 + $0x78] sm:$0xff]
        %v292 = vld [vmem:[%s275 + $0x80] sm:$0xff]
        %v293 = vld [vmem:[%s275 + $0x88] sm:$0xff]
        %v294 = vld [vmem:[%s275 + $0x90] sm:$0xff]
        %v295 = vld [vmem:[%s275 + $0x98] sm:$0xff]
        %v296 = vld [vmem:[%s275 + $0xa0] sm:$0xff]
        %v297 = vld [vmem:[%s275 + $0xa8] sm:$0xff]
        %v298 = vld [vmem:[%s275 + $0xb0] sm:$0xff]
        %v299 = vld [vmem:[%s275 + $0xb8] sm:$0xff]
        %v300 = vld [vmem:[%s275 + $0xc0] sm:$0xff]
        %v301 = vld [vmem:[%s275 + $0xc8] sm:$0xff]
        %v302 = vld [vmem:[%s275 + $0xd0] sm:$0xff]
        %v303 = vld [vmem:[%s275 + $0xd8] sm:$0xff]
        %v304 = vld [vmem:[%s275 + $0xe0] sm:$0xff]
        %v305 = vld [vmem:[%s275 + $0xe8] sm:$0xff]
        %v306 = vld [vmem:[%s275 + $0xf0] sm:$0xff]
        %v307 = vld [vmem:[%s275 + $0xf8] sm:$0xff]
        %vm341 = vcmask 1040384
        %v342 = vrot.slane 0.0, 7
        %v343 = vsel %vm341, %v342, %v342
        %v344 = vrot.slane %v276, 7
        %v345 = vrot.slane %v277, 7
        %v346 = vsel %vm341, %v344, %v345
        %v347 = vrot.slane %v278, 7
        %v348 = vrot.slane %v279, 7
        %v349 = vsel %vm341, %v347, %v348
        %v350 = vrot.slane %v280, 7
        %v351 = vrot.slane %v281, 7
        %v352 = vsel %vm341, %v350, %v351
        %v353 = vrot.slane %v282, 7
        %v354 = vrot.slane %v283, 7
        %v355 = vsel %vm341, %v353, %v354
        %v356 = vrot.slane %v284, 7
        %v357 = vrot.slane %v285, 7
        %v358 = vsel %vm341, %v356, %v357
        %v359 = vrot.slane %v286, 7
        %v360 = vrot.slane %v287, 7
        %v361 = vsel %vm341, %v359, %v360
        %v362 = vrot.slane %v288, 7
        %v363 = vrot.slane %v289, 7
        %v364 = vsel %vm341, %v362, %v363
        %v365 = vrot.slane %v290, 7
        %v366 = vrot.slane %v291, 7
        %v367 = vsel %vm341, %v365, %v366
        %v368 = vrot.slane %v292, 7
        %v369 = vrot.slane %v293, 7
        %v370 = vsel %vm341, %v368, %v369
        %v371 = vrot.slane %v294, 7
        %v372 = vrot.slane %v295, 7
        %v373 = vsel %vm341, %v371, %v372
        %v374 = vrot.slane %v296, 7
        %v375 = vrot.slane %v297, 7
        %v376 = vsel %vm341, %v374, %v375
        %v377 = vrot.slane %v298, 7
        %v378 = vrot.slane %v299, 7
        %v379 = vsel %vm341, %v377, %v378
        %v380 = vrot.slane %v300, 7
        %v381 = vrot.slane %v301, 7
        %v382 = vsel %vm341, %v380, %v381
        %v383 = vrot.slane %v302, 7
        %v384 = vrot.slane %v303, 7
        %v385 = vsel %vm341, %v383, %v384
        %v386 = vrot.slane %v304, 7
        %v387 = vrot.slane %v305, 7
        %v388 = vsel %vm341, %v386, %v387
        %v389 = vrot.slane %v306, 7
        %v390 = vrot.slane %v307, 7
        %v391 = vsel %vm341, %v389, %v390
        %v441 = vsel %vm341, 0.0, %v342
        %v442 = vsel %vm341, 0.0, %v344
        %v443 = vsel %vm341, 0.0, %v347
        %v444 = vsel %vm341, 0.0, %v350
        %v445 = vsel %vm341, 0.0, %v353
        %v446 = vsel %vm341, 0.0, %v356
        %v447 = vsel %vm341, 0.0, %v359
        %v448 = vsel %vm341, 0.0, %v362
        %v449 = vsel %vm341, 0.0, %v365
        %v450 = vsel %vm341, 0.0, %v368
        %v451 = vsel %vm341, 0.0, %v371
        %v452 = vsel %vm341, 0.0, %v374
        %v453 = vsel %vm341, 0.0, %v377
        %v454 = vsel %vm341, 0.0, %v380
        %v455 = vsel %vm341, 0.0, %v383
        %v456 = vsel %vm341, 0.0, %v386
        %v457 = vsel %vm341, 0.0, %v389
        %v458 = vsel %vm341, %v342, 0.0
        %v459 = vsel %vm341, %v345, 0.0
        %v460 = vsel %vm341, %v348, 0.0
        %v461 = vsel %vm341, %v351, 0.0
        %v462 = vsel %vm341, %v354, 0.0
        %v463 = vsel %vm341, %v357, 0.0
        %v464 = vsel %vm341, %v360, 0.0
        %v465 = vsel %vm341, %v363, 0.0
        %v466 = vsel %vm341, %v366, 0.0
        %v467 = vsel %vm341, %v369, 0.0
        %v468 = vsel %vm341, %v372, 0.0
        %v469 = vsel %vm341, %v375, 0.0
        %v470 = vsel %vm341, %v378, 0.0
        %v471 = vsel %vm341, %v381, 0.0
        %v472 = vsel %vm341, %v384, 0.0
        %v473 = vsel %vm341, %v387, 0.0
        %v474 = vsel %vm341, %v390, 0.0
        %vm507 = vcmask 1046528
        %v508 = vrot.slane %v441, 1
        %v509 = vrot.slane %v343, 1
        %v510 = vsel %vm507, %v508, %v509
        %v511 = vrot.slane %v458, 1
        %v512 = vsel %vm507, %v509, %v511
        %v513 = vrot.slane %v442, 1
        %v514 = vrot.slane %v346, 1
        %v515 = vsel %vm507, %v513, %v514
        %v516 = vrot.slane %v459, 1
        %v517 = vsel %vm507, %v514, %v516
        %v518 = vrot.slane %v443, 1
        %v519 = vrot.slane %v349, 1
        %v520 = vsel %vm507, %v518, %v519
        %v521 = vrot.slane %v460, 1
        %v522 = vsel %vm507, %v519, %v521
        %v523 = vrot.slane %v444, 1
        %v524 = vrot.slane %v352, 1
        %v525 = vsel %vm507, %v523, %v524
        %v526 = vrot.slane %v461, 1
        %v527 = vsel %vm507, %v524, %v526
        %v528 = vrot.slane %v445, 1
        %v529 = vrot.slane %v355, 1
        %v530 = vsel %vm507, %v528, %v529
        %v531 = vrot.slane %v462, 1
        %v532 = vsel %vm507, %v529, %v531
        %v533 = vrot.slane %v446, 1
        %v534 = vrot.slane %v358, 1
        %v535 = vsel %vm507, %v533, %v534
        %v536 = vrot.slane %v463, 1
        %v537 = vsel %vm507, %v534, %v536
        %v538 = vrot.slane %v447, 1
        %v539 = vrot.slane %v361, 1
        %v540 = vsel %vm507, %v538, %v539
        %v541 = vrot.slane %v464, 1
        %v542 = vsel %vm507, %v539, %v541
        %v543 = vrot.slane %v448, 1
        %v544 = vrot.slane %v364, 1
        %v545 = vsel %vm507, %v543, %v544
        %v546 = vrot.slane %v465, 1
        %v547 = vsel %vm507, %v544, %v546
        %v548 = vrot.slane %v449, 1
        %v549 = vrot.slane %v367, 1
        %v550 = vsel %vm507, %v548, %v549
        %v551 = vrot.slane %v466, 1
        %v552 = vsel %vm507, %v549, %v551
        %v553 = vrot.slane %v450, 1
        %v554 = vrot.slane %v370, 1
        %v555 = vsel %vm507, %v553, %v554
        %v556 = vrot.slane %v467, 1
        %v557 = vsel %vm507, %v554, %v556
        %v558 = vrot.slane %v451, 1
        %v559 = vrot.slane %v373, 1
        %v560 = vsel %vm507, %v558, %v559
        %v561 = vrot.slane %v468, 1
        %v562 = vsel %vm507, %v559, %v561
        %v563 = vrot.slane %v452, 1
        %v564 = vrot.slane %v376, 1
        %v565 = vsel %vm507, %v563, %v564
        %v566 = vrot.slane %v469, 1
        %v567 = vsel %vm507, %v564, %v566
        %v568 = vrot.slane %v453, 1
        %v569 = vrot.slane %v379, 1
        %v570 = vsel %vm507, %v568, %v569
        %v571 = vrot.slane %v470, 1
        %v572 = vsel %vm507, %v569, %v571
        %v573 = vrot.slane %v454, 1
        %v574 = vrot.slane %v382, 1
        %v575 = vsel %vm507, %v573, %v574
        %v576 = vrot.slane %v471, 1
        %v577 = vsel %vm507, %v574, %v576
        %v578 = vrot.slane %v455, 1
        %v579 = vrot.slane %v385, 1
        %v580 = vsel %vm507, %v578, %v579
        %v581 = vrot.slane %v472, 1
        %v582 = vsel %vm507, %v579, %v581
        %v583 = vrot.slane %v456, 1
        %v584 = vrot.slane %v388, 1
        %v585 = vsel %vm507, %v583, %v584
        %v586 = vrot.slane %v473, 1
        %v587 = vsel %vm507, %v584, %v586
        %588 = vrot.lane.b32.xlu0 %v510, 4
        %v589 = vpop.permute.xlu0 %588
        %590 = vrot.lane.b32.xlu0 %v512, 4
        %v591 = vpop.permute.xlu0 %590
        %592 = vrot.lane.b32.xlu0 %v515, 4
        %v593 = vpop.permute.xlu0 %592
        %594 = vrot.lane.b32.xlu0 %v517, 4
        %v595 = vpop.permute.xlu0 %594
        %596 = vrot.lane.b32.xlu0 %v520, 4
        %v597 = vpop.permute.xlu0 %596
        %598 = vrot.lane.b32.xlu0 %v522, 4
        %v599 = vpop.permute.xlu0 %598
        %600 = vrot.lane.b32.xlu0 %v525, 4
        %v601 = vpop.permute.xlu0 %600
        %602 = vrot.lane.b32.xlu0 %v527, 4
        %v603 = vpop.permute.xlu0 %602
        %604 = vrot.lane.b32.xlu0 %v530, 4
        %v605 = vpop.permute.xlu0 %604
        %606 = vrot.lane.b32.xlu0 %v532, 4
        %v607 = vpop.permute.xlu0 %606
        %608 = vrot.lane.b32.xlu0 %v535, 4
        %v609 = vpop.permute.xlu0 %608
        %610 = vrot.lane.b32.xlu0 %v537, 4
        %v611 = vpop.permute.xlu0 %610
        %612 = vrot.lane.b32.xlu0 %v540, 4
        %v613 = vpop.permute.xlu0 %612
        %614 = vrot.lane.b32.xlu0 %v542, 4
        %v615 = vpop.permute.xlu0 %614
        %616 = vrot.lane.b32.xlu0 %v545, 4
        %v617 = vpop.permute.xlu0 %616
        %618 = vrot.lane.b32.xlu0 %v547, 4
        %v619 = vpop.permute.xlu0 %618
        %620 = vrot.lane.b32.xlu0 %v550, 4
        %v621 = vpop.permute.xlu0 %620
        %622 = vrot.lane.b32.xlu0 %v552, 4
        %v623 = vpop.permute.xlu0 %622
        %624 = vrot.lane.b32.xlu0 %v555, 4
        %v625 = vpop.permute.xlu0 %624
        %626 = vrot.lane.b32.xlu0 %v557, 4
        %v627 = vpop.permute.xlu0 %626
        %628 = vrot.lane.b32.xlu0 %v560, 4
        %v629 = vpop.permute.xlu0 %628
        %630 = vrot.lane.b32.xlu0 %v562, 4
        %v631 = vpop.permute.xlu0 %630
        %632 = vrot.lane.b32.xlu0 %v565, 4
        %v633 = vpop.permute.xlu0 %632
        %634 = vrot.lane.b32.xlu0 %v567, 4
        %v635 = vpop.permute.xlu0 %634
        %636 = vrot.lane.b32.xlu0 %v570, 4
        %v637 = vpop.permute.xlu0 %636
        %638 = vrot.lane.b32.xlu0 %v572, 4
        %v639 = vpop.permute.xlu0 %638
        %640 = vrot.lane.b32.xlu0 %v575, 4
        %v641 = vpop.permute.xlu0 %640
        %642 = vrot.lane.b32.xlu0 %v577, 4
        %v643 = vpop.permute.xlu0 %642
        %644 = vrot.lane.b32.xlu0 %v580, 4
        %v645 = vpop.permute.xlu0 %644
        %646 = vrot.lane.b32.xlu0 %v582, 4
        %v647 = vpop.permute.xlu0 %646
        %648 = vrot.lane.b32.xlu0 %v585, 4
        %v649 = vpop.permute.xlu0 %648
        %650 = vrot.lane.b32.xlu0 %v587, 4
        %v651 = vpop.permute.xlu0 %650
        %vm684 = vcmask 1045504
        %v685 = vrot.slane %v441, 2
        %v686 = vrot.slane %v343, 2
        %v687 = vsel %vm684, %v685, %v686
        %v688 = vrot.slane %v458, 2
        %v689 = vsel %vm684, %v686, %v688
        %v690 = vrot.slane %v442, 2
        %v691 = vrot.slane %v346, 2
        %v692 = vsel %vm684, %v690, %v691
        %v693 = vrot.slane %v459, 2
        %v694 = vsel %vm684, %v691, %v693
        %v695 = vrot.slane %v443, 2
        %v696 = vrot.slane %v349, 2
        %v697 = vsel %vm684, %v695, %v696
        %v698 = vrot.slane %v460, 2
        %v699 = vsel %vm684, %v696, %v698
        %v700 = vrot.slane %v444, 2
        %v701 = vrot.slane %v352, 2
        %v702 = vsel %vm684, %v700, %v701
        %v703 = vrot.slane %v461, 2
        %v704 = vsel %vm684, %v701, %v703
        %v705 = vrot.slane %v445, 2
        %v706 = vrot.slane %v355, 2
        %v707 = vsel %vm684, %v705, %v706
        %v708 = vrot.slane %v462, 2
        %v709 = vsel %vm684, %v706, %v708
        %v710 = vrot.slane %v446, 2
        %v711 = vrot.slane %v358, 2
        %v712 = vsel %vm684, %v710, %v711
        %v713 = vrot.slane %v463, 2
        %v714 = vsel %vm684, %v711, %v713
        %v715 = vrot.slane %v447, 2
        %v716 = vrot.slane %v361, 2
        %v717 = vsel %vm684, %v715, %v716
        %v718 = vrot.slane %v464, 2
        %v719 = vsel %vm684, %v716, %v718
        %v720 = vrot.slane %v448, 2
        %v721 = vrot.slane %v364, 2
        %v722 = vsel %vm684, %v720, %v721
        %v723 = vrot.slane %v465, 2
        %v724 = vsel %vm684, %v721, %v723
        %v725 = vrot.slane %v449, 2
        %v726 = vrot.slane %v367, 2
        %v727 = vsel %vm684, %v725, %v726
        %v728 = vrot.slane %v466, 2
        %v729 = vsel %vm684, %v726, %v728
        %v730 = vrot.slane %v450, 2
        %v731 = vrot.slane %v370, 2
        %v732 = vsel %vm684, %v730, %v731
        %v733 = vrot.slane %v467, 2
        %v734 = vsel %vm684, %v731, %v733
        %v735 = vrot.slane %v451, 2
        %v736 = vrot.slane %v373, 2
        %v737 = vsel %vm684, %v735, %v736
        %v738 = vrot.slane %v468, 2
        %v739 = vsel %vm684, %v736, %v738
        %v740 = vrot.slane %v452, 2
        %v741 = vrot.slane %v376, 2
        %v742 = vsel %vm684, %v740, %v741
        %v743 = vrot.slane %v469, 2
        %v744 = vsel %vm684, %v741, %v743
        %v745 = vrot.slane %v453, 2
        %v746 = vrot.slane %v379, 2
        %v747 = vsel %vm684, %v745, %v746
        %v748 = vrot.slane %v470, 2
        %v749 = vsel %vm684, %v746, %v748
        %v750 = vrot.slane %v454, 2
        %v751 = vrot.slane %v382, 2
        %v752 = vsel %vm684, %v750, %v751
        %v753 = vrot.slane %v471, 2
        %v754 = vsel %vm684, %v751, %v753
        %v755 = vrot.slane %v455, 2
        %v756 = vrot.slane %v385, 2
        %v757 = vsel %vm684, %v755, %v756
        %v758 = vrot.slane %v472, 2
        %v759 = vsel %vm684, %v756, %v758
        %v760 = vrot.slane %v456, 2
        %v761 = vrot.slane %v388, 2
        %v762 = vsel %vm684, %v760, %v761
        %v763 = vrot.slane %v473, 2
        %v764 = vsel %vm684, %v761, %v763
        %765 = vrot.lane.b32.xlu0 %v687, 8
        %v766 = vpop.permute.xlu0 %765
        %767 = vrot.lane.b32.xlu0 %v689, 8
        %v768 = vpop.permute.xlu0 %767
        %769 = vrot.lane.b32.xlu0 %v692, 8
        %v770 = vpop.permute.xlu0 %769
        %771 = vrot.lane.b32.xlu0 %v694, 8
        %v772 = vpop.permute.xlu0 %771
        %773 = vrot.lane.b32.xlu0 %v697, 8
        %v774 = vpop.permute.xlu0 %773
        %775 = vrot.lane.b32.xlu0 %v699, 8
        %v776 = vpop.permute.xlu0 %775
        %777 = vrot.lane.b32.xlu0 %v702, 8
        %v778 = vpop.permute.xlu0 %777
        %779 = vrot.lane.b32.xlu0 %v704, 8
        %v780 = vpop.permute.xlu0 %779
        %781 = vrot.lane.b32.xlu0 %v707, 8
        %v782 = vpop.permute.xlu0 %781
        %783 = vrot.lane.b32.xlu0 %v709, 8
        %v784 = vpop.permute.xlu0 %783
        %785 = vrot.lane.b32.xlu0 %v712, 8
        %v786 = vpop.permute.xlu0 %785
        %787 = vrot.lane.b32.xlu0 %v714, 8
        %v788 = vpop.permute.xlu0 %787
        %789 = vrot.lane.b32.xlu0 %v717, 8
        %v790 = vpop.permute.xlu0 %789
        %791 = vrot.lane.b32.xlu0 %v719, 8
        %v792 = vpop.permute.xlu0 %791
        %793 = vrot.lane.b32.xlu0 %v722, 8
        %v794 = vpop.permute.xlu0 %793
        %795 = vrot.lane.b32.xlu0 %v724, 8
        %v796 = vpop.permute.xlu0 %795
        %797 = vrot.lane.b32.xlu0 %v727, 8
        %v798 = vpop.permute.xlu0 %797
        %799 = vrot.lane.b32.xlu0 %v729, 8
        %v800 = vpop.permute.xlu0 %799
        %801 = vrot.lane.b32.xlu0 %v732, 8
        %v802 = vpop.permute.xlu0 %801
        %803 = vrot.lane.b32.xlu0 %v734, 8
        %v804 = vpop.permute.xlu0 %803
        %805 = vrot.lane.b32.xlu0 %v737, 8
        %v806 = vpop.permute.xlu0 %805
        %807 = vrot.lane.b32.xlu0 %v739, 8
        %v808 = vpop.permute.xlu0 %807
        %809 = vrot.lane.b32.xlu0 %v742, 8
        %v810 = vpop.permute.xlu0 %809
        %811 = vrot.lane.b32.xlu0 %v744, 8
        %v812 = vpop.permute.xlu0 %811
        %813 = vrot.lane.b32.xlu0 %v747, 8
        %v814 = vpop.permute.xlu0 %813
        %815 = vrot.lane.b32.xlu0 %v749, 8
        %v816 = vpop.permute.xlu0 %815
        %817 = vrot.lane.b32.xlu0 %v752, 8
        %v818 = vpop.permute.xlu0 %817
        %819 = vrot.lane.b32.xlu0 %v754, 8
        %v820 = vpop.permute.xlu0 %819
        %821 = vrot.lane.b32.xlu0 %v757, 8
        %v822 = vpop.permute.xlu0 %821
        %823 = vrot.lane.b32.xlu0 %v759, 8
        %v824 = vpop.permute.xlu0 %823
        %825 = vrot.lane.b32.xlu0 %v762, 8
        %v826 = vpop.permute.xlu0 %825
        %827 = vrot.lane.b32.xlu0 %v764, 8
        %v828 = vpop.permute.xlu0 %827
        %862 = vrot.lane.b32.xlu0 %v442, 12
        %v863 = vpop.permute.xlu0 %862
        %864 = vrot.lane.b32.xlu0 %v346, 12
        %v865 = vpop.permute.xlu0 %864
        %866 = vrot.lane.b32.xlu0 %v443, 12
        %v867 = vpop.permute.xlu0 %866
        %868 = vrot.lane.b32.xlu0 %v349, 12
        %v869 = vpop.permute.xlu0 %868
        %870 = vrot.lane.b32.xlu0 %v444, 12
        %v871 = vpop.permute.xlu0 %870
        %872 = vrot.lane.b32.xlu0 %v352, 12
        %v873 = vpop.permute.xlu0 %872
        %874 = vrot.lane.b32.xlu0 %v445, 12
        %v875 = vpop.permute.xlu0 %874
        %876 = vrot.lane.b32.xlu0 %v355, 12
        %v877 = vpop.permute.xlu0 %876
        %878 = vrot.lane.b32.xlu0 %v446, 12
        %v879 = vpop.permute.xlu0 %878
        %880 = vrot.lane.b32.xlu0 %v358, 12
        %v881 = vpop.permute.xlu0 %880
        %882 = vrot.lane.b32.xlu0 %v447, 12
        %v883 = vpop.permute.xlu0 %882
        %884 = vrot.lane.b32.xlu0 %v361, 12
        %v885 = vpop.permute.xlu0 %884
        %886 = vrot.lane.b32.xlu0 %v448, 12
        %v887 = vpop.permute.xlu0 %886
        %888 = vrot.lane.b32.xlu0 %v364, 12
        %v889 = vpop.permute.xlu0 %888
        %890 = vrot.lane.b32.xlu0 %v449, 12
        %v891 = vpop.permute.xlu0 %890
        %892 = vrot.lane.b32.xlu0 %v367, 12
        %v893 = vpop.permute.xlu0 %892
        %894 = vrot.lane.b32.xlu0 %v450, 12
        %v895 = vpop.permute.xlu0 %894
        %896 = vrot.lane.b32.xlu0 %v370, 12
        %v897 = vpop.permute.xlu0 %896
        %898 = vrot.lane.b32.xlu0 %v451, 12
        %v899 = vpop.permute.xlu0 %898
        %900 = vrot.lane.b32.xlu0 %v373, 12
        %v901 = vpop.permute.xlu0 %900
        %902 = vrot.lane.b32.xlu0 %v452, 12
        %v903 = vpop.permute.xlu0 %902
        %904 = vrot.lane.b32.xlu0 %v376, 12
        %v905 = vpop.permute.xlu0 %904
        %906 = vrot.lane.b32.xlu0 %v453, 12
        %v907 = vpop.permute.xlu0 %906
        %908 = vrot.lane.b32.xlu0 %v379, 12
        %v909 = vpop.permute.xlu0 %908
        %910 = vrot.lane.b32.xlu0 %v454, 12
        %v911 = vpop.permute.xlu0 %910
        %912 = vrot.lane.b32.xlu0 %v382, 12
        %v913 = vpop.permute.xlu0 %912
        %914 = vrot.lane.b32.xlu0 %v455, 12
        %v915 = vpop.permute.xlu0 %914
        %916 = vrot.lane.b32.xlu0 %v385, 12
        %v917 = vpop.permute.xlu0 %916
        %918 = vrot.lane.b32.xlu0 %v456, 12
        %v919 = vpop.permute.xlu0 %918
        %920 = vrot.lane.b32.xlu0 %v388, 12
        %v921 = vpop.permute.xlu0 %920
        %922 = vrot.lane.b32.xlu0 %v457, 12
        %v923 = vpop.permute.xlu0 %922
        %924 = vrot.lane.b32.xlu0 %v391, 12
        %v925 = vpop.permute.xlu0 %924
        %v959 = vrot.slane %v457, 1
        %v960 = vrot.slane %v391, 1
        %v961 = vsel %vm507, %v959, %v960
        %v962 = vrot.slane %v474, 1
        %v963 = vsel %vm507, %v960, %v962
        %964 = vrot.lane.b32.xlu0 %v515, 16
        %v965 = vpop.permute.xlu0 %964
        %966 = vrot.lane.b32.xlu0 %v517, 16
        %v967 = vpop.permute.xlu0 %966
        %968 = vrot.lane.b32.xlu0 %v520, 16
        %v969 = vpop.permute.xlu0 %968
        %970 = vrot.lane.b32.xlu0 %v522, 16
        %v971 = vpop.permute.xlu0 %970
        %972 = vrot.lane.b32.xlu0 %v525, 16
        %v973 = vpop.permute.xlu0 %972
        %974 = vrot.lane.b32.xlu0 %v527, 16
        %v975 = vpop.permute.xlu0 %974
        %976 = vrot.lane.b32.xlu0 %v530, 16
        %v977 = vpop.permute.xlu0 %976
        %978 = vrot.lane.b32.xlu0 %v532, 16
        %v979 = vpop.permute.xlu0 %978
        %980 = vrot.lane.b32.xlu0 %v535, 16
        %v981 = vpop.permute.xlu0 %980
        %982 = vrot.lane.b32.xlu0 %v537, 16
        %v983 = vpop.permute.xlu0 %982
        %984 = vrot.lane.b32.xlu0 %v540, 16
        %v985 = vpop.permute.xlu0 %984
        %986 = vrot.lane.b32.xlu0 %v542, 16
        %v987 = vpop.permute.xlu0 %986
        %988 = vrot.lane.b32.xlu0 %v545, 16
        %v989 = vpop.permute.xlu0 %988
        %990 = vrot.lane.b32.xlu0 %v547, 16
        %v991 = vpop.permute.xlu0 %990
        %992 = vrot.lane.b32.xlu0 %v550, 16
        %v993 = vpop.permute.xlu0 %992
        %994 = vrot.lane.b32.xlu0 %v552, 16
        %v995 = vpop.permute.xlu0 %994
        %996 = vrot.lane.b32.xlu0 %v555, 16
        %v997 = vpop.permute.xlu0 %996
        %998 = vrot.lane.b32.xlu0 %v557, 16
        %v999 = vpop.permute.xlu0 %998
        %1000 = vrot.lane.b32.xlu0 %v560, 16
        %v1001 = vpop.permute.xlu0 %1000
        %1002 = vrot.lane.b32.xlu0 %v562, 16
        %v1003 = vpop.permute.xlu0 %1002
        %1004 = vrot.lane.b32.xlu0 %v565, 16
        %v1005 = vpop.permute.xlu0 %1004
        %1006 = vrot.lane.b32.xlu0 %v567, 16
        %v1007 = vpop.permute.xlu0 %1006
        %1008 = vrot.lane.b32.xlu0 %v570, 16
        %v1009 = vpop.permute.xlu0 %1008
        %1010 = vrot.lane.b32.xlu0 %v572, 16
        %v1011 = vpop.permute.xlu0 %1010
        %1012 = vrot.lane.b32.xlu0 %v575, 16
        %v1013 = vpop.permute.xlu0 %1012
        %1014 = vrot.lane.b32.xlu0 %v577, 16
        %v1015 = vpop.permute.xlu0 %1014
        %1016 = vrot.lane.b32.xlu0 %v580, 16
        %v1017 = vpop.permute.xlu0 %1016
        %1018 = vrot.lane.b32.xlu0 %v582, 16
        %v1019 = vpop.permute.xlu0 %1018
        %1020 = vrot.lane.b32.xlu0 %v585, 16
        %v1021 = vpop.permute.xlu0 %1020
        %1022 = vrot.lane.b32.xlu0 %v587, 16
        %v1023 = vpop.permute.xlu0 %1022
        %1024 = vrot.lane.b32.xlu0 %v961, 16
        %v1025 = vpop.permute.xlu0 %1024
        %1026 = vrot.lane.b32.xlu0 %v963, 16
        %v1027 = vpop.permute.xlu0 %1026
        %v1060 = vrot.slane %v457, 2
        %v1061 = vrot.slane %v391, 2
        %v1062 = vsel %vm684, %v1060, %v1061
        %v1063 = vrot.slane %v474, 2
        %v1064 = vsel %vm684, %v1061, %v1063
        %1065 = vrot.lane.b32.xlu0 %v692, 20
        %v1066 = vpop.permute.xlu0 %1065
        %1067 = vrot.lane.b32.xlu0 %v694, 20
        %v1068 = vpop.permute.xlu0 %1067
        %1069 = vrot.lane.b32.xlu0 %v697, 20
        %v1070 = vpop.permute.xlu0 %1069
        %1071 = vrot.lane.b32.xlu0 %v699, 20
        %v1072 = vpop.permute.xlu0 %1071
        %1073 = vrot.lane.b32.xlu0 %v702, 20
        %v1074 = vpop.permute.xlu0 %1073
        %1075 = vrot.lane.b32.xlu0 %v704, 20
        %v1076 = vpop.permute.xlu0 %1075
        %1077 = vrot.lane.b32.xlu0 %v707, 20
        %v1078 = vpop.permute.xlu0 %1077
        %1079 = vrot.lane.b32.xlu0 %v709, 20
        %v1080 = vpop.permute.xlu0 %1079
        %1081 = vrot.lane.b32.xlu0 %v712, 20
        %v1082 = vpop.permute.xlu0 %1081
        %1083 = vrot.lane.b32.xlu0 %v714, 20
        %v1084 = vpop.permute.xlu0 %1083
        %1085 = vrot.lane.b32.xlu0 %v717, 20
        %v1086 = vpop.permute.xlu0 %1085
        %1087 = vrot.lane.b32.xlu0 %v719, 20
        %v1088 = vpop.permute.xlu0 %1087
        %1089 = vrot.lane.b32.xlu0 %v722, 20
        %v1090 = vpop.permute.xlu0 %1089
        %1091 = vrot.lane.b32.xlu0 %v724, 20
        %v1092 = vpop.permute.xlu0 %1091
        %1093 = vrot.lane.b32.xlu0 %v727, 20
        %v1094 = vpop.permute.xlu0 %1093
        %1095 = vrot.lane.b32.xlu0 %v729, 20
        %v1096 = vpop.permute.xlu0 %1095
        %1097 = vrot.lane.b32.xlu0 %v732, 20
        %v1098 = vpop.permute.xlu0 %1097
        %1099 = vrot.lane.b32.xlu0 %v734, 20
        %v1100 = vpop.permute.xlu0 %1099
        %1101 = vrot.lane.b32.xlu0 %v737, 20
        %v1102 = vpop.permute.xlu0 %1101
        %1103 = vrot.lane.b32.xlu0 %v739, 20
        %v1104 = vpop.permute.xlu0 %1103
        %1105 = vrot.lane.b32.xlu0 %v742, 20
        %v1106 = vpop.permute.xlu0 %1105
        %1107 = vrot.lane.b32.xlu0 %v744, 20
        %v1108 = vpop.permute.xlu0 %1107
        %1109 = vrot.lane.b32.xlu0 %v747, 20
        %v1110 = vpop.permute.xlu0 %1109
        %1111 = vrot.lane.b32.xlu0 %v749, 20
        %v1112 = vpop.permute.xlu0 %1111
        %1113 = vrot.lane.b32.xlu0 %v752, 20
        %v1114 = vpop.permute.xlu0 %1113
        %1115 = vrot.lane.b32.xlu0 %v754, 20
        %v1116 = vpop.permute.xlu0 %1115
        %1117 = vrot.lane.b32.xlu0 %v757, 20
        %v1118 = vpop.permute.xlu0 %1117
        %1119 = vrot.lane.b32.xlu0 %v759, 20
        %v1120 = vpop.permute.xlu0 %1119
        %1121 = vrot.lane.b32.xlu0 %v762, 20
        %v1122 = vpop.permute.xlu0 %1121
        %1123 = vrot.lane.b32.xlu0 %v764, 20
        %v1124 = vpop.permute.xlu0 %1123
        %1125 = vrot.lane.b32.xlu0 %v1062, 20
        %v1126 = vpop.permute.xlu0 %1125
        %1127 = vrot.lane.b32.xlu0 %v1064, 20
        %v1128 = vpop.permute.xlu0 %1127
        %1161 = vrot.lane.b32.xlu0 %v443, 24
        %v1162 = vpop.permute.xlu0 %1161
        %1163 = vrot.lane.b32.xlu0 %v349, 24
        %v1164 = vpop.permute.xlu0 %1163
        %1165 = vrot.lane.b32.xlu0 %v444, 24
        %v1166 = vpop.permute.xlu0 %1165
        %1167 = vrot.lane.b32.xlu0 %v352, 24
        %v1168 = vpop.permute.xlu0 %1167
        %1169 = vrot.lane.b32.xlu0 %v445, 24
        %v1170 = vpop.permute.xlu0 %1169
        %1171 = vrot.lane.b32.xlu0 %v355, 24
        %v1172 = vpop.permute.xlu0 %1171
        %1173 = vrot.lane.b32.xlu0 %v446, 24
        %v1174 = vpop.permute.xlu0 %1173
        %1175 = vrot.lane.b32.xlu0 %v358, 24
        %v1176 = vpop.permute.xlu0 %1175
        %1177 = vrot.lane.b32.xlu0 %v447, 24
        %v1178 = vpop.permute.xlu0 %1177
        %1179 = vrot.lane.b32.xlu0 %v361, 24
        %v1180 = vpop.permute.xlu0 %1179
        %1181 = vrot.lane.b32.xlu0 %v448, 24
        %v1182 = vpop.permute.xlu0 %1181
        %1183 = vrot.lane.b32.xlu0 %v364, 24
        %v1184 = vpop.permute.xlu0 %1183
        %1185 = vrot.lane.b32.xlu0 %v449, 24
        %v1186 = vpop.permute.xlu0 %1185
        %1187 = vrot.lane.b32.xlu0 %v367, 24
        %v1188 = vpop.permute.xlu0 %1187
        %1189 = vrot.lane.b32.xlu0 %v450, 24
        %v1190 = vpop.permute.xlu0 %1189
        %1191 = vrot.lane.b32.xlu0 %v370, 24
        %v1192 = vpop.permute.xlu0 %1191
        %1193 = vrot.lane.b32.xlu0 %v451, 24
        %v1194 = vpop.permute.xlu0 %1193
        %1195 = vrot.lane.b32.xlu0 %v373, 24
        %v1196 = vpop.permute.xlu0 %1195
        %1197 = vrot.lane.b32.xlu0 %v452, 24
        %v1198 = vpop.permute.xlu0 %1197
        %1199 = vrot.lane.b32.xlu0 %v376, 24
        %v1200 = vpop.permute.xlu0 %1199
        %1201 = vrot.lane.b32.xlu0 %v453, 24
        %v1202 = vpop.permute.xlu0 %1201
        %1203 = vrot.lane.b32.xlu0 %v379, 24
        %v1204 = vpop.permute.xlu0 %1203
        %1205 = vrot.lane.b32.xlu0 %v454, 24
        %v1206 = vpop.permute.xlu0 %1205
        %1207 = vrot.lane.b32.xlu0 %v382, 24
        %v1208 = vpop.permute.xlu0 %1207
        %1209 = vrot.lane.b32.xlu0 %v455, 24
        %v1210 = vpop.permute.xlu0 %1209
        %1211 = vrot.lane.b32.xlu0 %v385, 24
        %v1212 = vpop.permute.xlu0 %1211
        %1213 = vrot.lane.b32.xlu0 %v456, 24
        %v1214 = vpop.permute.xlu0 %1213
        %1215 = vrot.lane.b32.xlu0 %v388, 24
        %v1216 = vpop.permute.xlu0 %1215
        %1217 = vrot.lane.b32.xlu0 %v457, 24
        %v1218 = vpop.permute.xlu0 %1217
        %1219 = vrot.lane.b32.xlu0 %v391, 24
        %v1220 = vpop.permute.xlu0 %1219
        %1221 = vrot.lane.b32.xlu0 %v441, 24
        %v1222 = vpop.permute.xlu0 %1221
        %1223 = vrot.lane.b32.xlu0 %v343, 24
        %v1224 = vpop.permute.xlu0 %1223
        %1257 = vrot.lane.b32.xlu0 %v520, 28
        %v1258 = vpop.permute.xlu0 %1257
        %1259 = vrot.lane.b32.xlu0 %v522, 28
        %v1260 = vpop.permute.xlu0 %1259
        %1261 = vrot.lane.b32.xlu0 %v525, 28
        %v1262 = vpop.permute.xlu0 %1261
        %1263 = vrot.lane.b32.xlu0 %v527, 28
        %v1264 = vpop.permute.xlu0 %1263
        %1265 = vrot.lane.b32.xlu0 %v530, 28
        %v1266 = vpop.permute.xlu0 %1265
        %1267 = vrot.lane.b32.xlu0 %v532, 28
        %v1268 = vpop.permute.xlu0 %1267
        %1269 = vrot.lane.b32.xlu0 %v535, 28
        %v1270 = vpop.permute.xlu0 %1269
        %1271 = vrot.lane.b32.xlu0 %v537, 28
        %v1272 = vpop.permute.xlu0 %1271
        %1273 = vrot.lane.b32.xlu0 %v540, 28
        %v1274 = vpop.permute.xlu0 %1273
        %1275 = vrot.lane.b32.xlu0 %v542, 28
        %v1276 = vpop.permute.xlu0 %1275
        %1277 = vrot.lane.b32.xlu0 %v545, 28
        %v1278 = vpop.permute.xlu0 %1277
        %1279 = vrot.lane.b32.xlu0 %v547, 28
        %v1280 = vpop.permute.xlu0 %1279
        %1281 = vrot.lane.b32.xlu0 %v550, 28
        %v1282 = vpop.permute.xlu0 %1281
        %1283 = vrot.lane.b32.xlu0 %v552, 28
        %v1284 = vpop.permute.xlu0 %1283
        %1285 = vrot.lane.b32.xlu0 %v555, 28
        %v1286 = vpop.permute.xlu0 %1285
        %1287 = vrot.lane.b32.xlu0 %v557, 28
        %v1288 = vpop.permute.xlu0 %1287
        %1289 = vrot.lane.b32.xlu0 %v560, 28
        %v1290 = vpop.permute.xlu0 %1289
        %1291 = vrot.lane.b32.xlu0 %v562, 28
        %v1292 = vpop.permute.xlu0 %1291
        %1293 = vrot.lane.b32.xlu0 %v565, 28
        %v1294 = vpop.permute.xlu0 %1293
        %1295 = vrot.lane.b32.xlu0 %v567, 28
        %v1296 = vpop.permute.xlu0 %1295
        %1297 = vrot.lane.b32.xlu0 %v570, 28
        %v1298 = vpop.permute.xlu0 %1297
        %1299 = vrot.lane.b32.xlu0 %v572, 28
        %v1300 = vpop.permute.xlu0 %1299
        %1301 = vrot.lane.b32.xlu0 %v575, 28
        %v1302 = vpop.permute.xlu0 %1301
        %1303 = vrot.lane.b32.xlu0 %v577, 28
        %v1304 = vpop.permute.xlu0 %1303
        %1305 = vrot.lane.b32.xlu0 %v580, 28
        %v1306 = vpop.permute.xlu0 %1305
        %1307 = vrot.lane.b32.xlu0 %v582, 28
        %v1308 = vpop.permute.xlu0 %1307
        %1309 = vrot.lane.b32.xlu0 %v585, 28
        %v1310 = vpop.permute.xlu0 %1309
        %1311 = vrot.lane.b32.xlu0 %v587, 28
        %v1312 = vpop.permute.xlu0 %1311
        %1313 = vrot.lane.b32.xlu0 %v961, 28
        %v1314 = vpop.permute.xlu0 %1313
        %1315 = vrot.lane.b32.xlu0 %v963, 28
        %v1316 = vpop.permute.xlu0 %1315
        %1317 = vrot.lane.b32.xlu0 %v510, 28
        %v1318 = vpop.permute.xlu0 %1317
        %1319 = vrot.lane.b32.xlu0 %v512, 28
        %v1320 = vpop.permute.xlu0 %1319
        %1353 = vrot.lane.b32.xlu0 %v697, 32
        %v1354 = vpop.permute.xlu0 %1353
        %1355 = vrot.lane.b32.xlu0 %v699, 32
        %v1356 = vpop.permute.xlu0 %1355
        %1357 = vrot.lane.b32.xlu0 %v702, 32
        %v1358 = vpop.permute.xlu0 %1357
        %1359 = vrot.lane.b32.xlu0 %v704, 32
        %v1360 = vpop.permute.xlu0 %1359
        %1361 = vrot.lane.b32.xlu0 %v707, 32
        %v1362 = vpop.permute.xlu0 %1361
        %1363 = vrot.lane.b32.xlu0 %v709, 32
        %v1364 = vpop.permute.xlu0 %1363
        %1365 = vrot.lane.b32.xlu0 %v712, 32
        %v1366 = vpop.permute.xlu0 %1365
        %1367 = vrot.lane.b32.xlu0 %v714, 32
        %v1368 = vpop.permute.xlu0 %1367
        %1369 = vrot.lane.b32.xlu0 %v717, 32
        %v1370 = vpop.permute.xlu0 %1369
        %1371 = vrot.lane.b32.xlu0 %v719, 32
        %v1372 = vpop.permute.xlu0 %1371
        %1373 = vrot.lane.b32.xlu0 %v722, 32
        %v1374 = vpop.permute.xlu0 %1373
        %1375 = vrot.lane.b32.xlu0 %v724, 32
        %v1376 = vpop.permute.xlu0 %1375
        %1377 = vrot.lane.b32.xlu0 %v727, 32
        %v1378 = vpop.permute.xlu0 %1377
        %1379 = vrot.lane.b32.xlu0 %v729, 32
        %v1380 = vpop.permute.xlu0 %1379
        %1381 = vrot.lane.b32.xlu0 %v732, 32
        %v1382 = vpop.permute.xlu0 %1381
        %1383 = vrot.lane.b32.xlu0 %v734, 32
        %v1384 = vpop.permute.xlu0 %1383
        %1385 = vrot.lane.b32.xlu0 %v737, 32
        %v1386 = vpop.permute.xlu0 %1385
        %1387 = vrot.lane.b32.xlu0 %v739, 32
        %v1388 = vpop.permute.xlu0 %1387
        %1389 = vrot.lane.b32.xlu0 %v742, 32
        %v1390 = vpop.permute.xlu0 %1389
        %1391 = vrot.lane.b32.xlu0 %v744, 32
        %v1392 = vpop.permute.xlu0 %1391
        %1393 = vrot.lane.b32.xlu0 %v747, 32
        %v1394 = vpop.permute.xlu0 %1393
        %1395 = vrot.lane.b32.xlu0 %v749, 32
        %v1396 = vpop.permute.xlu0 %1395
        %1397 = vrot.lane.b32.xlu0 %v752, 32
        %v1398 = vpop.permute.xlu0 %1397
        %1399 = vrot.lane.b32.xlu0 %v754, 32
        %v1400 = vpop.permute.xlu0 %1399
        %1401 = vrot.lane.b32.xlu0 %v757, 32
        %v1402 = vpop.permute.xlu0 %1401
        %1403 = vrot.lane.b32.xlu0 %v759, 32
        %v1404 = vpop.permute.xlu0 %1403
        %1405 = vrot.lane.b32.xlu0 %v762, 32
        %v1406 = vpop.permute.xlu0 %1405
        %1407 = vrot.lane.b32.xlu0 %v764, 32
        %v1408 = vpop.permute.xlu0 %1407
        %1409 = vrot.lane.b32.xlu0 %v1062, 32
        %v1410 = vpop.permute.xlu0 %1409
        %1411 = vrot.lane.b32.xlu0 %v1064, 32
        %v1412 = vpop.permute.xlu0 %1411
        %1413 = vrot.lane.b32.xlu0 %v687, 32
        %v1414 = vpop.permute.xlu0 %1413
        %1415 = vrot.lane.b32.xlu0 %v689, 32
        %v1416 = vpop.permute.xlu0 %1415
        %vm1449 = vcmask 31744
        %v1450 = vsel %vm1449, %v441, %v589
        %v1451 = vsel %vm1449, %v343, %v591
        %v1452 = vsel %vm1449, %v442, %v593
        %v1453 = vsel %vm1449, %v346, %v595
        %v1454 = vsel %vm1449, %v443, %v597
        %v1455 = vsel %vm1449, %v349, %v599
        %v1456 = vsel %vm1449, %v444, %v601
        %v1457 = vsel %vm1449, %v352, %v603
        %v1458 = vsel %vm1449, %v445, %v605
        %v1459 = vsel %vm1449, %v355, %v607
        %v1460 = vsel %vm1449, %v446, %v609
        %v1461 = vsel %vm1449, %v358, %v611
        %v1462 = vsel %vm1449, %v447, %v613
        %v1463 = vsel %vm1449, %v361, %v615
        %v1464 = vsel %vm1449, %v448, %v617
        %v1465 = vsel %vm1449, %v364, %v619
        %v1466 = vsel %vm1449, %v449, %v621
        %v1467 = vsel %vm1449, %v367, %v623
        %v1468 = vsel %vm1449, %v450, %v625
        %v1469 = vsel %vm1449, %v370, %v627
        %v1470 = vsel %vm1449, %v451, %v629
        %v1471 = vsel %vm1449, %v373, %v631
        %v1472 = vsel %vm1449, %v452, %v633
        %v1473 = vsel %vm1449, %v376, %v635
        %v1474 = vsel %vm1449, %v453, %v637
        %v1475 = vsel %vm1449, %v379, %v639
        %v1476 = vsel %vm1449, %v454, %v641
        %v1477 = vsel %vm1449, %v382, %v643
        %v1478 = vsel %vm1449, %v455, %v645
        %v1479 = vsel %vm1449, %v385, %v647
        %v1480 = vsel %vm1449, %v456, %v649
        %v1481 = vsel %vm1449, %v388, %v651
        %vm1482 = vcmask 64512
        %v1483 = vsel %vm1482, %v1450, %v766
        %v1484 = vsel %vm1482, %v1451, %v768
        %v1485 = vsel %vm1482, %v1452, %v770
        %v1486 = vsel %vm1482, %v1453, %v772
        %v1487 = vsel %vm1482, %v1454, %v774
        %v1488 = vsel %vm1482, %v1455, %v776
        %v1489 = vsel %vm1482, %v1456, %v778
        %v1490 = vsel %vm1482, %v1457, %v780
        %v1491 = vsel %vm1482, %v1458, %v782
        %v1492 = vsel %vm1482, %v1459, %v784
        %v1493 = vsel %vm1482, %v1460, %v786
        %v1494 = vsel %vm1482, %v1461, %v788
        %v1495 = vsel %vm1482, %v1462, %v790
        %v1496 = vsel %vm1482, %v1463, %v792
        %v1497 = vsel %vm1482, %v1464, %v794
        %v1498 = vsel %vm1482, %v1465, %v796
        %v1499 = vsel %vm1482, %v1466, %v798
        %v1500 = vsel %vm1482, %v1467, %v800
        %v1501 = vsel %vm1482, %v1468, %v802
        %v1502 = vsel %vm1482, %v1469, %v804
        %v1503 = vsel %vm1482, %v1470, %v806
        %v1504 = vsel %vm1482, %v1471, %v808
        %v1505 = vsel %vm1482, %v1472, %v810
        %v1506 = vsel %vm1482, %v1473, %v812
        %v1507 = vsel %vm1482, %v1474, %v814
        %v1508 = vsel %vm1482, %v1475, %v816
        %v1509 = vsel %vm1482, %v1476, %v818
        %v1510 = vsel %vm1482, %v1477, %v820
        %v1511 = vsel %vm1482, %v1478, %v822
        %v1512 = vsel %vm1482, %v1479, %v824
        %v1513 = vsel %vm1482, %v1480, %v826
        %v1514 = vsel %vm1482, %v1481, %v828
        %vm1515 = vcmask 97280
        %v1516 = vsel %vm1515, %v1483, %v863
        %v1517 = vsel %vm1515, %v1484, %v865
        %v1518 = vsel %vm1515, %v1485, %v867
        %v1519 = vsel %vm1515, %v1486, %v869
        %v1520 = vsel %vm1515, %v1487, %v871
        %v1521 = vsel %vm1515, %v1488, %v873
        %v1522 = vsel %vm1515, %v1489, %v875
        %v1523 = vsel %vm1515, %v1490, %v877
        %v1524 = vsel %vm1515, %v1491, %v879
        %v1525 = vsel %vm1515, %v1492, %v881
        %v1526 = vsel %vm1515, %v1493, %v883
        %v1527 = vsel %vm1515, %v1494, %v885
        %v1528 = vsel %vm1515, %v1495, %v887
        %v1529 = vsel %vm1515, %v1496, %v889
        %v1530 = vsel %vm1515, %v1497, %v891
        %v1531 = vsel %vm1515, %v1498, %v893
        %v1532 = vsel %vm1515, %v1499, %v895
        %v1533 = vsel %vm1515, %v1500, %v897
        %v1534 = vsel %vm1515, %v1501, %v899
        %v1535 = vsel %vm1515, %v1502, %v901
        %v1536 = vsel %vm1515, %v1503, %v903
        %v1537 = vsel %vm1515, %v1504, %v905
        %v1538 = vsel %vm1515, %v1505, %v907
        %v1539 = vsel %vm1515, %v1506, %v909
        %v1540 = vsel %vm1515, %v1507, %v911
        %v1541 = vsel %vm1515, %v1508, %v913
        %v1542 = vsel %vm1515, %v1509, %v915
        %v1543 = vsel %vm1515, %v1510, %v917
        %v1544 = vsel %vm1515, %v1511, %v919
        %v1545 = vsel %vm1515, %v1512, %v921
        %v1546 = vsel %vm1515, %v1513, %v923
        %v1547 = vsel %vm1515, %v1514, %v925
        %vm1548 = vcmask 130048
        %v1549 = vsel %vm1548, %v1516, %v965
        %v1550 = vsel %vm1548, %v1517, %v967
        %v1551 = vsel %vm1548, %v1518, %v969
        %v1552 = vsel %vm1548, %v1519, %v971
        %v1553 = vsel %vm1548, %v1520, %v973
        %v1554 = vsel %vm1548, %v1521, %v975
        %v1555 = vsel %vm1548, %v1522, %v977
        %v1556 = vsel %vm1548, %v1523, %v979
        %v1557 = vsel %vm1548, %v1524, %v981
        %v1558 = vsel %vm1548, %v1525, %v983
        %v1559 = vsel %vm1548, %v1526, %v985
        %v1560 = vsel %vm1548, %v1527, %v987
        %v1561 = vsel %vm1548, %v1528, %v989
        %v1562 = vsel %vm1548, %v1529, %v991
        %v1563 = vsel %vm1548, %v1530, %v993
        %v1564 = vsel %vm1548, %v1531, %v995
        %v1565 = vsel %vm1548, %v1532, %v997
        %v1566 = vsel %vm1548, %v1533, %v999
        %v1567 = vsel %vm1548, %v1534, %v1001
        %v1568 = vsel %vm1548, %v1535, %v1003
        %v1569 = vsel %vm1548, %v1536, %v1005
        %v1570 = vsel %vm1548, %v1537, %v1007
        %v1571 = vsel %vm1548, %v1538, %v1009
        %v1572 = vsel %vm1548, %v1539, %v1011
        %v1573 = vsel %vm1548, %v1540, %v1013
        %v1574 = vsel %vm1548, %v1541, %v1015
        %v1575 = vsel %vm1548, %v1542, %v1017
        %v1576 = vsel %vm1548, %v1543, %v1019
        %v1577 = vsel %vm1548, %v1544, %v1021
        %v1578 = vsel %vm1548, %v1545, %v1023
        %v1579 = vsel %vm1548, %v1546, %v1025
        %v1580 = vsel %vm1548, %v1547, %v1027
        %vm1581 = vcmask 162816
        %v1582 = vsel %vm1581, %v1549, %v1066
        %v1583 = vsel %vm1581, %v1550, %v1068
        %v1584 = vsel %vm1581, %v1551, %v1070
        %v1585 = vsel %vm1581, %v1552, %v1072
        %v1586 = vsel %vm1581, %v1553, %v1074
        %v1587 = vsel %vm1581, %v1554, %v1076
        %v1588 = vsel %vm1581, %v1555, %v1078
        %v1589 = vsel %vm1581, %v1556, %v1080
        %v1590 = vsel %vm1581, %v1557, %v1082
        %v1591 = vsel %vm1581, %v1558, %v1084
        %v1592 = vsel %vm1581, %v1559, %v1086
        %v1593 = vsel %vm1581, %v1560, %v1088
        %v1594 = vsel %vm1581, %v1561, %v1090
        %v1595 = vsel %vm1581, %v1562, %v1092
        %v1596 = vsel %vm1581, %v1563, %v1094
        %v1597 = vsel %vm1581, %v1564, %v1096
        %v1598 = vsel %vm1581, %v1565, %v1098
        %v1599 = vsel %vm1581, %v1566, %v1100
        %v1600 = vsel %vm1581, %v1567, %v1102
        %v1601 = vsel %vm1581, %v1568, %v1104
        %v1602 = vsel %vm1581, %v1569, %v1106
        %v1603 = vsel %vm1581, %v1570, %v1108
        %v1604 = vsel %vm1581, %v1571, %v1110
        %v1605 = vsel %vm1581, %v1572, %v1112
        %v1606 = vsel %vm1581, %v1573, %v1114
        %v1607 = vsel %vm1581, %v1574, %v1116
        %v1608 = vsel %vm1581, %v1575, %v1118
        %v1609 = vsel %vm1581, %v1576, %v1120
        %v1610 = vsel %vm1581, %v1577, %v1122
        %v1611 = vsel %vm1581, %v1578, %v1124
        %v1612 = vsel %vm1581, %v1579, %v1126
        %v1613 = vsel %vm1581, %v1580, %v1128
        %vm1614 = vcmask 195584
        %v1615 = vsel %vm1614, %v1582, %v1162
        %v1616 = vsel %vm1614, %v1583, %v1164
        %v1617 = vsel %vm1614, %v1584, %v1166
        %v1618 = vsel %vm1614, %v1585, %v1168
        %v1619 = vsel %vm1614, %v1586, %v1170
        %v1620 = vsel %vm1614, %v1587, %v1172
        %v1621 = vsel %vm1614, %v1588, %v1174
        %v1622 = vsel %vm1614, %v1589, %v1176
        %v1623 = vsel %vm1614, %v1590, %v1178
        %v1624 = vsel %vm1614, %v1591, %v1180
        %v1625 = vsel %vm1614, %v1592, %v1182
        %v1626 = vsel %vm1614, %v1593, %v1184
        %v1627 = vsel %vm1614, %v1594, %v1186
        %v1628 = vsel %vm1614, %v1595, %v1188
        %v1629 = vsel %vm1614, %v1596, %v1190
        %v1630 = vsel %vm1614, %v1597, %v1192
        %v1631 = vsel %vm1614, %v1598, %v1194
        %v1632 = vsel %vm1614, %v1599, %v1196
        %v1633 = vsel %vm1614, %v1600, %v1198
        %v1634 = vsel %vm1614, %v1601, %v1200
        %v1635 = vsel %vm1614, %v1602, %v1202
        %v1636 = vsel %vm1614, %v1603, %v1204
        %v1637 = vsel %vm1614, %v1604, %v1206
        %v1638 = vsel %vm1614, %v1605, %v1208
        %v1639 = vsel %vm1614, %v1606, %v1210
        %v1640 = vsel %vm1614, %v1607, %v1212
        %v1641 = vsel %vm1614, %v1608, %v1214
        %v1642 = vsel %vm1614, %v1609, %v1216
        %v1643 = vsel %vm1614, %v1610, %v1218
        %v1644 = vsel %vm1614, %v1611, %v1220
        %v1645 = vsel %vm1614, %v1612, %v1222
        %v1646 = vsel %vm1614, %v1613, %v1224
        %vm1647 = vcmask 228352
        %v1648 = vsel %vm1647, %v1615, %v1258
        %v1649 = vsel %vm1647, %v1616, %v1260
        %v1650 = vsel %vm1647, %v1617, %v1262
        %v1651 = vsel %vm1647, %v1618, %v1264
        %v1652 = vsel %vm1647, %v1619, %v1266
        %v1653 = vsel %vm1647, %v1620, %v1268
        %v1654 = vsel %vm1647, %v1621, %v1270
        %v1655 = vsel %vm1647, %v1622, %v1272
        %v1656 = vsel %vm1647, %v1623, %v1274
        %v1657 = vsel %vm1647, %v1624, %v1276
        %v1658 = vsel %vm1647, %v1625, %v1278
        %v1659 = vsel %vm1647, %v1626, %v1280
        %v1660 = vsel %vm1647, %v1627, %v1282
        %v1661 = vsel %vm1647, %v1628, %v1284
        %v1662 = vsel %vm1647, %v1629, %v1286
        %v1663 = vsel %vm1647, %v1630, %v1288
        %v1664 = vsel %vm1647, %v1631, %v1290
        %v1665 = vsel %vm1647, %v1632, %v1292
        %v1666 = vsel %vm1647, %v1633, %v1294
        %v1667 = vsel %vm1647, %v1634, %v1296
        %v1668 = vsel %vm1647, %v1635, %v1298
        %v1669 = vsel %vm1647, %v1636, %v1300
        %v1670 = vsel %vm1647, %v1637, %v1302
        %v1671 = vsel %vm1647, %v1638, %v1304
        %v1672 = vsel %vm1647, %v1639, %v1306
        %v1673 = vsel %vm1647, %v1640, %v1308
        %v1674 = vsel %vm1647, %v1641, %v1310
        %v1675 = vsel %vm1647, %v1642, %v1312
        %v1676 = vsel %vm1647, %v1643, %v1314
        %v1677 = vsel %vm1647, %v1644, %v1316
        %v1678 = vsel %vm1647, %v1645, %v1318
        %v1679 = vsel %vm1647, %v1646, %v1320
        %vm1680 = vcmask 261120
        %v1681 = vsel %vm1680, %v1648, %v1354
        %v1682 = vsel %vm1680, %v1649, %v1356
        %v1683 = vsel %vm1680, %v1650, %v1358
        %v1684 = vsel %vm1680, %v1651, %v1360
        %v1685 = vsel %vm1680, %v1652, %v1362
        %v1686 = vsel %vm1680, %v1653, %v1364
        %v1687 = vsel %vm1680, %v1654, %v1366
        %v1688 = vsel %vm1680, %v1655, %v1368
        %v1689 = vsel %vm1680, %v1656, %v1370
        %v1690 = vsel %vm1680, %v1657, %v1372
        %v1691 = vsel %vm1680, %v1658, %v1374
        %v1692 = vsel %vm1680, %v1659, %v1376
        %v1693 = vsel %vm1680, %v1660, %v1378
        %v1694 = vsel %vm1680, %v1661, %v1380
        %v1695 = vsel %vm1680, %v1662, %v1382
        %v1696 = vsel %vm1680, %v1663, %v1384
        %v1697 = vsel %vm1680, %v1664, %v1386
        %v1698 = vsel %vm1680, %v1665, %v1388
        %v1699 = vsel %vm1680, %v1666, %v1390
        %v1700 = vsel %vm1680, %v1667, %v1392
        %v1701 = vsel %vm1680, %v1668, %v1394
        %v1702 = vsel %vm1680, %v1669, %v1396
        %v1703 = vsel %vm1680, %v1670, %v1398
        %v1704 = vsel %vm1680, %v1671, %v1400
        %v1705 = vsel %vm1680, %v1672, %v1402
        %v1706 = vsel %vm1680, %v1673, %v1404
        %v1707 = vsel %vm1680, %v1674, %v1406
        %v1708 = vsel %vm1680, %v1675, %v1408
        %v1709 = vsel %vm1680, %v1676, %v1410
        %v1710 = vsel %vm1680, %v1677, %v1412
        %v1711 = vsel %vm1680, %v1678, %v1414
        %v1712 = vsel %vm1680, %v1679, %v1416
        %v1713 = vld [vmem:[%s1] sm:$0xff]
        %v1714 = vld [vmem:[%s1 + $0x8] sm:$0xff]
        %v1715 = vld [vmem:[%s1 + $0x10] sm:$0xff]
        %v1716 = vld [vmem:[%s1 + $0x18] sm:$0xff]
        %v1717 = vld [vmem:[%s1 + $0x20] sm:$0xf]
        %v1718 = vld [vmem:[%s2] sm:$0x1]
        %v1720 = vlaneseq
        %v1721 = vshrl.u32 %v1720, 7
        %v1722 = vsub.s32 0, %v1721
        %v1723 = vrot.slane %v1718, %v1722
        %vm1725 = vcmask 293888
        %v1727 = vsel %vm1725, %v1681, 0
        %v1730 = vsel %vm1725, %v1682, 0
        %v1733 = vsel %vm1725, %v1683, 0
        %v1736 = vsel %vm1725, %v1684, 0
        %v1739 = vsel %vm1725, %v1685, 0
        %v1742 = vsel %vm1725, %v1686, 0
        %v1745 = vsel %vm1725, %v1687, 0
        %v1748 = vsel %vm1725, %v1688, 0
        %v1751 = vsel %vm1725, %v1689, 0
        %v1754 = vsel %vm1725, %v1690, 0
        %v1757 = vsel %vm1725, %v1691, 0
        %v1760 = vsel %vm1725, %v1692, 0
        %v1763 = vsel %vm1725, %v1693, 0
        %v1766 = vsel %vm1725, %v1694, 0
        %v1769 = vsel %vm1725, %v1695, 0
        %v1772 = vsel %vm1725, %v1696, 0
        %v1775 = vsel %vm1725, %v1697, 0
        %v1778 = vsel %vm1725, %v1698, 0
        %v1781 = vsel %vm1725, %v1699, 0
        %v1784 = vsel %vm1725, %v1700, 0
        %v1787 = vsel %vm1725, %v1701, 0
        %v1790 = vsel %vm1725, %v1702, 0
        %v1793 = vsel %vm1725, %v1703, 0
        %v1796 = vsel %vm1725, %v1704, 0
        %v1799 = vsel %vm1725, %v1705, 0
        %v1802 = vsel %vm1725, %v1706, 0
        %v1805 = vsel %vm1725, %v1707, 0
        %v1808 = vsel %vm1725, %v1708, 0
        %v1811 = vsel %vm1725, %v1709, 0
        %v1814 = vsel %vm1725, %v1710, 0
        %v1817 = vsel %vm1725, %v1711, 0
        %v1820 = vsel %vm1725, %v1712, 0
        %vm1822 = vcmask 1043456
        %v1824 = vsel %vm1822, %v1717, 0
        %1826 = vmatprep.subr.mxu0 0.0
        %1827 = vmatpush1.msra.mxu0 %v1713
        %1828 = vmatprep.subr.mxu0 0.0
        %1829 = vmatpush1.msra.mxu0 %v1714
        %1830 = vmatprep.subr.mxu0 0.0
        %1831 = vmatpush1.msra.mxu0 %v1715
        %1832 = vmatprep.subr.mxu0 0.0
        %1833 = vmatpush1.msra.mxu0 %v1716
        %1834 = vmatprep.subr.mxu0 0.0
        %1835 = vmatpush1.msra.mxu0 %v1824
        %1836 = vmatprep.subr.mxu0 0.0
        %1837 = vmatpush1.msra.mxu0 0.0
        %1838 = vmatprep.subr.mxu0 0.0
        %1839 = vmatpush1.msra.mxu0 0.0
        %1840 = vmatprep.subr.mxu0 0.0
        %1841 = vmatpush1.msra.mxu0 0.0
        %1842 = vmatprep.subr.mxu0 0.0
        %1843 = vmatpush1.msra.mxu0 0.0
        %1844 = vmatprep.subr.mxu0 0.0
        %1845 = vmatpush1.msra.mxu0 0.0
        %1846 = vmatprep.subr.mxu0 0.0
        %1847 = vmatpush1.msra.mxu0 0.0
        %1848 = vmatprep.subr.mxu0 0.0
        %1849 = vmatpush1.msra.mxu0 0.0
        %1850 = vmatprep.subr.mxu0 0.0
        %1851 = vmatpush1.msra.mxu0 0.0
        %1852 = vmatprep.subr.mxu0 0.0
        %1853 = vmatpush1.msra.mxu0 0.0
        %1854 = vmatprep.subr.mxu0 0.0
        %1855 = vmatpush1.msra.mxu0 0.0
        %1856 = vmatprep.subr.mxu0 0.0
        %1857 = vmatpush1.msra.mxu0 0.0
        %1858 = vmatprep.subr.mxu0 0.0
        %1859 = vmatpush1.msra.mxu0 0.0
        %1860 = vmatprep.subr.mxu0 0.0
        %1861 = vmatpush1.msra.mxu0 0.0
        %1862 = vmatprep.subr.mxu0 0.0
        %1863 = vmatpush1.msra.mxu0 0.0
        %1864 = vmatprep.subr.mxu0 0.0
        %1865 = vmatpush1.msra.mxu0 0.0
        %1866 = vmatprep.subr.mxu0 0.0
        %1867 = vmatpush1.msra.mxu0 0.0
        %1868 = vmatprep.subr.mxu0 0.0
        %1869 = vmatpush1.msra.mxu0 0.0
        %1870 = vmatprep.subr.mxu0 0.0
        %1871 = vmatpush1.msra.mxu0 0.0
        %1872 = vmatprep.subr.mxu0 0.0
        %1873 = vmatpush1.msra.mxu0 0.0
        %1874 = vmatprep.subr.mxu0 0.0
        %1875 = vmatpush1.msra.mxu0 0.0
        %1876 = vmatprep.subr.mxu0 0.0
        %1877 = vmatpush1.msra.mxu0 0.0
        %1878 = vmatprep.subr.mxu0 0.0
        %1879 = vmatpush1.msra.mxu0 0.0
        %1880 = vmatprep.subr.mxu0 0.0
        %1881 = vmatpush1.msra.mxu0 0.0
        %1882 = vmatprep.subr.mxu0 0.0
        %1883 = vmatpush1.msra.mxu0 0.0
        %1884 = vmatprep.subr.mxu0 0.0
        %1885 = vmatpush1.msra.mxu0 0.0
        %1886 = vmatprep.subr.mxu0 0.0
        %1887 = vmatpush1.msra.mxu0 0.0
        %1888 = vmatprep.subr.mxu0 0.0
        %1889 = vmatpush1.msra.mxu0 0.0
        %1890 = vmatprep.mubr.f32.mxu0 0.0
        %1891 = vmatmul.mubr.f32.gmra.mrb[0].mxu0 %v1727
        %v1892 = vpop.f32.mrb[0].mxu0
        %v1893 = vadd.f32 %v1723, %v1892
        %v1894 = vpop.f32.mrb[0].mxu0
        %1895 = vmatprep.mubr.f32.mxu0 0.0
        %1896 = vmatmul.mubr.f32.gmra.mrb[0].mxu0 %v1730
        %v1897 = vpop.f32.mrb[0].mxu0
        %v1898 = vadd.f32 %v1723, %v1897
        %v1899 = vpop.f32.mrb[0].mxu0
        %1900 = vmatprep.mubr.f32.mxu0 0.0
        %1901 = vmatmul.mubr.f32.gmra.mrb[0].mxu0 %v1733
        %v1902 = vpop.f32.mrb[0].mxu0
        %v1903 = vadd.f32 %v1723, %v1902
        %v1904 = vpop.f32.mrb[0].mxu0
        %1905 = vmatprep.mubr.f32.mxu0 0.0
        %1906 = vmatmul.mubr.f32.gmra.mrb[0].mxu0 %v1736
        %v1907 = vpop.f32.mrb[0].mxu0
        %v1908 = vadd.f32 %v1723, %v1907
        %v1909 = vpop.f32.mrb[0].mxu0
        %1910 = vmatprep.mubr.f32.mxu0 0.0
        %1911 = vmatmul.mubr.f32.gmra.mrb[0].mxu0 %v1739
        %v1912 = vpop.f32.mrb[0].mxu0
        %v1913 = vadd.f32 %v1723, %v1912
        %v1914 = vpop.f32.mrb[0].mxu0
        %1915 = vmatprep.mubr.f32.mxu0 0.0
        %1916 = vmatmul.mubr.f32.gmra.mrb[0].mxu0 %v1742
        %v1917 = vpop.f32.mrb[0].mxu0
        %v1918 = vadd.f32 %v1723, %v1917
        %v1919 = vpop.f32.mrb[0].mxu0
        %1920 = vmatprep.mubr.f32.mxu0 0.0
        %1921 = vmatmul.mubr.f32.gmra.mrb[0].mxu0 %v1745
        %v1922 = vpop.f32.mrb[0].mxu0
        %v1923 = vadd.f32 %v1723, %v1922
        %v1924 = vpop.f32.mrb[0].mxu0
        %1925 = vmatprep.mubr.f32.mxu0 0.0
        %1926 = vmatmul.mubr.f32.gmra.mrb[0].mxu0 %v1748
        %v1927 = vpop.f32.mrb[0].mxu0
        %v1928 = vadd.f32 %v1723, %v1927
        %v1929 = vpop.f32.mrb[0].mxu0
        %1930 = vmatprep.mubr.f32.mxu0 0.0
        %1931 = vmatmul.mubr.f32.gmra.mrb[0].mxu0 %v1751
        %v1932 = vpop.f32.mrb[0].mxu0
        %v1933 = vadd.f32 %v1723, %v1932
        %v1934 = vpop.f32.mrb[0].mxu0
        %1935 = vmatprep.mubr.f32.mxu0 0.0
        %1936 = vmatmul.mubr.f32.gmra.mrb[0].mxu0 %v1754
        %v1937 = vpop.f32.mrb[0].mxu0
        %v1938 = vadd.f32 %v1723, %v1937
        %v1939 = vpop.f32.mrb[0].mxu0
        %1940 = vmatprep.mubr.f32.mxu0 0.0
        %1941 = vmatmul.mubr.f32.gmra.mrb[0].mxu0 %v1757
        %v1942 = vpop.f32.mrb[0].mxu0
        %v1943 = vadd.f32 %v1723, %v1942
        %v1944 = vpop.f32.mrb[0].mxu0
        %1945 = vmatprep.mubr.f32.mxu0 0.0
        %1946 = vmatmul.mubr.f32.gmra.mrb[0].mxu0 %v1760
        %v1947 = vpop.f32.mrb[0].mxu0
        %v1948 = vadd.f32 %v1723, %v1947
        %v1949 = vpop.f32.mrb[0].mxu0
        %1950 = vmatprep.mubr.f32.mxu0 0.0
        %1951 = vmatmul.mubr.f32.gmra.mrb[0].mxu0 %v1763
        %v1952 = vpop.f32.mrb[0].mxu0
        %v1953 = vadd.f32 %v1723, %v1952
        %v1954 = vpop.f32.mrb[0].mxu0
        %1955 = vmatprep.mubr.f32.mxu0 0.0
        %1956 = vmatmul.mubr.f32.gmra.mrb[0].mxu0 %v1766
        %v1957 = vpop.f32.mrb[0].mxu0
        %v1958 = vadd.f32 %v1723, %v1957
        %v1959 = vpop.f32.mrb[0].mxu0
        %1960 = vmatprep.mubr.f32.mxu0 0.0
        %1961 = vmatmul.mubr.f32.gmra.mrb[0].mxu0 %v1769
        %v1962 = vpop.f32.mrb[0].mxu0
        %v1963 = vadd.f32 %v1723, %v1962
        %v1964 = vpop.f32.mrb[0].mxu0
        %1965 = vmatprep.mubr.f32.mxu0 0.0
        %1966 = vmatmul.mubr.f32.gmra.mrb[0].mxu0 %v1772
        %v1967 = vpop.f32.mrb[0].mxu0
        %v1968 = vadd.f32 %v1723, %v1967
        %v1969 = vpop.f32.mrb[0].mxu0
        %1970 = vmatprep.mubr.f32.mxu0 0.0
        %1971 = vmatmul.mubr.f32.gmra.mrb[0].mxu0 %v1775
        %v1972 = vpop.f32.mrb[0].mxu0
        %v1973 = vadd.f32 %v1723, %v1972
        %v1974 = vpop.f32.mrb[0].mxu0
        %1975 = vmatprep.mubr.f32.mxu0 0.0
        %1976 = vmatmul.mubr.f32.gmra.mrb[0].mxu0 %v1778
        %v1977 = vpop.f32.mrb[0].mxu0
        %v1978 = vadd.f32 %v1723, %v1977
        %v1979 = vpop.f32.mrb[0].mxu0
        %1980 = vmatprep.mubr.f32.mxu0 0.0
        %1981 = vmatmul.mubr.f32.gmra.mrb[0].mxu0 %v1781
        %v1982 = vpop.f32.mrb[0].mxu0
        %v1983 = vadd.f32 %v1723, %v1982
        %v1984 = vpop.f32.mrb[0].mxu0
        %1985 = vmatprep.mubr.f32.mxu0 0.0
        %1986 = vmatmul.mubr.f32.gmra.mrb[0].mxu0 %v1784
        %v1987 = vpop.f32.mrb[0].mxu0
        %v1988 = vadd.f32 %v1723, %v1987
        %v1989 = vpop.f32.mrb[0].mxu0
        %1990 = vmatprep.mubr.f32.mxu0 0.0
        %1991 = vmatmul.mubr.f32.gmra.mrb[0].mxu0 %v1787
        %v1992 = vpop.f32.mrb[0].mxu0
        %v1993 = vadd.f32 %v1723, %v1992
        %v1994 = vpop.f32.mrb[0].mxu0
        %1995 = vmatprep.mubr.f32.mxu0 0.0
        %1996 = vmatmul.mubr.f32.gmra.mrb[0].mxu0 %v1790
        %v1997 = vpop.f32.mrb[0].mxu0
        %v1998 = vadd.f32 %v1723, %v1997
        %v1999 = vpop.f32.mrb[0].mxu0
        %2000 = vmatprep.mubr.f32.mxu0 0.0
        %2001 = vmatmul.mubr.f32.gmra.mrb[0].mxu0 %v1793
        %v2002 = vpop.f32.mrb[0].mxu0
        %v2003 = vadd.f32 %v1723, %v2002
        %v2004 = vpop.f32.mrb[0].mxu0
        %2005 = vmatprep.mubr.f32.mxu0 0.0
        %2006 = vmatmul.mubr.f32.gmra.mrb[0].mxu0 %v1796
        %v2007 = vpop.f32.mrb[0].mxu0
        %v2008 = vadd.f32 %v1723, %v2007
        %v2009 = vpop.f32.mrb[0].mxu0
        %2010 = vmatprep.mubr.f32.mxu0 0.0
        %2011 = vmatmul.mubr.f32.gmra.mrb[0].mxu0 %v1799
        %v2012 = vpop.f32.mrb[0].mxu0
        %v2013 = vadd.f32 %v1723, %v2012
        %v2014 = vpop.f32.mrb[0].mxu0
        %2015 = vmatprep.mubr.f32.mxu0 0.0
        %2016 = vmatmul.mubr.f32.gmra.mrb[0].mxu0 %v1802
        %v2017 = vpop.f32.mrb[0].mxu0
        %v2018 = vadd.f32 %v1723, %v2017
        %v2019 = vpop.f32.mrb[0].mxu0
        %2020 = vmatprep.mubr.f32.mxu0 0.0
        %2021 = vmatmul.mubr.f32.gmra.mrb[0].mxu0 %v1805
        %v2022 = vpop.f32.mrb[0].mxu0
        %v2023 = vadd.f32 %v1723, %v2022
        %v2024 = vpop.f32.mrb[0].mxu0
        %2025 = vmatprep.mubr.f32.mxu0 0.0
        %2026 = vmatmul.mubr.f32.gmra.mrb[0].mxu0 %v1808
        %v2027 = vpop.f32.mrb[0].mxu0
        %v2028 = vadd.f32 %v1723, %v2027
        %v2029 = vpop.f32.mrb[0].mxu0
        %2030 = vmatprep.mubr.f32.mxu0 0.0
        %2031 = vmatmul.mubr.f32.gmra.mrb[0].mxu0 %v1811
        %v2032 = vpop.f32.mrb[0].mxu0
        %v2033 = vadd.f32 %v1723, %v2032
        %v2034 = vpop.f32.mrb[0].mxu0
        %2035 = vmatprep.mubr.f32.mxu0 0.0
        %2036 = vmatmul.mubr.f32.gmra.mrb[0].mxu0 %v1814
        %v2037 = vpop.f32.mrb[0].mxu0
        %v2038 = vadd.f32 %v1723, %v2037
        %v2039 = vpop.f32.mrb[0].mxu0
        %2040 = vmatprep.mubr.f32.mxu0 0.0
        %2041 = vmatmul.mubr.f32.gmra.mrb[0].mxu0 %v1817
        %v2042 = vpop.f32.mrb[0].mxu0
        %v2043 = vadd.f32 %v1723, %v2042
        %v2044 = vpop.f32.mrb[0].mxu0
        %2045 = vmatprep.mubr.f32.mxu0 0.0
        %2046 = vmatmul.mubr.f32.gmra.mrb[0].mxu0 %v1820
        %v2047 = vpop.f32.mrb[0].mxu0
        %v2048 = vadd.f32 %v1723, %v2047
        %v2049 = vpop.f32.mrb[0].mxu0
        %2050 = vdwg.mxu0
        %v2051 = vxor.u32 %v1893, 2147483648
        %v2052 = vxor.u32 %v1898, 2147483648
        %v2053 = vxor.u32 %v1903, 2147483648
        %v2054 = vxor.u32 %v1908, 2147483648
        %v2055 = vxor.u32 %v1913, 2147483648
        %v2056 = vxor.u32 %v1918, 2147483648
        %v2057 = vxor.u32 %v1923, 2147483648
        %v2058 = vxor.u32 %v1928, 2147483648
        %v2059 = vxor.u32 %v1933, 2147483648
        %v2060 = vxor.u32 %v1938, 2147483648
        %v2061 = vxor.u32 %v1943, 2147483648
        %v2062 = vxor.u32 %v1948, 2147483648
        %v2063 = vxor.u32 %v1953, 2147483648
        %v2064 = vxor.u32 %v1958, 2147483648
        %v2065 = vxor.u32 %v1963, 2147483648
        %v2066 = vxor.u32 %v1968, 2147483648
        %v2067 = vxor.u32 %v1973, 2147483648
        %v2068 = vxor.u32 %v1978, 2147483648
        %v2069 = vxor.u32 %v1983, 2147483648
        %v2070 = vxor.u32 %v1988, 2147483648
        %v2071 = vxor.u32 %v1993, 2147483648
        %v2072 = vxor.u32 %v1998, 2147483648
        %v2073 = vxor.u32 %v2003, 2147483648
        %v2074 = vxor.u32 %v2008, 2147483648
        %v2075 = vxor.u32 %v2013, 2147483648
        %v2076 = vxor.u32 %v2018, 2147483648
        %v2077 = vxor.u32 %v2023, 2147483648
        %v2078 = vxor.u32 %v2028, 2147483648
        %v2079 = vxor.u32 %v2033, 2147483648
        %v2080 = vxor.u32 %v2038, 2147483648
        %v2081 = vxor.u32 %v2043, 2147483648
        %v2082 = vxor.u32 %v2048, 2147483648
        %v2083 = vmul.f32 %v2051, 1.442695
        %v2084 = vpow.pop %v2083
        %v2085 = vmul.f32 %v2052, 1.442695
        %v2086 = vpow.pop %v2085
        %v2087 = vmul.f32 %v2053, 1.442695
        %v2088 = vpow.pop %v2087
        %v2089 = vmul.f32 %v2054, 1.442695
        %v2090 = vpow.pop %v2089
        %v2091 = vmul.f32 %v2055, 1.442695
        %v2092 = vpow.pop %v2091
        %v2093 = vmul.f32 %v2056, 1.442695
        %v2094 = vpow.pop %v2093
        %v2095 = vmul.f32 %v2057, 1.442695
        %v2096 = vpow.pop %v2095
        %v2097 = vmul.f32 %v2058, 1.442695
        %v2098 = vpow.pop %v2097
        %v2099 = vmul.f32 %v2059, 1.442695
        %v2100 = vpow.pop %v2099
        %v2101 = vmul.f32 %v2060, 1.442695
        %v2102 = vpow.pop %v2101
        %v2103 = vmul.f32 %v2061, 1.442695
        %v2104 = vpow.pop %v2103
        %v2105 = vmul.f32 %v2062, 1.442695
        %v2106 = vpow.pop %v2105
        %v2107 = vmul.f32 %v2063, 1.442695
        %v2108 = vpow.pop %v2107
        %v2109 = vmul.f32 %v2064, 1.442695
        %v2110 = vpow.pop %v2109
        %v2111 = vmul.f32 %v2065, 1.442695
        %v2112 = vpow.pop %v2111
        %v2113 = vmul.f32 %v2066, 1.442695
        %v2114 = vpow.pop %v2113
        %v2115 = vmul.f32 %v2067, 1.442695
        %v2116 = vpow.pop %v2115
        %v2117 = vmul.f32 %v2068, 1.442695
        %v2118 = vpow.pop %v2117
        %v2119 = vmul.f32 %v2069, 1.442695
        %v2120 = vpow.pop %v2119
        %v2121 = vmul.f32 %v2070, 1.442695
        %v2122 = vpow.pop %v2121
        %v2123 = vmul.f32 %v2071, 1.442695
        %v2124 = vpow.pop %v2123
        %v2125 = vmul.f32 %v2072, 1.442695
        %v2126 = vpow.pop %v2125
        %v2127 = vmul.f32 %v2073, 1.442695
        %v2128 = vpow.pop %v2127
        %v2129 = vmul.f32 %v2074, 1.442695
        %v2130 = vpow.pop %v2129
        %v2131 = vmul.f32 %v2075, 1.442695
        %v2132 = vpow.pop %v2131
        %v2133 = vmul.f32 %v2076, 1.442695
        %v2134 = vpow.pop %v2133
        %v2135 = vmul.f32 %v2077, 1.442695
        %v2136 = vpow.pop %v2135
        %v2137 = vmul.f32 %v2078, 1.442695
        %v2138 = vpow.pop %v2137
        %v2139 = vmul.f32 %v2079, 1.442695
        %v2140 = vpow.pop %v2139
        %v2141 = vmul.f32 %v2080, 1.442695
        %v2142 = vpow.pop %v2141
        %v2143 = vmul.f32 %v2081, 1.442695
        %v2144 = vpow.pop %v2143
        %v2145 = vmul.f32 %v2082, 1.442695
        %v2146 = vpow.pop %v2145
        %v2147 = vadd.f32 %v2084, 1.0
        %v2148 = vadd.f32 %v2086, 1.0
        %v2149 = vadd.f32 %v2088, 1.0
        %v2150 = vadd.f32 %v2090, 1.0
        %v2151 = vadd.f32 %v2092, 1.0
        %v2152 = vadd.f32 %v2094, 1.0
        %v2153 = vadd.f32 %v2096, 1.0
        %v2154 = vadd.f32 %v2098, 1.0
        %v2155 = vadd.f32 %v2100, 1.0
        %v2156 = vadd.f32 %v2102, 1.0
        %v2157 = vadd.f32 %v2104, 1.0
        %v2158 = vadd.f32 %v2106, 1.0
        %v2159 = vadd.f32 %v2108, 1.0
        %v2160 = vadd.f32 %v2110, 1.0
        %v2161 = vadd.f32 %v2112, 1.0
        %v2162 = vadd.f32 %v2114, 1.0
        %v2163 = vadd.f32 %v2116, 1.0
        %v2164 = vadd.f32 %v2118, 1.0
        %v2165 = vadd.f32 %v2120, 1.0
        %v2166 = vadd.f32 %v2122, 1.0
        %v2167 = vadd.f32 %v2124, 1.0
        %v2168 = vadd.f32 %v2126, 1.0
        %v2169 = vadd.f32 %v2128, 1.0
        %v2170 = vadd.f32 %v2130, 1.0
        %v2171 = vadd.f32 %v2132, 1.0
        %v2172 = vadd.f32 %v2134, 1.0
        %v2173 = vadd.f32 %v2136, 1.0
        %v2174 = vadd.f32 %v2138, 1.0
        %v2175 = vadd.f32 %v2140, 1.0
        %v2176 = vadd.f32 %v2142, 1.0
        %v2177 = vadd.f32 %v2144, 1.0
        %v2178 = vadd.f32 %v2146, 1.0
        %v2179 = vrcp.pop %v2147
        %v2180 = vmul.f32 1.0, %v2179
        %v2181 = vrcp.pop %v2148
        %v2182 = vmul.f32 1.0, %v2181
        %v2183 = vrcp.pop %v2149
        %v2184 = vmul.f32 1.0, %v2183
        %v2185 = vrcp.pop %v2150
        %v2186 = vmul.f32 1.0, %v2185
        %v2187 = vrcp.pop %v2151
        %v2188 = vmul.f32 1.0, %v2187
        %v2189 = vrcp.pop %v2152
        %v2190 = vmul.f32 1.0, %v2189
        %v2191 = vrcp.pop %v2153
        %v2192 = vmul.f32 1.0, %v2191
        %v2193 = vrcp.pop %v2154
        %v2194 = vmul.f32 1.0, %v2193
        %v2195 = vrcp.pop %v2155
        %v2196 = vmul.f32 1.0, %v2195
        %v2197 = vrcp.pop %v2156
        %v2198 = vmul.f32 1.0, %v2197
        %v2199 = vrcp.pop %v2157
        %v2200 = vmul.f32 1.0, %v2199
        %v2201 = vrcp.pop %v2158
        %v2202 = vmul.f32 1.0, %v2201
        %v2203 = vrcp.pop %v2159
        %v2204 = vmul.f32 1.0, %v2203
        %v2205 = vrcp.pop %v2160
        %v2206 = vmul.f32 1.0, %v2205
        %v2207 = vrcp.pop %v2161
        %v2208 = vmul.f32 1.0, %v2207
        %v2209 = vrcp.pop %v2162
        %v2210 = vmul.f32 1.0, %v2209
        %v2211 = vrcp.pop %v2163
        %v2212 = vmul.f32 1.0, %v2211
        %v2213 = vrcp.pop %v2164
        %v2214 = vmul.f32 1.0, %v2213
        %v2215 = vrcp.pop %v2165
        %v2216 = vmul.f32 1.0, %v2215
        %v2217 = vrcp.pop %v2166
        %v2218 = vmul.f32 1.0, %v2217
        %v2219 = vrcp.pop %v2167
        %v2220 = vmul.f32 1.0, %v2219
        %v2221 = vrcp.pop %v2168
        %v2222 = vmul.f32 1.0, %v2221
        %v2223 = vrcp.pop %v2169
        %v2224 = vmul.f32 1.0, %v2223
        %v2225 = vrcp.pop %v2170
        %v2226 = vmul.f32 1.0, %v2225
        %v2227 = vrcp.pop %v2171
        %v2228 = vmul.f32 1.0, %v2227
        %v2229 = vrcp.pop %v2172
        %v2230 = vmul.f32 1.0, %v2229
        %v2231 = vrcp.pop %v2173
        %v2232 = vmul.f32 1.0, %v2231
        %v2233 = vrcp.pop %v2174
        %v2234 = vmul.f32 1.0, %v2233
        %v2235 = vrcp.pop %v2175
        %v2236 = vmul.f32 1.0, %v2235
        %v2237 = vrcp.pop %v2176
        %v2238 = vmul.f32 1.0, %v2237
        %v2239 = vrcp.pop %v2177
        %v2240 = vmul.f32 1.0, %v2239
        %v2241 = vrcp.pop %v2178
        %v2242 = vmul.f32 1.0, %v2241
        %v2243 = vmul.f32 %v1893, %v2180
        %v2244 = vmul.f32 %v1898, %v2182
        %v2245 = vmul.f32 %v1903, %v2184
        %v2246 = vmul.f32 %v1908, %v2186
        %v2247 = vmul.f32 %v1913, %v2188
        %v2248 = vmul.f32 %v1918, %v2190
        %v2249 = vmul.f32 %v1923, %v2192
        %v2250 = vmul.f32 %v1928, %v2194
        %v2251 = vmul.f32 %v1933, %v2196
        %v2252 = vmul.f32 %v1938, %v2198
        %v2253 = vmul.f32 %v1943, %v2200
        %v2254 = vmul.f32 %v1948, %v2202
        %v2255 = vmul.f32 %v1953, %v2204
        %v2256 = vmul.f32 %v1958, %v2206
        %v2257 = vmul.f32 %v1963, %v2208
        %v2258 = vmul.f32 %v1968, %v2210
        %v2259 = vmul.f32 %v1973, %v2212
        %v2260 = vmul.f32 %v1978, %v2214
        %v2261 = vmul.f32 %v1983, %v2216
        %v2262 = vmul.f32 %v1988, %v2218
        %v2263 = vmul.f32 %v1993, %v2220
        %v2264 = vmul.f32 %v1998, %v2222
        %v2265 = vmul.f32 %v2003, %v2224
        %v2266 = vmul.f32 %v2008, %v2226
        %v2267 = vmul.f32 %v2013, %v2228
        %v2268 = vmul.f32 %v2018, %v2230
        %v2269 = vmul.f32 %v2023, %v2232
        %v2270 = vmul.f32 %v2028, %v2234
        %v2271 = vmul.f32 %v2033, %v2236
        %v2272 = vmul.f32 %v2038, %v2238
        %v2273 = vmul.f32 %v2043, %v2240
        %v2274 = vmul.f32 %v2048, %v2242
        %v2275 = vlaneseq
        %v2276 = vshrl.u32 %v2275, 7
        %v2277 = vadd.s32 %v2276, 8
        %v2278 = vadd.s32 %v2276, 16
        %v2279 = vadd.s32 %v2276, 24
        %v2280 = vadd.s32 %v2276, 32
        %v2281 = vadd.s32 %v2276, 40
        %v2282 = vadd.s32 %v2276, 48
        %v2283 = vadd.s32 %v2276, 56
        %v2284 = vlaneseq
        %v2285 = vand.u32 %v2284, 127
        %v2286 = vadd.s32 %v2285, 128
        %v2287 = vshra.s32 %v2285, 4
        %v2288 = vshra.s32 %v2286, 4
        %v2289 = vand.u32 %v2285, 15
        %v2290 = vand.u32 %v2286, 15
        %v2291 = vshra.s32 %v2276, 3
        %v2292 = vshra.s32 %v2277, 3
        %v2293 = vshra.s32 %v2278, 3
        %v2294 = vshra.s32 %v2279, 3
        %v2295 = vshra.s32 %v2280, 3
        %v2296 = vshra.s32 %v2281, 3
        %v2297 = vshra.s32 %v2282, 3
        %v2298 = vshra.s32 %v2283, 3
        %v2299 = vand.u32 %v2276, 7
        %v2300 = vand.u32 %v2277, 7
        %v2301 = vand.u32 %v2278, 7
        %v2302 = vand.u32 %v2279, 7
        %v2303 = vand.u32 %v2280, 7
        %v2304 = vand.u32 %v2281, 7
        %v2305 = vand.u32 %v2282, 7
        %v2306 = vand.u32 %v2283, 7
        %v2307 = vshra.s32 %v2287, 1
        %v2308 = vshra.s32 %v2288, 1
        %vm2309 = vcmp.eq.s32.totalorder %v2307, %v2291
        %vm2310 = vcmp.eq.s32.totalorder %v2308, %v2291
        %vm2311 = vcmp.eq.s32.totalorder %v2307, %v2292
        %vm2312 = vcmp.eq.s32.totalorder %v2308, %v2292
        %vm2313 = vcmp.eq.s32.totalorder %v2307, %v2293
        %vm2314 = vcmp.eq.s32.totalorder %v2308, %v2293
        %vm2315 = vcmp.eq.s32.totalorder %v2307, %v2294
        %vm2316 = vcmp.eq.s32.totalorder %v2308, %v2294
        %vm2317 = vcmp.eq.s32.totalorder %v2307, %v2295
        %vm2318 = vcmp.eq.s32.totalorder %v2308, %v2295
        %vm2319 = vcmp.eq.s32.totalorder %v2307, %v2296
        %vm2320 = vcmp.eq.s32.totalorder %v2308, %v2296
        %vm2321 = vcmp.eq.s32.totalorder %v2307, %v2297
        %vm2322 = vcmp.eq.s32.totalorder %v2308, %v2297
        %vm2323 = vcmp.eq.s32.totalorder %v2307, %v2298
        %vm2324 = vcmp.eq.s32.totalorder %v2308, %v2298
        %v2325 = vshra.s32 %v2289, 1
        %v2326 = vshra.s32 %v2290, 1
        %vm2327 = vcmp.eq.s32.totalorder %v2325, %v2299
        %vm2328 = vcmp.eq.s32.totalorder %v2326, %v2299
        %vm2329 = vcmp.eq.s32.totalorder %v2325, %v2300
        %vm2330 = vcmp.eq.s32.totalorder %v2326, %v2300
        %vm2331 = vcmp.eq.s32.totalorder %v2325, %v2301
        %vm2332 = vcmp.eq.s32.totalorder %v2326, %v2301
        %vm2333 = vcmp.eq.s32.totalorder %v2325, %v2302
        %vm2334 = vcmp.eq.s32.totalorder %v2326, %v2302
        %vm2335 = vcmp.eq.s32.totalorder %v2325, %v2303
        %vm2336 = vcmp.eq.s32.totalorder %v2326, %v2303
        %vm2337 = vcmp.eq.s32.totalorder %v2325, %v2304
        %vm2338 = vcmp.eq.s32.totalorder %v2326, %v2304
        %vm2339 = vcmp.eq.s32.totalorder %v2325, %v2305
        %vm2340 = vcmp.eq.s32.totalorder %v2326, %v2305
        %vm2341 = vcmp.eq.s32.totalorder %v2325, %v2306
        %vm2342 = vcmp.eq.s32.totalorder %v2326, %v2306
        %vm2343 = vmand %vm2309, %vm2327
        %vm2344 = vmand %vm2310, %vm2328
        %vm2345 = vmand %vm2311, %vm2329
        %vm2346 = vmand %vm2312, %vm2330
        %vm2347 = vmand %vm2313, %vm2331
        %vm2348 = vmand %vm2314, %vm2332
        %vm2349 = vmand %vm2315, %vm2333
        %vm2350 = vmand %vm2316, %vm2334
        %vm2351 = vmand %vm2317, %vm2335
        %vm2352 = vmand %vm2318, %vm2336
        %vm2353 = vmand %vm2319, %vm2337
        %vm2354 = vmand %vm2320, %vm2338
        %vm2355 = vmand %vm2321, %vm2339
        %vm2356 = vmand %vm2322, %vm2340
        %vm2357 = vmand %vm2323, %vm2341
        %vm2358 = vmand %vm2324, %vm2342
        %v2359 = vsel %vm2343, 0.25, 0.0
        %v2360 = vsel %vm2344, 0.25, 0.0
        %v2361 = vsel %vm2345, 0.25, 0.0
        %v2362 = vsel %vm2346, 0.25, 0.0
        %v2363 = vsel %vm2347, 0.25, 0.0
        %v2364 = vsel %vm2348, 0.25, 0.0
        %v2365 = vsel %vm2349, 0.25, 0.0
        %v2366 = vsel %vm2350, 0.25, 0.0
        %v2367 = vsel %vm2351, 0.25, 0.0
        %v2368 = vsel %vm2352, 0.25, 0.0
        %v2369 = vsel %vm2353, 0.25, 0.0
        %v2370 = vsel %vm2354, 0.25, 0.0
        %v2371 = vsel %vm2355, 0.25, 0.0
        %v2372 = vsel %vm2356, 0.25, 0.0
        %v2373 = vsel %vm2357, 0.25, 0.0
        %v2374 = vsel %vm2358, 0.25, 0.0
        %2375 = vmatprep.subr.mxu0 0.0
        %2376 = vmatpush1.msra.mxu0 %v2243
        %2377 = vmatprep.subr.mxu0 0.0
        %2378 = vmatpush1.msra.mxu0 %v2244
        %2379 = vmatprep.subr.mxu0 0.0
        %2380 = vmatpush1.msra.mxu0 %v2245
        %2381 = vmatprep.subr.mxu0 0.0
        %2382 = vmatpush1.msra.mxu0 %v2246
        %2383 = vmatprep.subr.mxu0 0.0
        %2384 = vmatpush1.msra.mxu0 %v2247
        %2385 = vmatprep.subr.mxu0 0.0
        %2386 = vmatpush1.msra.mxu0 %v2248
        %2387 = vmatprep.subr.mxu0 0.0
        %2388 = vmatpush1.msra.mxu0 %v2249
        %2389 = vmatprep.subr.mxu0 0.0
        %2390 = vmatpush1.msra.mxu0 %v2250
        %2391 = vmatprep.subr.mxu0 0.0
        %2392 = vmatpush1.msra.mxu0 %v2251
        %2393 = vmatprep.subr.mxu0 0.0
        %2394 = vmatpush1.msra.mxu0 %v2252
        %2395 = vmatprep.subr.mxu0 0.0
        %2396 = vmatpush1.msra.mxu0 %v2253
        %2397 = vmatprep.subr.mxu0 0.0
        %2398 = vmatpush1.msra.mxu0 %v2254
        %2399 = vmatprep.subr.mxu0 0.0
        %2400 = vmatpush1.msra.mxu0 %v2255
        %2401 = vmatprep.subr.mxu0 0.0
        %2402 = vmatpush1.msra.mxu0 %v2256
        %2403 = vmatprep.subr.mxu0 0.0
        %2404 = vmatpush1.msra.mxu0 %v2257
        %2405 = vmatprep.subr.mxu0 0.0
        %2406 = vmatpush1.msra.mxu0 %v2258
        %2407 = vmatprep.subr.mxu0 0.0
        %2408 = vmatpush1.msra.mxu0 %v2259
        %2409 = vmatprep.subr.mxu0 0.0
        %2410 = vmatpush1.msra.mxu0 %v2260
        %2411 = vmatprep.subr.mxu0 0.0
        %2412 = vmatpush1.msra.mxu0 %v2261
        %2413 = vmatprep.subr.mxu0 0.0
        %2414 = vmatpush1.msra.mxu0 %v2262
        %2415 = vmatprep.subr.mxu0 0.0
        %2416 = vmatpush1.msra.mxu0 %v2263
        %2417 = vmatprep.subr.mxu0 0.0
        %2418 = vmatpush1.msra.mxu0 %v2264
        %2419 = vmatprep.subr.mxu0 0.0
        %2420 = vmatpush1.msra.mxu0 %v2265
        %2421 = vmatprep.subr.mxu0 0.0
        %2422 = vmatpush1.msra.mxu0 %v2266
        %2423 = vmatprep.subr.mxu0 0.0
        %2424 = vmatpush1.msra.mxu0 %v2267
        %2425 = vmatprep.subr.mxu0 0.0
        %2426 = vmatpush1.msra.mxu0 %v2268
        %2427 = vmatprep.subr.mxu0 0.0
        %2428 = vmatpush1.msra.mxu0 %v2269
        %2429 = vmatprep.subr.mxu0 0.0
        %2430 = vmatpush1.msra.mxu0 %v2270
        %2431 = vmatprep.subr.mxu0 0.0
        %2432 = vmatpush1.msra.mxu0 %v2271
        %2433 = vmatprep.subr.mxu0 0.0
        %2434 = vmatpush1.msra.mxu0 %v2272
        %2435 = vmatprep.subr.mxu0 0.0
        %2436 = vmatpush1.msra.mxu0 %v2273
        %2437 = vmatprep.subr.mxu0 0.0
        %2438 = vmatpush1.msra.mxu0 %v2274
        %2439 = vmatprep.mubr.f32.mxu0 %v2360
        %2440 = vmatmul.mubr.f32.gmra.mrb[0].mxu0 %v2359
        %v2441 = vpop.f32.mrb[0].mxu0
        %v2442 = vadd.f32 0.0, %v2441
        %v2443 = vpop.f32.mrb[0].mxu0
        %2444 = vmatprep.mubr.f32.mxu0 %v2362
        %2445 = vmatmul.mubr.f32.gmra.mrb[0].mxu0 %v2361
        %v2446 = vpop.f32.mrb[0].mxu0
        %v2447 = vadd.f32 0.0, %v2446
        %v2448 = vpop.f32.mrb[0].mxu0
        %2449 = vmatprep.mubr.f32.mxu0 %v2364
        %2450 = vmatmul.mubr.f32.gmra.mrb[0].mxu0 %v2363
        %v2451 = vpop.f32.mrb[0].mxu0
        %v2452 = vadd.f32 0.0, %v2451
        %v2453 = vpop.f32.mrb[0].mxu0
        %2454 = vmatprep.mubr.f32.mxu0 %v2366
        %2455 = vmatmul.mubr.f32.gmra.mrb[0].mxu0 %v2365
        %v2456 = vpop.f32.mrb[0].mxu0
        %v2457 = vadd.f32 0.0, %v2456
        %v2458 = vpop.f32.mrb[0].mxu0
        %2459 = vmatprep.mubr.f32.mxu0 %v2368
        %2460 = vmatmul.mubr.f32.gmra.mrb[0].mxu0 %v2367
        %v2461 = vpop.f32.mrb[0].mxu0
        %v2462 = vadd.f32 0.0, %v2461
        %v2463 = vpop.f32.mrb[0].mxu0
        %2464 = vmatprep.mubr.f32.mxu0 %v2370
        %2465 = vmatmul.mubr.f32.gmra.mrb[0].mxu0 %v2369
        %v2466 = vpop.f32.mrb[0].mxu0
        %v2467 = vadd.f32 0.0, %v2466
        %v2468 = vpop.f32.mrb[0].mxu0
        %2469 = vmatprep.mubr.f32.mxu0 %v2372
        %2470 = vmatmul.mubr.f32.gmra.mrb[0].mxu0 %v2371
        %v2471 = vpop.f32.mrb[0].mxu0
        %v2472 = vadd.f32 0.0, %v2471
        %v2473 = vpop.f32.mrb[0].mxu0
        %2474 = vmatprep.mubr.f32.mxu0 %v2374
        %2475 = vmatmul.mubr.f32.gmra.mrb[0].mxu0 %v2373
        %v2476 = vpop.f32.mrb[0].mxu0
        %v2477 = vadd.f32 0.0, %v2476
        %v2478 = vpop.f32.mrb[0].mxu0
        %2479 = vdwg.mxu0
        %v2488 = vrot.slane %v2442, 7
        %v2489 = vrot.slane %v2447, 7
        %v2490 = vrot.slane %v2452, 7
        %v2491 = vrot.slane %v2457, 7
        %v2492 = vrot.slane %v2462, 7
        %v2493 = vrot.slane %v2467, 7
        %v2494 = vrot.slane %v2472, 7
        %v2495 = vrot.slane %v2477, 7
        %v2504 = vsel %vm341, 0.0, %v2488
        %v2505 = vsel %vm341, 0.0, %v2489
        %v2506 = vsel %vm341, 0.0, %v2490
        %v2507 = vsel %vm341, 0.0, %v2491
        %v2508 = vsel %vm341, 0.0, %v2492
        %v2509 = vsel %vm341, 0.0, %v2493
        %v2510 = vsel %vm341, 0.0, %v2494
        %v2511 = vsel %vm341, 0.0, %v2495
        %v2512 = vsel %vm341, %v2488, 0.0
        %v2513 = vsel %vm341, %v2489, 0.0
        %v2514 = vsel %vm341, %v2490, 0.0
        %v2515 = vsel %vm341, %v2491, 0.0
        %v2516 = vsel %vm341, %v2492, 0.0
        %v2517 = vsel %vm341, %v2493, 0.0
        %v2518 = vsel %vm341, %v2494, 0.0
        %v2519 = vsel %vm341, %v2495, 0.0
        %v2534 = vsel %vm507, %v508, %v511
        %v2535 = vrot.slane %v2504, 1
        %v2536 = vrot.slane %v2512, 1
        %v2537 = vsel %vm507, %v2535, %v2536
        %v2538 = vrot.slane %v2505, 1
        %v2539 = vrot.slane %v2513, 1
        %v2540 = vsel %vm507, %v2538, %v2539
        %v2541 = vrot.slane %v2506, 1
        %v2542 = vrot.slane %v2514, 1
        %v2543 = vsel %vm507, %v2541, %v2542
        %v2544 = vrot.slane %v2507, 1
        %v2545 = vrot.slane %v2515, 1
        %v2546 = vsel %vm507, %v2544, %v2545
        %v2547 = vrot.slane %v2508, 1
        %v2548 = vrot.slane %v2516, 1
        %v2549 = vsel %vm507, %v2547, %v2548
        %v2550 = vrot.slane %v2509, 1
        %v2551 = vrot.slane %v2517, 1
        %v2552 = vsel %vm507, %v2550, %v2551
        %v2553 = vrot.slane %v2510, 1
        %v2554 = vrot.slane %v2518, 1
        %v2555 = vsel %vm507, %v2553, %v2554
        %2556 = vrot.lane.b32.xlu0 %v2534, 16
        %v2557 = vpop.permute.xlu0 %2556
        %2558 = vrot.lane.b32.xlu0 %v2537, 16
        %v2559 = vpop.permute.xlu0 %2558
        %2560 = vrot.lane.b32.xlu0 %v2540, 16
        %v2561 = vpop.permute.xlu0 %2560
        %2562 = vrot.lane.b32.xlu0 %v2543, 16
        %v2563 = vpop.permute.xlu0 %2562
        %2564 = vrot.lane.b32.xlu0 %v2546, 16
        %v2565 = vpop.permute.xlu0 %2564
        %2566 = vrot.lane.b32.xlu0 %v2549, 16
        %v2567 = vpop.permute.xlu0 %2566
        %2568 = vrot.lane.b32.xlu0 %v2552, 16
        %v2569 = vpop.permute.xlu0 %2568
        %2570 = vrot.lane.b32.xlu0 %v2555, 16
        %v2571 = vpop.permute.xlu0 %2570
        %v2580 = vsel %vm684, %v685, %v688
        %v2581 = vrot.slane %v2504, 2
        %v2582 = vrot.slane %v2512, 2
        %v2583 = vsel %vm684, %v2581, %v2582
        %v2584 = vrot.slane %v2505, 2
        %v2585 = vrot.slane %v2513, 2
        %v2586 = vsel %vm684, %v2584, %v2585
        %v2587 = vrot.slane %v2506, 2
        %v2588 = vrot.slane %v2514, 2
        %v2589 = vsel %vm684, %v2587, %v2588
        %v2590 = vrot.slane %v2507, 2
        %v2591 = vrot.slane %v2515, 2
        %v2592 = vsel %vm684, %v2590, %v2591
        %v2593 = vrot.slane %v2508, 2
        %v2594 = vrot.slane %v2516, 2
        %v2595 = vsel %vm684, %v2593, %v2594
        %v2596 = vrot.slane %v2509, 2
        %v2597 = vrot.slane %v2517, 2
        %v2598 = vsel %vm684, %v2596, %v2597
        %v2599 = vrot.slane %v2510, 2
        %v2600 = vrot.slane %v2518, 2
        %v2601 = vsel %vm684, %v2599, %v2600
        %2602 = vrot.lane.b32.xlu0 %v2580, 32
        %v2603 = vpop.permute.xlu0 %2602
        %2604 = vrot.lane.b32.xlu0 %v2583, 32
        %v2605 = vpop.permute.xlu0 %2604
        %2606 = vrot.lane.b32.xlu0 %v2586, 32
        %v2607 = vpop.permute.xlu0 %2606
        %2608 = vrot.lane.b32.xlu0 %v2589, 32
        %v2609 = vpop.permute.xlu0 %2608
        %2610 = vrot.lane.b32.xlu0 %v2592, 32
        %v2611 = vpop.permute.xlu0 %2610
        %2612 = vrot.lane.b32.xlu0 %v2595, 32
        %v2613 = vpop.permute.xlu0 %2612
        %2614 = vrot.lane.b32.xlu0 %v2598, 32
        %v2615 = vpop.permute.xlu0 %2614
        %2616 = vrot.lane.b32.xlu0 %v2601, 32
        %v2617 = vpop.permute.xlu0 %2616
        %2627 = vrot.lane.b32.xlu0 %v2504, 48
        %v2628 = vpop.permute.xlu0 %2627
        %2629 = vrot.lane.b32.xlu0 %v2505, 48
        %v2630 = vpop.permute.xlu0 %2629
        %2631 = vrot.lane.b32.xlu0 %v2506, 48
        %v2632 = vpop.permute.xlu0 %2631
        %2633 = vrot.lane.b32.xlu0 %v2507, 48
        %v2634 = vpop.permute.xlu0 %2633
        %2635 = vrot.lane.b32.xlu0 %v2508, 48
        %v2636 = vpop.permute.xlu0 %2635
        %2637 = vrot.lane.b32.xlu0 %v2509, 48
        %v2638 = vpop.permute.xlu0 %2637
        %2639 = vrot.lane.b32.xlu0 %v2510, 48
        %v2640 = vpop.permute.xlu0 %2639
        %2641 = vrot.lane.b32.xlu0 %v2511, 48
        %v2642 = vpop.permute.xlu0 %2641
        %v2652 = vrot.slane %v2511, 1
        %v2653 = vrot.slane %v2519, 1
        %v2654 = vsel %vm507, %v2652, %v2653
        %2655 = vrot.lane.b32.xlu0 %v2537, 64
        %v2656 = vpop.permute.xlu0 %2655
        %2657 = vrot.lane.b32.xlu0 %v2540, 64
        %v2658 = vpop.permute.xlu0 %2657
        %2659 = vrot.lane.b32.xlu0 %v2543, 64
        %v2660 = vpop.permute.xlu0 %2659
        %2661 = vrot.lane.b32.xlu0 %v2546, 64
        %v2662 = vpop.permute.xlu0 %2661
        %2663 = vrot.lane.b32.xlu0 %v2549, 64
        %v2664 = vpop.permute.xlu0 %2663
        %2665 = vrot.lane.b32.xlu0 %v2552, 64
        %v2666 = vpop.permute.xlu0 %2665
        %2667 = vrot.lane.b32.xlu0 %v2555, 64
        %v2668 = vpop.permute.xlu0 %2667
        %2669 = vrot.lane.b32.xlu0 %v2654, 64
        %v2670 = vpop.permute.xlu0 %2669
        %v2679 = vrot.slane %v2511, 2
        %v2680 = vrot.slane %v2519, 2
        %v2681 = vsel %vm684, %v2679, %v2680
        %2682 = vrot.lane.b32.xlu0 %v2583, 80
        %v2683 = vpop.permute.xlu0 %2682
        %2684 = vrot.lane.b32.xlu0 %v2586, 80
        %v2685 = vpop.permute.xlu0 %2684
        %2686 = vrot.lane.b32.xlu0 %v2589, 80
        %v2687 = vpop.permute.xlu0 %2686
        %2688 = vrot.lane.b32.xlu0 %v2592, 80
        %v2689 = vpop.permute.xlu0 %2688
        %2690 = vrot.lane.b32.xlu0 %v2595, 80
        %v2691 = vpop.permute.xlu0 %2690
        %2692 = vrot.lane.b32.xlu0 %v2598, 80
        %v2693 = vpop.permute.xlu0 %2692
        %2694 = vrot.lane.b32.xlu0 %v2601, 80
        %v2695 = vpop.permute.xlu0 %2694
        %2696 = vrot.lane.b32.xlu0 %v2681, 80
        %v2697 = vpop.permute.xlu0 %2696
        %2706 = vrot.lane.b32.xlu0 %v2505, 96
        %v2707 = vpop.permute.xlu0 %2706
        %2708 = vrot.lane.b32.xlu0 %v2506, 96
        %v2709 = vpop.permute.xlu0 %2708
        %2710 = vrot.lane.b32.xlu0 %v2507, 96
        %v2711 = vpop.permute.xlu0 %2710
        %2712 = vrot.lane.b32.xlu0 %v2508, 96
        %v2713 = vpop.permute.xlu0 %2712
        %2714 = vrot.lane.b32.xlu0 %v2509, 96
        %v2715 = vpop.permute.xlu0 %2714
        %2716 = vrot.lane.b32.xlu0 %v2510, 96
        %v2717 = vpop.permute.xlu0 %2716
        %2718 = vrot.lane.b32.xlu0 %v2511, 96
        %v2719 = vpop.permute.xlu0 %2718
        %2720 = vrot.lane.b32.xlu0 %v441, 96
        %v2721 = vpop.permute.xlu0 %2720
        %2730 = vrot.lane.b32.xlu0 %v2540, 112
        %v2731 = vpop.permute.xlu0 %2730
        %2732 = vrot.lane.b32.xlu0 %v2543, 112
        %v2733 = vpop.permute.xlu0 %2732
        %2734 = vrot.lane.b32.xlu0 %v2546, 112
        %v2735 = vpop.permute.xlu0 %2734
        %2736 = vrot.lane.b32.xlu0 %v2549, 112
        %v2737 = vpop.permute.xlu0 %2736
        %2738 = vrot.lane.b32.xlu0 %v2552, 112
        %v2739 = vpop.permute.xlu0 %2738
        %2740 = vrot.lane.b32.xlu0 %v2555, 112
        %v2741 = vpop.permute.xlu0 %2740
        %2742 = vrot.lane.b32.xlu0 %v2654, 112
        %v2743 = vpop.permute.xlu0 %2742
        %2744 = vrot.lane.b32.xlu0 %v2534, 112
        %v2745 = vpop.permute.xlu0 %2744
        %v2754 = vsel %vm1548, %v441, %v2557
        %v2755 = vsel %vm1548, %v2504, %v2559
        %v2756 = vsel %vm1548, %v2505, %v2561
        %v2757 = vsel %vm1548, %v2506, %v2563
        %v2758 = vsel %vm1548, %v2507, %v2565
        %v2759 = vsel %vm1548, %v2508, %v2567
        %v2760 = vsel %vm1548, %v2509, %v2569
        %v2761 = vsel %vm1548, %v2510, %v2571
        %v2762 = vsel %vm1680, %v2754, %v2603
        %v2763 = vsel %vm1680, %v2755, %v2605
        %v2764 = vsel %vm1680, %v2756, %v2607
        %v2765 = vsel %vm1680, %v2757, %v2609
        %v2766 = vsel %vm1680, %v2758, %v2611
        %v2767 = vsel %vm1680, %v2759, %v2613
        %v2768 = vsel %vm1680, %v2760, %v2615
        %v2769 = vsel %vm1680, %v2761, %v2617
        %vm2770 = vcmask 392192
        %v2771 = vsel %vm2770, %v2762, %v2628
        %v2772 = vsel %vm2770, %v2763, %v2630
        %v2773 = vsel %vm2770, %v2764, %v2632
        %v2774 = vsel %vm2770, %v2765, %v2634
        %v2775 = vsel %vm2770, %v2766, %v2636
        %v2776 = vsel %vm2770, %v2767, %v2638
        %v2777 = vsel %vm2770, %v2768, %v2640
        %v2778 = vsel %vm2770, %v2769, %v2642
        %vm2779 = vcmask 523264
        %v2780 = vsel %vm2779, %v2771, %v2656
        %v2781 = vsel %vm2779, %v2772, %v2658
        %v2782 = vsel %vm2779, %v2773, %v2660
        %v2783 = vsel %vm2779, %v2774, %v2662
        %v2784 = vsel %vm2779, %v2775, %v2664
        %v2785 = vsel %vm2779, %v2776, %v2666
        %v2786 = vsel %vm2779, %v2777, %v2668
        %v2787 = vsel %vm2779, %v2778, %v2670
        %vm2788 = vcmask 654336
        %v2789 = vsel %vm2788, %v2780, %v2683
        %v2790 = vsel %vm2788, %v2781, %v2685
        %v2791 = vsel %vm2788, %v2782, %v2687
        %v2792 = vsel %vm2788, %v2783, %v2689
        %v2793 = vsel %vm2788, %v2784, %v2691
        %v2794 = vsel %vm2788, %v2785, %v2693
        %v2795 = vsel %vm2788, %v2786, %v2695
        %v2796 = vsel %vm2788, %v2787, %v2697
        %vm2797 = vcmask 785408
        %v2798 = vsel %vm2797, %v2789, %v2707
        %v2799 = vsel %vm2797, %v2790, %v2709
        %v2800 = vsel %vm2797, %v2791, %v2711
        %v2801 = vsel %vm2797, %v2792, %v2713
        %v2802 = vsel %vm2797, %v2793, %v2715
        %v2803 = vsel %vm2797, %v2794, %v2717
        %v2804 = vsel %vm2797, %v2795, %v2719
        %v2805 = vsel %vm2797, %v2796, %v2721
        %vm2806 = vcmask 916480
        %v2807 = vsel %vm2806, %v2798, %v2731
        %v2808 = vsel %vm2806, %v2799, %v2733
        %v2809 = vsel %vm2806, %v2800, %v2735
        %v2810 = vsel %vm2806, %v2801, %v2737
        %v2811 = vsel %vm2806, %v2802, %v2739
        %v2812 = vsel %vm2806, %v2803, %v2741
        %v2813 = vsel %vm2806, %v2804, %v2743
        %v2814 = vsel %vm2806, %v2805, %v2745
        %v2815 = vld [vmem:[%s3] sm:$0xff]
        %v2816 = vld [vmem:[%s3 + $0x8] sm:$0xff]
        %v2817 = vld [vmem:[%s3 + $0x10] sm:$0xff]
        %v2818 = vld [vmem:[%s3 + $0x18] sm:$0xff]
        %v2819 = vld [vmem:[%s3 + $0x20] sm:$0xff]
        %v2820 = vld [vmem:[%s3 + $0x28] sm:$0xff]
        %v2821 = vld [vmem:[%s3 + $0x30] sm:$0xff]
        %v2822 = vld [vmem:[%s3 + $0x38] sm:$0xff]
        %v2823 = vld [vmem:[%s3 + $0x40] sm:$0xff]
        %v2824 = vld [vmem:[%s3 + $0x48] sm:$0xff]
        %v2825 = vld [vmem:[%s3 + $0x50] sm:$0xff]
        %v2826 = vld [vmem:[%s3 + $0x58] sm:$0xff]
        %v2827 = vld [vmem:[%s3 + $0x60] sm:$0xff]
        %v2828 = vld [vmem:[%s3 + $0x68] sm:$0xff]
        %v2829 = vld [vmem:[%s3 + $0x70] sm:$0xff]
        %v2830 = vld [vmem:[%s3 + $0x78] sm:$0xff]
        %v2831 = vld [vmem:[%s3 + $0x80] sm:$0xff]
        %v2832 = vld [vmem:[%s3 + $0x88] sm:$0xff]
        %v2833 = vld [vmem:[%s4] sm:$0x1]
        %v2835 = vlaneseq
        %v2836 = vshrl.u32 %v2835, 7
        %v2837 = vsub.s32 0, %v2836
        %v2838 = vrot.slane %v2833, %v2837
        %v2840 = vsel %vm1548, %v2586, 0
        %v2842 = vsel %vm1548, %v2589, 0
        %v2844 = vsel %vm1548, %v2592, 0
        %v2846 = vsel %vm1548, %v2595, 0
        %v2848 = vsel %vm1548, %v2598, 0
        %v2850 = vsel %vm1548, %v2601, 0
        %v2852 = vsel %vm1548, %v2681, 0
        %v2854 = vsel %vm1548, %v2580, 0
        %2856 = vmatprep.subr.mxu0 0.0
        %2857 = vmatpush1.msra.mxu0 %v2815
        %2858 = vmatprep.subr.mxu0 0.0
        %2859 = vmatpush1.msra.mxu0 %v2816
        %2860 = vmatprep.subr.mxu0 0.0
        %2861 = vmatpush1.msra.mxu0 %v2817
        %2862 = vmatprep.subr.mxu0 0.0
        %2863 = vmatpush1.msra.mxu0 %v2818
        %2864 = vmatprep.subr.mxu0 0.0
        %2865 = vmatpush1.msra.mxu0 %v2819
        %2866 = vmatprep.subr.mxu0 0.0
        %2867 = vmatpush1.msra.mxu0 %v2820
        %2868 = vmatprep.subr.mxu0 0.0
        %2869 = vmatpush1.msra.mxu0 %v2821
        %2870 = vmatprep.subr.mxu0 0.0
        %2871 = vmatpush1.msra.mxu0 %v2822
        %2872 = vmatprep.subr.mxu0 0.0
        %2873 = vmatpush1.msra.mxu0 %v2823
        %2874 = vmatprep.subr.mxu0 0.0
        %2875 = vmatpush1.msra.mxu0 %v2824
        %2876 = vmatprep.subr.mxu0 0.0
        %2877 = vmatpush1.msra.mxu0 %v2825
        %2878 = vmatprep.subr.mxu0 0.0
        %2879 = vmatpush1.msra.mxu0 %v2826
        %2880 = vmatprep.subr.mxu0 0.0
        %2881 = vmatpush1.msra.mxu0 %v2827
        %2882 = vmatprep.subr.mxu0 0.0
        %2883 = vmatpush1.msra.mxu0 %v2828
        %2884 = vmatprep.subr.mxu0 0.0
        %2885 = vmatpush1.msra.mxu0 %v2829
        %2886 = vmatprep.subr.mxu0 0.0
        %2887 = vmatpush1.msra.mxu0 %v2830
        %2888 = vmatprep.subr.mxu0 0.0
        %2889 = vmatpush1.msra.mxu0 %v2831
        %2890 = vmatprep.subr.mxu0 0.0
        %2891 = vmatpush1.msra.mxu0 %v2832
        %2892 = vmatprep.subr.mxu0 0.0
        %2893 = vmatpush1.msra.mxu0 0.0
        %2894 = vmatprep.subr.mxu0 0.0
        %2895 = vmatpush1.msra.mxu0 0.0
        %2896 = vmatprep.subr.mxu0 0.0
        %2897 = vmatpush1.msra.mxu0 0.0
        %2898 = vmatprep.subr.mxu0 0.0
        %2899 = vmatpush1.msra.mxu0 0.0
        %2900 = vmatprep.subr.mxu0 0.0
        %2901 = vmatpush1.msra.mxu0 0.0
        %2902 = vmatprep.subr.mxu0 0.0
        %2903 = vmatpush1.msra.mxu0 0.0
        %2904 = vmatprep.subr.mxu0 0.0
        %2905 = vmatpush1.msra.mxu0 0.0
        %2906 = vmatprep.subr.mxu0 0.0
        %2907 = vmatpush1.msra.mxu0 0.0
        %2908 = vmatprep.subr.mxu0 0.0
        %2909 = vmatpush1.msra.mxu0 0.0
        %2910 = vmatprep.subr.mxu0 0.0
        %2911 = vmatpush1.msra.mxu0 0.0
        %2912 = vmatprep.subr.mxu0 0.0
        %2913 = vmatpush1.msra.mxu0 0.0
        %2914 = vmatprep.subr.mxu0 0.0
        %2915 = vmatpush1.msra.mxu0 0.0
        %2916 = vmatprep.subr.mxu0 0.0
        %2917 = vmatpush1.msra.mxu0 0.0
        %2918 = vmatprep.subr.mxu0 0.0
        %2919 = vmatpush1.msra.mxu0 0.0
        %2920 = vmatprep.mubr.f32.mxu0 %v2840
        %2921 = vmatmul.mubr.f32.gmra.mrb[0].mxu0 %v2807
        %v2922 = vpop.f32.mrb[0].mxu0
        %v2923 = vadd.f32 %v2838, %v2922
        %v2924 = vpop.f32.mrb[0].mxu0
        %2925 = vmatprep.mubr.f32.mxu0 %v2842
        %2926 = vmatmul.mubr.f32.gmra.mrb[0].mxu0 %v2808
        %v2927 = vpop.f32.mrb[0].mxu0
        %v2928 = vadd.f32 %v2838, %v2927
        %v2929 = vpop.f32.mrb[0].mxu0
        %2930 = vmatprep.mubr.f32.mxu0 %v2844
        %2931 = vmatmul.mubr.f32.gmra.mrb[0].mxu0 %v2809
        %v2932 = vpop.f32.mrb[0].mxu0
        %v2933 = vadd.f32 %v2838, %v2932
        %v2934 = vpop.f32.mrb[0].mxu0
        %2935 = vmatprep.mubr.f32.mxu0 %v2846
        %2936 = vmatmul.mubr.f32.gmra.mrb[0].mxu0 %v2810
        %v2937 = vpop.f32.mrb[0].mxu0
        %v2938 = vadd.f32 %v2838, %v2937
        %v2939 = vpop.f32.mrb[0].mxu0
        %2940 = vmatprep.mubr.f32.mxu0 %v2848
        %2941 = vmatmul.mubr.f32.gmra.mrb[0].mxu0 %v2811
        %v2942 = vpop.f32.mrb[0].mxu0
        %v2943 = vadd.f32 %v2838, %v2942
        %v2944 = vpop.f32.mrb[0].mxu0
        %2945 = vmatprep.mubr.f32.mxu0 %v2850
        %2946 = vmatmul.mubr.f32.gmra.mrb[0].mxu0 %v2812
        %v2947 = vpop.f32.mrb[0].mxu0
        %v2948 = vadd.f32 %v2838, %v2947
        %v2949 = vpop.f32.mrb[0].mxu0
        %2950 = vmatprep.mubr.f32.mxu0 %v2852
        %2951 = vmatmul.mubr.f32.gmra.mrb[0].mxu0 %v2813
        %v2952 = vpop.f32.mrb[0].mxu0
        %v2953 = vadd.f32 %v2838, %v2952
        %v2954 = vpop.f32.mrb[0].mxu0
        %2955 = vmatprep.mubr.f32.mxu0 %v2854
        %2956 = vmatmul.mubr.f32.gmra.mrb[0].mxu0 %v2814
        %v2957 = vpop.f32.mrb[0].mxu0
        %v2958 = vadd.f32 %v2838, %v2957
        %v2959 = vpop.f32.mrb[0].mxu0
        %2960 = vdwg.mxu0
        %v2961 = vxor.u32 %v2923, 2147483648
        %v2962 = vxor.u32 %v2928, 2147483648
        %v2963 = vxor.u32 %v2933, 2147483648
        %v2964 = vxor.u32 %v2938, 2147483648
        %v2965 = vxor.u32 %v2943, 2147483648
        %v2966 = vxor.u32 %v2948, 2147483648
        %v2967 = vxor.u32 %v2953, 2147483648
        %v2968 = vxor.u32 %v2958, 2147483648
        %v2969 = vmul.f32 %v2961, 1.442695
        %v2970 = vpow.pop %v2969
        %v2971 = vmul.f32 %v2962, 1.442695
        %v2972 = vpow.pop %v2971
        %v2973 = vmul.f32 %v2963, 1.442695
        %v2974 = vpow.pop %v2973
        %v2975 = vmul.f32 %v2964, 1.442695
        %v2976 = vpow.pop %v2975
        %v2977 = vmul.f32 %v2965, 1.442695
        %v2978 = vpow.pop %v2977
        %v2979 = vmul.f32 %v2966, 1.442695
        %v2980 = vpow.pop %v2979
        %v2981 = vmul.f32 %v2967, 1.442695
        %v2982 = vpow.pop %v2981
        %v2983 = vmul.f32 %v2968, 1.442695
        %v2984 = vpow.pop %v2983
        %v2985 = vadd.f32 %v2970, 1.0
        %v2986 = vadd.f32 %v2972, 1.0
        %v2987 = vadd.f32 %v2974, 1.0
        %v2988 = vadd.f32 %v2976, 1.0
        %v2989 = vadd.f32 %v2978, 1.0
        %v2990 = vadd.f32 %v2980, 1.0
        %v2991 = vadd.f32 %v2982, 1.0
        %v2992 = vadd.f32 %v2984, 1.0
        %v2993 = vrcp.pop %v2985
        %v2994 = vmul.f32 1.0, %v2993
        %v2995 = vrcp.pop %v2986
        %v2996 = vmul.f32 1.0, %v2995
        %v2997 = vrcp.pop %v2987
        %v2998 = vmul.f32 1.0, %v2997
        %v2999 = vrcp.pop %v2988
        %v3000 = vmul.f32 1.0, %v2999
        %v3001 = vrcp.pop %v2989
        %v3002 = vmul.f32 1.0, %v3001
        %v3003 = vrcp.pop %v2990
        %v3004 = vmul.f32 1.0, %v3003
        %v3005 = vrcp.pop %v2991
        %v3006 = vmul.f32 1.0, %v3005
        %v3007 = vrcp.pop %v2992
        %v3008 = vmul.f32 1.0, %v3007
        %v3009 = vmul.f32 %v2923, %v2994
        %v3010 = vmul.f32 %v2928, %v2996
        %v3011 = vmul.f32 %v2933, %v2998
        %v3012 = vmul.f32 %v2938, %v3000
        %v3013 = vmul.f32 %v2943, %v3002
        %v3014 = vmul.f32 %v2948, %v3004
        %v3015 = vmul.f32 %v2953, %v3006
        %v3016 = vmul.f32 %v2958, %v3008
        %v3017 = vshra.s32 %v2285, 3
        %v3018 = vand.u32 %v2285, 7
        %v3019 = vshra.s32 %v2276, 2
        %v3020 = vshra.s32 %v2277, 2
        %v3021 = vand.u32 %v2276, 3
        %v3022 = vand.u32 %v2277, 3
        %v3023 = vshra.s32 %v3017, 1
        %vm3024 = vcmp.eq.s32.totalorder %v3023, %v3019
        %vm3025 = vcmp.eq.s32.totalorder %v3023, %v3020
        %v3026 = vshra.s32 %v3018, 1
        %vm3027 = vcmp.eq.s32.totalorder %v3026, %v3021
        %vm3028 = vcmp.eq.s32.totalorder %v3026, %v3022
        %vm3029 = vmand %vm3024, %vm3027
        %vm3030 = vmand %vm3025, %vm3028
        %v3031 = vsel %vm3029, 0.25, 0.0
        %v3032 = vsel %vm3030, 0.25, 0.0
        %v3034 = vsel %vm2779, %v3031, 0
        %v3037 = vsel %vm2779, %v3032, 0
        %3039 = vmatprep.subr.mxu0 0.0
        %3040 = vmatpush1.msra.mxu0 %v3009
        %3041 = vmatprep.subr.mxu0 0.0
        %3042 = vmatpush1.msra.mxu0 %v3010
        %3043 = vmatprep.subr.mxu0 0.0
        %3044 = vmatpush1.msra.mxu0 %v3011
        %3045 = vmatprep.subr.mxu0 0.0
        %3046 = vmatpush1.msra.mxu0 %v3012
        %3047 = vmatprep.subr.mxu0 0.0
        %3048 = vmatpush1.msra.mxu0 %v3013
        %3049 = vmatprep.subr.mxu0 0.0
        %3050 = vmatpush1.msra.mxu0 %v3014
        %3051 = vmatprep.subr.mxu0 0.0
        %3052 = vmatpush1.msra.mxu0 %v3015
        %3053 = vmatprep.subr.mxu0 0.0
        %3054 = vmatpush1.msra.mxu0 %v3016
        %3055 = vmatprep.subr.mxu0 0.0
        %3056 = vmatpush1.msra.mxu0 0.0
        %3057 = vmatprep.subr.mxu0 0.0
        %3058 = vmatpush1.msra.mxu0 0.0
        %3059 = vmatprep.subr.mxu0 0.0
        %3060 = vmatpush1.msra.mxu0 0.0
        %3061 = vmatprep.subr.mxu0 0.0
        %3062 = vmatpush1.msra.mxu0 0.0
        %3063 = vmatprep.subr.mxu0 0.0
        %3064 = vmatpush1.msra.mxu0 0.0
        %3065 = vmatprep.subr.mxu0 0.0
        %3066 = vmatpush1.msra.mxu0 0.0
        %3067 = vmatprep.subr.mxu0 0.0
        %3068 = vmatpush1.msra.mxu0 0.0
        %3069 = vmatprep.subr.mxu0 0.0
        %3070 = vmatpush1.msra.mxu0 0.0
        %3071 = vmatprep.subr.mxu0 0.0
        %3072 = vmatpush1.msra.mxu0 0.0
        %3073 = vmatprep.subr.mxu0 0.0
        %3074 = vmatpush1.msra.mxu0 0.0
        %3075 = vmatprep.subr.mxu0 0.0
        %3076 = vmatpush1.msra.mxu0 0.0
        %3077 = vmatprep.subr.mxu0 0.0
        %3078 = vmatpush1.msra.mxu0 0.0
        %3079 = vmatprep.subr.mxu0 0.0
        %3080 = vmatpush1.msra.mxu0 0.0
        %3081 = vmatprep.subr.mxu0 0.0
        %3082 = vmatpush1.msra.mxu0 0.0
        %3083 = vmatprep.subr.mxu0 0.0
        %3084 = vmatpush1.msra.mxu0 0.0
        %3085 = vmatprep.subr.mxu0 0.0
        %3086 = vmatpush1.msra.mxu0 0.0
        %3087 = vmatprep.subr.mxu0 0.0
        %3088 = vmatpush1.msra.mxu0 0.0
        %3089 = vmatprep.subr.mxu0 0.0
        %3090 = vmatpush1.msra.mxu0 0.0
        %3091 = vmatprep.subr.mxu0 0.0
        %3092 = vmatpush1.msra.mxu0 0.0
        %3093 = vmatprep.subr.mxu0 0.0
        %3094 = vmatpush1.msra.mxu0 0.0
        %3095 = vmatprep.subr.mxu0 0.0
        %3096 = vmatpush1.msra.mxu0 0.0
        %3097 = vmatprep.subr.mxu0 0.0
        %3098 = vmatpush1.msra.mxu0 0.0
        %3099 = vmatprep.subr.mxu0 0.0
        %3100 = vmatpush1.msra.mxu0 0.0
        %3101 = vmatprep.subr.mxu0 0.0
        %3102 = vmatpush1.msra.mxu0 0.0
        %3103 = vmatprep.mubr.f32.mxu0 0.0
        %3104 = vmatmul.mubr.f32.gmra.mrb[0].mxu0 %v3034
        %v3105 = vpop.f32.mrb[0].mxu0
        %v3106 = vadd.f32 0.0, %v3105
        %v3107 = vpop.f32.mrb[0].mxu0
        %3108 = vmatprep.mubr.f32.mxu0 0.0
        %3109 = vmatmul.mubr.f32.gmra.mrb[0].mxu0 %v3037
        %v3110 = vpop.f32.mrb[0].mxu0
        %v3111 = vadd.f32 0.0, %v3110
        %v3112 = vpop.f32.mrb[0].mxu0
        %3113 = vdwg.mxu0
        %v3115 = vrot.slane %v3106, 1
        %3116 = vrot.lane.b32.xlu0 %v3115, 32
        %v3117 = vpop.permute.xlu0 %3116
        %v3119 = vrot.slane %v3106, 2
        %3120 = vrot.lane.b32.xlu0 %v3119, 64
        %v3121 = vpop.permute.xlu0 %3120
        %v3123 = vrot.slane %v3106, 3
        %3124 = vrot.lane.b32.xlu0 %v3123, 96
        %v3125 = vpop.permute.xlu0 %3124
        %v3127 = vrot.slane %v3106, 4
        %v3129 = vrot.slane %v3106, 5
        %3130 = vrot.lane.b32.xlu0 %v3129, 32
        %v3131 = vpop.permute.xlu0 %3130
        %v3133 = vrot.slane %v3106, 6
        %3134 = vrot.lane.b32.xlu0 %v3133, 64
        %v3135 = vpop.permute.xlu0 %3134
        %v3137 = vrot.slane %v3106, 7
        %3138 = vrot.lane.b32.xlu0 %v3137, 96
        %v3139 = vpop.permute.xlu0 %3138
        %v3142 = vrot.slane %v3111, 1
        %3143 = vrot.lane.b32.xlu0 %v3142, 32
        %v3144 = vpop.permute.xlu0 %3143
        %v3146 = vrot.slane %v3111, 2
        %3147 = vrot.lane.b32.xlu0 %v3146, 64
        %v3148 = vpop.permute.xlu0 %3147
        %v3150 = vrot.slane %v3111, 3
        %3151 = vrot.lane.b32.xlu0 %v3150, 96
        %v3152 = vpop.permute.xlu0 %3151
        %v3154 = vrot.slane %v3111, 4
        %v3156 = vrot.slane %v3111, 5
        %3157 = vrot.lane.b32.xlu0 %v3156, 32
        %v3158 = vpop.permute.xlu0 %3157
        %v3160 = vrot.slane %v3111, 6
        %3161 = vrot.lane.b32.xlu0 %v3160, 64
        %v3162 = vpop.permute.xlu0 %3161
        %v3164 = vrot.slane %v3111, 7
        %3165 = vrot.lane.b32.xlu0 %v3164, 96
        %v3166 = vpop.permute.xlu0 %3165
        %v3168 = vsel %vm1680, %v3106, %v3117
        %v3169 = vsel %vm2779, %v3168, %v3121
        %v3170 = vsel %vm2797, %v3169, %v3125
        %v3171 = vsel %vm1680, %v3127, %v3131
        %v3172 = vsel %vm2779, %v3171, %v3135
        %v3173 = vsel %vm2797, %v3172, %v3139
        %v3174 = vsel %vm1680, %v3111, %v3144
        %v3175 = vsel %vm2779, %v3174, %v3148
        %v3176 = vsel %vm2797, %v3175, %v3152
        %v3177 = vsel %vm1680, %v3154, %v3158
        %v3178 = vsel %vm2779, %v3177, %v3162
        %v3179 = vsel %vm2797, %v3178, %v3166
        %v3180 = vld [vmem:[%s5] sm:$0xff]
        %v3181 = vld [vmem:[%s5 + $0x8] sm:$0xff]
        %v3182 = vld [vmem:[%s5 + $0x10] sm:$0xff]
        %v3183 = vld [vmem:[%s5 + $0x18] sm:$0xff]
        %v3184 = vld [vmem:[%s5 + $0x20] sm:$0xff]
        %v3185 = vld [vmem:[%s5 + $0x28] sm:$0xff]
        %v3186 = vld [vmem:[%s5 + $0x30] sm:$0xff]
        %v3187 = vld [vmem:[%s5 + $0x38] sm:$0xff]
        %v3188 = vld [vmem:[%s5 + $0x40] sm:$0xff]
        %v3189 = vld [vmem:[%s5 + $0x48] sm:$0xff]
        %v3190 = vld [vmem:[%s5 + $0x50] sm:$0xff]
        %v3191 = vld [vmem:[%s5 + $0x58] sm:$0xff]
        %v3192 = vld [vmem:[%s5 + $0x60] sm:$0xff]
        %v3193 = vld [vmem:[%s5 + $0x68] sm:$0xff]
        %v3194 = vld [vmem:[%s5 + $0x70] sm:$0xff]
        %v3195 = vld [vmem:[%s5 + $0x78] sm:$0xff]
        %v3196 = vld [vmem:[%s5 + $0x80] sm:$0xff]
        %v3197 = vld [vmem:[%s5 + $0x88] sm:$0xff]
        %v3198 = vld [vmem:[%s5 + $0x90] sm:$0xff]
        %v3199 = vld [vmem:[%s5 + $0x98] sm:$0xff]
        %v3200 = vld [vmem:[%s5 + $0xa0] sm:$0xff]
        %v3201 = vld [vmem:[%s5 + $0xa8] sm:$0xff]
        %v3202 = vld [vmem:[%s5 + $0xb0] sm:$0xff]
        %v3203 = vld [vmem:[%s5 + $0xb8] sm:$0xff]
        %v3204 = vld [vmem:[%s5 + $0xc0] sm:$0xff]
        %v3205 = vld [vmem:[%s5 + $0xc8] sm:$0xff]
        %v3206 = vld [vmem:[%s5 + $0xd0] sm:$0xff]
        %v3207 = vld [vmem:[%s5 + $0xd8] sm:$0xff]
        %v3208 = vld [vmem:[%s5 + $0xe0] sm:$0xff]
        %v3209 = vld [vmem:[%s5 + $0xe8] sm:$0xff]
        %v3210 = vld [vmem:[%s5 + $0xf0] sm:$0xff]
        %v3211 = vld [vmem:[%s5 + $0xf8] sm:$0xff]
        %v3212 = vld [vmem:[%s5 + $0x100] sm:$0xff]
        %v3213 = vld [vmem:[%s5 + $0x108] sm:$0xff]
        %v3214 = vld [vmem:[%s5 + $0x110] sm:$0xff]
        %v3215 = vld [vmem:[%s5 + $0x118] sm:$0xff]
        %v3216 = vld [vmem:[%s5 + $0x120] sm:$0xff]
        %v3217 = vld [vmem:[%s5 + $0x128] sm:$0xff]
        %v3218 = vld [vmem:[%s5 + $0x130] sm:$0xff]
        %v3219 = vld [vmem:[%s5 + $0x138] sm:$0xff]
        %v3220 = vld [vmem:[%s5 + $0x140] sm:$0xff]
        %v3221 = vld [vmem:[%s5 + $0x148] sm:$0xff]
        %v3222 = vld [vmem:[%s5 + $0x150] sm:$0xff]
        %v3223 = vld [vmem:[%s5 + $0x158] sm:$0xff]
        %v3224 = vld [vmem:[%s5 + $0x160] sm:$0xff]
        %v3225 = vld [vmem:[%s5 + $0x168] sm:$0xff]
        %v3226 = vld [vmem:[%s5 + $0x170] sm:$0xff]
        %v3227 = vld [vmem:[%s5 + $0x178] sm:$0xff]
        %v3228 = vld [vmem:[%s5 + $0x180] sm:$0xff]
        %v3229 = vld [vmem:[%s5 + $0x188] sm:$0xff]
        %v3230 = vld [vmem:[%s5 + $0x190] sm:$0xff]
        %v3231 = vld [vmem:[%s5 + $0x198] sm:$0xff]
        %v3232 = vld [vmem:[%s5 + $0x1a0] sm:$0xff]
        %v3233 = vld [vmem:[%s5 + $0x1a8] sm:$0xff]
        %v3234 = vld [vmem:[%s5 + $0x1b0] sm:$0xff]
        %v3235 = vld [vmem:[%s5 + $0x1b8] sm:$0xff]
        %v3236 = vld [vmem:[%s5 + $0x1c0] sm:$0xff]
        %v3237 = vld [vmem:[%s5 + $0x1c8] sm:$0xff]
        %v3238 = vld [vmem:[%s5 + $0x1d0] sm:$0xff]
        %v3239 = vld [vmem:[%s5 + $0x1d8] sm:$0xff]
        %v3240 = vld [vmem:[%s5 + $0x1e0] sm:$0xff]
        %v3241 = vld [vmem:[%s5 + $0x1e8] sm:$0xff]
        %v3242 = vld [vmem:[%s5 + $0x1f0] sm:$0xff]
        %v3243 = vld [vmem:[%s5 + $0x1f8] sm:$0xff]
        %v3244 = vld [vmem:[%s6] sm:$0x1]
        %3245 = vmatprep.subr.mxu0 0.0
        %3246 = vmatpush1.msra.mxu0 %v3180
        %3247 = vmatprep.subr.mxu0 0.0
        %3248 = vmatpush1.msra.mxu0 %v3181
        %3249 = vmatprep.subr.mxu0 0.0
        %3250 = vmatpush1.msra.mxu0 %v3182
        %3251 = vmatprep.subr.mxu0 0.0
        %3252 = vmatpush1.msra.mxu0 %v3183
        %3253 = vmatprep.subr.mxu0 0.0
        %3254 = vmatpush1.msra.mxu0 %v3184
        %3255 = vmatprep.subr.mxu0 0.0
        %3256 = vmatpush1.msra.mxu0 %v3185
        %3257 = vmatprep.subr.mxu0 0.0
        %3258 = vmatpush1.msra.mxu0 %v3186
        %3259 = vmatprep.subr.mxu0 0.0
        %3260 = vmatpush1.msra.mxu0 %v3187
        %3261 = vmatprep.subr.mxu0 0.0
        %3262 = vmatpush1.msra.mxu0 %v3188
        %3263 = vmatprep.subr.mxu0 0.0
        %3264 = vmatpush1.msra.mxu0 %v3189
        %3265 = vmatprep.subr.mxu0 0.0
        %3266 = vmatpush1.msra.mxu0 %v3190
        %3267 = vmatprep.subr.mxu0 0.0
        %3268 = vmatpush1.msra.mxu0 %v3191
        %3269 = vmatprep.subr.mxu0 0.0
        %3270 = vmatpush1.msra.mxu0 %v3192
        %3271 = vmatprep.subr.mxu0 0.0
        %3272 = vmatpush1.msra.mxu0 %v3193
        %3273 = vmatprep.subr.mxu0 0.0
        %3274 = vmatpush1.msra.mxu0 %v3194
        %3275 = vmatprep.subr.mxu0 0.0
        %3276 = vmatpush1.msra.mxu0 %v3195
        %3277 = vmatprep.subr.mxu0 0.0
        %3278 = vmatpush1.msra.mxu0 %v3196
        %3279 = vmatprep.subr.mxu0 0.0
        %3280 = vmatpush1.msra.mxu0 %v3197
        %3281 = vmatprep.subr.mxu0 0.0
        %3282 = vmatpush1.msra.mxu0 %v3198
        %3283 = vmatprep.subr.mxu0 0.0
        %3284 = vmatpush1.msra.mxu0 %v3199
        %3285 = vmatprep.subr.mxu0 0.0
        %3286 = vmatpush1.msra.mxu0 %v3200
        %3287 = vmatprep.subr.mxu0 0.0
        %3288 = vmatpush1.msra.mxu0 %v3201
        %3289 = vmatprep.subr.mxu0 0.0
        %3290 = vmatpush1.msra.mxu0 %v3202
        %3291 = vmatprep.subr.mxu0 0.0
        %3292 = vmatpush1.msra.mxu0 %v3203
        %3293 = vmatprep.subr.mxu0 0.0
        %3294 = vmatpush1.msra.mxu0 %v3204
        %3295 = vmatprep.subr.mxu0 0.0
        %3296 = vmatpush1.msra.mxu0 %v3205
        %3297 = vmatprep.subr.mxu0 0.0
        %3298 = vmatpush1.msra.mxu0 %v3206
        %3299 = vmatprep.subr.mxu0 0.0
        %3300 = vmatpush1.msra.mxu0 %v3207
        %3301 = vmatprep.subr.mxu0 0.0
        %3302 = vmatpush1.msra.mxu0 %v3208
        %3303 = vmatprep.subr.mxu0 0.0
        %3304 = vmatpush1.msra.mxu0 %v3209
        %3305 = vmatprep.subr.mxu0 0.0
        %3306 = vmatpush1.msra.mxu0 %v3210
        %3307 = vmatprep.subr.mxu0 0.0
        %3308 = vmatpush1.msra.mxu0 %v3211
        %3309 = vmatprep.mubr.f32.mxu0 %v3173
        %3310 = vmatmul.mubr.f32.gmra.mrb[0].mxu0 %v3170
        %v3311 = vpop.f32.mrb[0].mxu0
        %v3312 = vadd.f32 %v3244, %v3311
        %v3313 = vpop.f32.mrb[0].mxu0
        %3314 = vdwg.mxu0
        %3315 = vmatprep.subr.mxu0 0.0
        %3316 = vmatpush1.msra.mxu0 %v3212
        %3317 = vmatprep.subr.mxu0 0.0
        %3318 = vmatpush1.msra.mxu0 %v3213
        %3319 = vmatprep.subr.mxu0 0.0
        %3320 = vmatpush1.msra.mxu0 %v3214
        %3321 = vmatprep.subr.mxu0 0.0
        %3322 = vmatpush1.msra.mxu0 %v3215
        %3323 = vmatprep.subr.mxu0 0.0
        %3324 = vmatpush1.msra.mxu0 %v3216
        %3325 = vmatprep.subr.mxu0 0.0
        %3326 = vmatpush1.msra.mxu0 %v3217
        %3327 = vmatprep.subr.mxu0 0.0
        %3328 = vmatpush1.msra.mxu0 %v3218
        %3329 = vmatprep.subr.mxu0 0.0
        %3330 = vmatpush1.msra.mxu0 %v3219
        %3331 = vmatprep.subr.mxu0 0.0
        %3332 = vmatpush1.msra.mxu0 %v3220
        %3333 = vmatprep.subr.mxu0 0.0
        %3334 = vmatpush1.msra.mxu0 %v3221
        %3335 = vmatprep.subr.mxu0 0.0
        %3336 = vmatpush1.msra.mxu0 %v3222
        %3337 = vmatprep.subr.mxu0 0.0
        %3338 = vmatpush1.msra.mxu0 %v3223
        %3339 = vmatprep.subr.mxu0 0.0
        %3340 = vmatpush1.msra.mxu0 %v3224
        %3341 = vmatprep.subr.mxu0 0.0
        %3342 = vmatpush1.msra.mxu0 %v3225
        %3343 = vmatprep.subr.mxu0 0.0
        %3344 = vmatpush1.msra.mxu0 %v3226
        %3345 = vmatprep.subr.mxu0 0.0
        %3346 = vmatpush1.msra.mxu0 %v3227
        %3347 = vmatprep.subr.mxu0 0.0
        %3348 = vmatpush1.msra.mxu0 %v3228
        %3349 = vmatprep.subr.mxu0 0.0
        %3350 = vmatpush1.msra.mxu0 %v3229
        %3351 = vmatprep.subr.mxu0 0.0
        %3352 = vmatpush1.msra.mxu0 %v3230
        %3353 = vmatprep.subr.mxu0 0.0
        %3354 = vmatpush1.msra.mxu0 %v3231
        %3355 = vmatprep.subr.mxu0 0.0
        %3356 = vmatpush1.msra.mxu0 %v3232
        %3357 = vmatprep.subr.mxu0 0.0
        %3358 = vmatpush1.msra.mxu0 %v3233
        %3359 = vmatprep.subr.mxu0 0.0
        %3360 = vmatpush1.msra.mxu0 %v3234
        %3361 = vmatprep.subr.mxu0 0.0
        %3362 = vmatpush1.msra.mxu0 %v3235
        %3363 = vmatprep.subr.mxu0 0.0
        %3364 = vmatpush1.msra.mxu0 %v3236
        %3365 = vmatprep.subr.mxu0 0.0
        %3366 = vmatpush1.msra.mxu0 %v3237
        %3367 = vmatprep.subr.mxu0 0.0
        %3368 = vmatpush1.msra.mxu0 %v3238
        %3369 = vmatprep.subr.mxu0 0.0
        %3370 = vmatpush1.msra.mxu0 %v3239
        %3371 = vmatprep.subr.mxu0 0.0
        %3372 = vmatpush1.msra.mxu0 %v3240
        %3373 = vmatprep.subr.mxu0 0.0
        %3374 = vmatpush1.msra.mxu0 %v3241
        %3375 = vmatprep.subr.mxu0 0.0
        %3376 = vmatpush1.msra.mxu0 %v3242
        %3377 = vmatprep.subr.mxu0 0.0
        %3378 = vmatpush1.msra.mxu0 %v3243
        %3379 = vmatprep.mubr.f32.mxu0 %v3179
        %3380 = vmatmul.mubr.f32.gmra.mrb[0].mxu0 %v3176
        %v3381 = vpop.f32.mrb[0].mxu0
        %v3382 = vadd.f32 %v3312, %v3381
        %v3383 = vpop.f32.mrb[0].mxu0
        %3384 = vdwg.mxu0
        %3385 = vst [vmem:[%s270] sm:$0x1] %v3382
        %s3386 = sand.u32 %s181, 1
        %s3387 = scalar_lea.sflag [#allocation3], %s3386
        %s3388 = sand.u32 %s181, 1
        %s3389 = scalar_lea.vmem [#allocation2], %s3388
        // Predicated region
        $region49: #{tpu_custom_call.1} parent=47 // pred_check
          %p3390 = pneg %p191
        $region50: #{tpu_custom_call.1} parent=47 // pred_check_branch
          %3392 = sbr.rel (%p3390) target = $region52
        $region51: #{tpu_custom_call.1} parent=47 // pred_region
          %s3394 = ssub.s32 16, 16
          %3395 = vsyncadd %s3387, %s3394
          %s3396 = smul.addr %s21, 16
          %s3397 = scalar_lea.hbm %s7, %s3396
          %s3399 = sshll.u32 %s3389, 4
          %s3400 = int_to_ptr.vmem [resolvable:$true] %s3399
          %3402 = dma.vmem_to_hbm [thread:$0]  %s3400, 16, %s3397, %s3387
        $region52: #{tpu_custom_call.1} parent=47 // pred_fallthru
          _
      $region48: #{tpu_custom_call.1} parent=5 // pred_fallthru
        _
      %p3403 = scmp.le.s32.totalorder 2, %s16
      // Predicated region
      $region53: #{tpu_custom_call.1} parent=5 // pred_check
        %p3404 = pneg %p3403
      $region54: #{tpu_custom_call.1} parent=5 // pred_check_branch
        %3406 = sbr.rel (%p3404) target = $region56
      $region55: #{tpu_custom_call.1} parent=5 // pred_region
        %s3407 = ssub.s32 %s16, 2
        // Predicated region
        $region57: #{tpu_custom_call.1} parent=55 // pred_check
          %p3408 = pneg %p197
        $region58: #{tpu_custom_call.1} parent=55 // pred_check_branch
          %3410 = sbr.rel (%p3408) target = $region60
        $region59: #{tpu_custom_call.1} parent=55 // pred_region
          %s3411 = sand.u32 %s182, 1
          %s3412 = scalar_lea.sflag [#allocation3], %s3411
          %s3413 = sand.u32 %s182, 1
          %s3414 = scalar_lea.vmem [#allocation2], %s3413
          %3415 = dma.done %s3412, 16
        $region60: #{tpu_custom_call.1} parent=55 // pred_fallthru
          _
      $region56: #{tpu_custom_call.1} parent=5 // pred_fallthru
        _
    $region6: #{tpu_custom_call.1} parent=1 // loop_footer
      %s20 = sadd.s32 1, %s16
    $region7: #{tpu_custom_call.1} parent=1 // loop_footer_branch
      %15 = sbr.rel target = $region3
    $region8: #{tpu_custom_call.1} parent=1 // loop_exit
      _
    %3416 = vsyncpa [#allocation3], 1
    %s3417 = scalar_lea.sflag [#allocation3], 1
    %3418 = vsyncpa %s3417, 1

</llo_original>
